<compile_context>
chip_gen: v7x
topology: tpu7x:2x2x1
jax: 0.10.0
libtpu: 0.0.40
codegen_flags: <defaults>
</compile_context>

<pallas_src>
import jax
import jax.numpy as jnp
from jax import lax
from jax.experimental import pallas as pl
from jax.experimental.pallas import tpu as pltpu

C1, C2, NCLS = 45, 53, 10   # conv1/conv2 out-channels, classes
CP = 128                    # lane padding for channels / patch-K
PROWS = 400                 # 20*20 spatial positions of conv2/conv3 input
PATCH = 81                  # 9*9 super-window (conv1 8x8 taps under conv2's 2x2 shifts)


# ------------------------------- fused kernel -------------------------------

def _fused_kernel(p9_ref, w0_ref, b0_ref, w1_ref, w2_ref, o_ref):
    """One image per grid step.

    p9_ref : (1, 400, 128)  9x9 im2col patches of the 28x28 image (K padded to 128)
    w0_ref : (4, 128, 128)  conv1 weights, one layout per conv2 tap (i,j) shift
    b0_ref : (1, 128)       conv1 bias (channel padded)
    w1_ref : (4, 128, 128)  conv2 taps (ci, co), channel padded
    w2_ref : (10, 400, 128) conv3 weights per logit, (spatial, channel)
    o_ref  : (1, 1, 10)     log-probabilities
    """
    patches = p9_ref[0]                       # (400, 128)
    bias = b0_ref[...]                        # (1, 128)

    # conv1(+bias) on the four shifted 20x20 grids, immediately consumed by
    # conv2's 2x2 shift-and-accumulate -> a2 == conv2(conv1(x)), (400, 128).
    a2 = jnp.zeros((PROWS, CP), jnp.float32)
    for t in range(4):
        a1_t = jnp.dot(patches, w0_ref[t],
                       preferred_element_type=jnp.float32) + bias
        a2 = a2 + jnp.dot(a1_t, w1_ref[t],
                          preferred_element_type=jnp.float32)

    # conv3: 20x20 kernel over the full 20x20 map == complete contraction of a2
    # against each logit's weight plane, then LogSoftmax — all fused here.
    lane = lax.broadcasted_iota(jnp.int32, (1, NCLS), 1)
    logits = jnp.zeros((1, NCLS), jnp.float32)
    for o in range(NCLS):
        prod = a2 * w2_ref[o]                              # (400, 128)
        s = jnp.sum(prod, axis=0, keepdims=True)           # (1, 128)
        s = jnp.sum(s, axis=1, keepdims=True)              # (1, 1)
        logits = logits + jnp.where(lane == o, s, 0.0)

    m = jnp.max(logits, axis=1, keepdims=True)
    z = logits - m
    lse = jnp.log(jnp.sum(jnp.exp(z), axis=1, keepdims=True))
    o_ref[0] = z - lse


# --------------------------- hoisted weight packing --------------------------

def prepare_params(w0, b0, w1, w2):
    """One-time (outside jit) weight reorder + 128-lane padding.

    w0: (45,1,8,8)  b0: (45,)  w1: (53,45,2,2)  w2: (10,53,20,20)  (PyTorch layouts)
    """
    # conv1: for each conv2 tap (i,j), place the 8x8 kernel at offset (i,j) inside a
    # 9x9 window so one 9x9 patch matrix serves all four shifted conv1 evaluations.
    w0_k = jnp.transpose(w0, (2, 3, 1, 0)).reshape(8, 8, C1)       # (ki, kj, c)
    taps = []
    for i in range(2):
        for j in range(2):
            w9 = jnp.zeros((9, 9, C1), jnp.float32).at[i:i + 8, j:j + 8, :].set(w0_k)
            taps.append(w9.reshape(PATCH, C1))
    w0p = jnp.pad(jnp.stack(taps), ((0, 0), (0, CP - PATCH), (0, CP - C1)))

    b0p = jnp.pad(b0.reshape(1, C1), ((0, 0), (0, CP - C1)))

    # conv2 taps: (kh, kw, ci, co) -> (t = kh*2+kw, ci, co), padded to 128x128.
    w1r = jnp.transpose(w1, (2, 3, 1, 0)).reshape(4, C1, C2)
    w1p = jnp.pad(w1r, ((0, 0), (0, CP - C1), (0, CP - C2)))

    # conv3: (o, c, h, w) -> (o, h*20+w, c), channel padded.
    w2r = jnp.transpose(w2, (0, 2, 3, 1)).reshape(NCLS, PROWS, C2)
    w2p = jnp.pad(w2r, ((0, 0), (0, 0), (0, CP - C2)))
    return w0p, b0p, w1p, w2p


# ----------------------------------- forward ---------------------------------

@jax.jit
def forward(x, packed):
    w0p, b0p, w1p, w2p = packed
    B = x.shape[0]
    img = x.reshape(B, 28, 28)

    # 9x9 im2col over the 20x20 output grid (covers conv1's 8x8 taps under conv2's
    # four shifts). Cheap XLA glue on the tiny raw image; everything downstream
    # runs inside the single fused Pallas kernel.
    cols = [img[:, a:a + 20, b:b + 20] for a in range(9) for b in range(9)]
    p9 = jnp.stack(cols, axis=-1).reshape(B, PROWS, PATCH)
    p9 = jnp.pad(p9, ((0, 0), (0, 0), (0, CP - PATCH)))

    out = pl.pallas_call(
        _fused_kernel,
        out_shape=jax.ShapeDtypeStruct((B, 1, NCLS), jnp.float32),
        grid=(B,),
        in_specs=[
            pl.BlockSpec((1, PROWS, CP), lambda b: (b, 0, 0)),
            pl.BlockSpec((4, CP, CP), lambda b: (0, 0, 0)),
            pl.BlockSpec((1, CP), lambda b: (0, 0)),
            pl.BlockSpec((4, CP, CP), lambda b: (0, 0, 0)),
            pl.BlockSpec((NCLS, PROWS, CP), lambda b: (0, 0, 0)),
        ],
        out_specs=pl.BlockSpec((1, 1, NCLS), lambda b: (b, 0, 0)),
        compiler_params=pltpu.CompilerParams(
            dimension_semantics=("parallel",)),
    )(p9, w0p, b0p, w1p, w2p)
    return out.reshape(B, NCLS)


# -------------------------------- init & reference ---------------------------

def init_params(key):
    k0, kb0, k1, k2 = jax.random.split(key, 4)

    def conv_init(k, shape):
        fan_in = shape[1] * shape[2] * shape[3]
        bound = 1.0 / jnp.sqrt(jnp.float32(fan_in))
        return jax.random.uniform(k, shape, jnp.float32, -bound, bound)

    w0 = conv_init(k0, (C1, 1, 8, 8))
    b0 = jax.random.uniform(kb0, (C1,), jnp.float32, -1.0 / 8.0, 1.0 / 8.0)
    w1 = conv_init(k1, (C2, C1, 2, 2))
    w2 = conv_init(k2, (NCLS, C2, 20, 20))
    return w0, b0, w1, w2


def reference_forward(x, w0, b0, w1, w2):
    """Pure-JAX (XLA conv) reference of the PyTorch forward, for validation."""
    B = x.shape[0]
    img = x.reshape(B, 1, 28, 28)
    dn = ("NCHW", "OIHW", "NCHW")
    a1 = lax.conv_general_dilated(img, w0, (1, 1), "VALID", dimension_numbers=dn)
    a1 = a1 + b0.reshape(1, C1, 1, 1)
    a2 = lax.conv_general_dilated(a1, w1, (1, 1), "VALID", dimension_numbers=dn)
    a3 = lax.conv_general_dilated(a2, w2, (1, 1), "VALID", dimension_numbers=dn)
    return jax.nn.log_softmax(a3.reshape(B, NCLS), axis=1)


if __name__ == "__main__":
    key = jax.random.PRNGKey(0)
    kx, kp = jax.random.split(key)
    x = jax.random.normal(kx, (2, 784), dtype=jnp.float32)   # batch=2, MNIST flat
    w0, b0, w1, w2 = init_params(kp)
    packed = prepare_params(w0, b0, w1, w2)    # hoisted out of the jitted forward

    out = forward(x, packed)
    jax.block_until_ready(out)

    assert out.shape == (2, NCLS)
    # log-softmax rows should sum (in prob space) to ~1
    assert bool(jnp.allclose(jnp.sum(jnp.exp(out), axis=-1), 1.0, atol=1e-4))
    # match the XLA-conv reference of the original PyTorch forward
    ref = reference_forward(x, w0, b0, w1, w2)
    assert bool(jnp.allclose(out, ref, atol=1e-4))
    print("KERNEL_OK")
</pallas_src>

<mosaic_0001>
module attributes {stable_mosaic.version = 11 : i64} {
  func.func @_fused_kernel(%arg0: i32, %arg1: memref<1x400x128xf32, #tpu.memory_space<vmem>>, %arg2: memref<4x128x128xf32, #tpu.memory_space<vmem>>, %arg3: memref<1x128xf32, #tpu.memory_space<vmem>>, %arg4: memref<4x128x128xf32, #tpu.memory_space<vmem>>, %arg5: memref<10x400x128xf32, #tpu.memory_space<vmem>>, %arg6: memref<1x1x10xf32, #tpu.memory_space<vmem>>) attributes {dimension_semantics = [#tpu.dimension_semantics<parallel>], iteration_bounds = array<i64: 2>, scalar_prefetch = 0 : i64, scratch_operands = 0 : i64, tpu.core_type = #tpu.core_type<tc>, window_params = [{transform_indices = @transform_0, window_bounds = array<i64: 1, 400, 128>}, {pipeline_mode = #tpu.pipeline_mode<synchronous>, transform_indices = @transform_1, window_bounds = array<i64: 4, 128, 128>}, {pipeline_mode = #tpu.pipeline_mode<synchronous>, transform_indices = @transform_2, window_bounds = array<i64: 1, 128>}, {pipeline_mode = #tpu.pipeline_mode<synchronous>, transform_indices = @transform_3, window_bounds = array<i64: 4, 128, 128>}, {pipeline_mode = #tpu.pipeline_mode<synchronous>, transform_indices = @transform_4, window_bounds = array<i64: 10, 400, 128>}, {transform_indices = @transform_5, window_bounds = array<i64: 1, 1, 10>}]} {
    %c0 = arith.constant 0 : index
    %c0_0 = arith.constant 0 : index
    %c0_1 = arith.constant 0 : index
    %0 = vector.load %arg1[%c0, %c0_0, %c0_1] : memref<1x400x128xf32, #tpu.memory_space<vmem>>, vector<1x400x128xf32>
    %1 = vector.shape_cast %0 : vector<1x400x128xf32> to vector<400x128xf32>
    %c0_2 = arith.constant 0 : index
    %c0_3 = arith.constant 0 : index
    %2 = vector.load %arg3[%c0_2, %c0_3] : memref<1x128xf32, #tpu.memory_space<vmem>>, vector<1x128xf32>
    %cst = arith.constant 0.000000e+00 : f32
    %3 = vector.broadcast %cst : f32 to vector<400x128xf32>
    %c0_4 = arith.constant 0 : index
    %c0_5 = arith.constant 0 : index
    %c0_6 = arith.constant 0 : index
    %4 = vector.load %arg2[%c0_4, %c0_5, %c0_6] : memref<4x128x128xf32, #tpu.memory_space<vmem>>, vector<1x128x128xf32>
    %5 = vector.shape_cast %4 : vector<1x128x128xf32> to vector<128x128xf32>
    %cst_7 = arith.constant dense<0.000000e+00> : vector<400x128xf32>
    %6 = tpu.matmul %1, %5, %cst_7 {dimension_numbers = #tpu.dot_dimension_numbers<[1], [0], [0], [1], [0, 0, 1, 1], [], []>} : vector<400x128xf32>, vector<128x128xf32>, vector<400x128xf32> -> vector<400x128xf32>
    %7 = vector.broadcast %2 : vector<1x128xf32> to vector<400x128xf32>
    %8 = arith.addf %6, %7 : vector<400x128xf32>
    %c0_8 = arith.constant 0 : index
    %c0_9 = arith.constant 0 : index
    %c0_10 = arith.constant 0 : index
    %9 = vector.load %arg4[%c0_8, %c0_9, %c0_10] : memref<4x128x128xf32, #tpu.memory_space<vmem>>, vector<1x128x128xf32>
    %10 = vector.shape_cast %9 : vector<1x128x128xf32> to vector<128x128xf32>
    %cst_11 = arith.constant dense<0.000000e+00> : vector<400x128xf32>
    %11 = tpu.matmul %8, %10, %cst_11 {dimension_numbers = #tpu.dot_dimension_numbers<[1], [0], [0], [1], [0, 0, 1, 1], [], []>} : vector<400x128xf32>, vector<128x128xf32>, vector<400x128xf32> -> vector<400x128xf32>
    %12 = arith.addf %3, %11 : vector<400x128xf32>
    %c1 = arith.constant 1 : index
    %c0_12 = arith.constant 0 : index
    %c0_13 = arith.constant 0 : index
    %13 = vector.load %arg2[%c1, %c0_12, %c0_13] : memref<4x128x128xf32, #tpu.memory_space<vmem>>, vector<1x128x128xf32>
    %14 = vector.shape_cast %13 : vector<1x128x128xf32> to vector<128x128xf32>
    %cst_14 = arith.constant dense<0.000000e+00> : vector<400x128xf32>
    %15 = tpu.matmul %1, %14, %cst_14 {dimension_numbers = #tpu.dot_dimension_numbers<[1], [0], [0], [1], [0, 0, 1, 1], [], []>} : vector<400x128xf32>, vector<128x128xf32>, vector<400x128xf32> -> vector<400x128xf32>
    %16 = vector.broadcast %2 : vector<1x128xf32> to vector<400x128xf32>
    %17 = arith.addf %15, %16 : vector<400x128xf32>
    %c1_15 = arith.constant 1 : index
    %c0_16 = arith.constant 0 : index
    %c0_17 = arith.constant 0 : index
    %18 = vector.load %arg4[%c1_15, %c0_16, %c0_17] : memref<4x128x128xf32, #tpu.memory_space<vmem>>, vector<1x128x128xf32>
    %19 = vector.shape_cast %18 : vector<1x128x128xf32> to vector<128x128xf32>
    %cst_18 = arith.constant dense<0.000000e+00> : vector<400x128xf32>
    %20 = tpu.matmul %17, %19, %cst_18 {dimension_numbers = #tpu.dot_dimension_numbers<[1], [0], [0], [1], [0, 0, 1, 1], [], []>} : vector<400x128xf32>, vector<128x128xf32>, vector<400x128xf32> -> vector<400x128xf32>
    %21 = arith.addf %12, %20 : vector<400x128xf32>
    %c2 = arith.constant 2 : index
    %c0_19 = arith.constant 0 : index
    %c0_20 = arith.constant 0 : index
    %22 = vector.load %arg2[%c2, %c0_19, %c0_20] : memref<4x128x128xf32, #tpu.memory_space<vmem>>, vector<1x128x128xf32>
    %23 = vector.shape_cast %22 : vector<1x128x128xf32> to vector<128x128xf32>
    %cst_21 = arith.constant dense<0.000000e+00> : vector<400x128xf32>
    %24 = tpu.matmul %1, %23, %cst_21 {dimension_numbers = #tpu.dot_dimension_numbers<[1], [0], [0], [1], [0, 0, 1, 1], [], []>} : vector<400x128xf32>, vector<128x128xf32>, vector<400x128xf32> -> vector<400x128xf32>
    %25 = vector.broadcast %2 : vector<1x128xf32> to vector<400x128xf32>
    %26 = arith.addf %24, %25 : vector<400x128xf32>
    %c2_22 = arith.constant 2 : index
    %c0_23 = arith.constant 0 : index
    %c0_24 = arith.constant 0 : index
    %27 = vector.load %arg4[%c2_22, %c0_23, %c0_24] : memref<4x128x128xf32, #tpu.memory_space<vmem>>, vector<1x128x128xf32>
    %28 = vector.shape_cast %27 : vector<1x128x128xf32> to vector<128x128xf32>
    %cst_25 = arith.constant dense<0.000000e+00> : vector<400x128xf32>
    %29 = tpu.matmul %26, %28, %cst_25 {dimension_numbers = #tpu.dot_dimension_numbers<[1], [0], [0], [1], [0, 0, 1, 1], [], []>} : vector<400x128xf32>, vector<128x128xf32>, vector<400x128xf32> -> vector<400x128xf32>
    %30 = arith.addf %21, %29 : vector<400x128xf32>
    %c3 = arith.constant 3 : index
    %c0_26 = arith.constant 0 : index
    %c0_27 = arith.constant 0 : index
    %31 = vector.load %arg2[%c3, %c0_26, %c0_27] : memref<4x128x128xf32, #tpu.memory_space<vmem>>, vector<1x128x128xf32>
    %32 = vector.shape_cast %31 : vector<1x128x128xf32> to vector<128x128xf32>
    %cst_28 = arith.constant dense<0.000000e+00> : vector<400x128xf32>
    %33 = tpu.matmul %1, %32, %cst_28 {dimension_numbers = #tpu.dot_dimension_numbers<[1], [0], [0], [1], [0, 0, 1, 1], [], []>} : vector<400x128xf32>, vector<128x128xf32>, vector<400x128xf32> -> vector<400x128xf32>
    %34 = vector.broadcast %2 : vector<1x128xf32> to vector<400x128xf32>
    %35 = arith.addf %33, %34 : vector<400x128xf32>
    %c3_29 = arith.constant 3 : index
    %c0_30 = arith.constant 0 : index
    %c0_31 = arith.constant 0 : index
    %36 = vector.load %arg4[%c3_29, %c0_30, %c0_31] : memref<4x128x128xf32, #tpu.memory_space<vmem>>, vector<1x128x128xf32>
    %37 = vector.shape_cast %36 : vector<1x128x128xf32> to vector<128x128xf32>
    %cst_32 = arith.constant dense<0.000000e+00> : vector<400x128xf32>
    %38 = tpu.matmul %35, %37, %cst_32 {dimension_numbers = #tpu.dot_dimension_numbers<[1], [0], [0], [1], [0, 0, 1, 1], [], []>} : vector<400x128xf32>, vector<128x128xf32>, vector<400x128xf32> -> vector<400x128xf32>
    %39 = arith.addf %30, %38 : vector<400x128xf32>
    %40 = tpu.iota {dimensions = array<i32: 1>} : vector<1x10xi32>
    %cst_33 = arith.constant 0.000000e+00 : f32
    %41 = vector.broadcast %cst_33 : f32 to vector<1x10xf32>
    %c0_34 = arith.constant 0 : index
    %c0_35 = arith.constant 0 : index
    %c0_36 = arith.constant 0 : index
    %42 = vector.load %arg5[%c0_34, %c0_35, %c0_36] : memref<10x400x128xf32, #tpu.memory_space<vmem>>, vector<1x400x128xf32>
    %43 = vector.shape_cast %42 : vector<1x400x128xf32> to vector<400x128xf32>
    %44 = arith.mulf %39, %43 : vector<400x128xf32>
    %cst_37 = arith.constant dense<0.000000e+00> : vector<128xf32>
    %45 = vector.multi_reduction <add>, %44, %cst_37 [0] : vector<400x128xf32> to vector<128xf32>
    %46 = vector.shape_cast %45 : vector<128xf32> to vector<1x128xf32>
    %cst_38 = arith.constant dense<0.000000e+00> : vector<1xf32>
    %47 = vector.multi_reduction <add>, %46, %cst_38 [1] : vector<1x128xf32> to vector<1xf32>
    %48 = vector.shape_cast %47 : vector<1xf32> to vector<1x1xf32>
    %c0_i32 = arith.constant 0 : i32
    %49 = vector.broadcast %c0_i32 : i32 to vector<1x10xi32>
    %50 = arith.cmpi eq, %40, %49 : vector<1x10xi32>
    %cst_39 = arith.constant 0.000000e+00 : f32
    %51 = vector.shape_cast %48 : vector<1x1xf32> to vector<1x1xf32>
    %52 = vector.broadcast %51 : vector<1x1xf32> to vector<1x10xf32>
    %53 = vector.broadcast %cst_39 : f32 to vector<1x10xf32>
    %54 = arith.select %50, %52, %53 : vector<1x10xi1>, vector<1x10xf32>
    %55 = arith.addf %41, %54 : vector<1x10xf32>
    %c1_40 = arith.constant 1 : index
    %c0_41 = arith.constant 0 : index
    %c0_42 = arith.constant 0 : index
    %56 = vector.load %arg5[%c1_40, %c0_41, %c0_42] : memref<10x400x128xf32, #tpu.memory_space<vmem>>, vector<1x400x128xf32>
    %57 = vector.shape_cast %56 : vector<1x400x128xf32> to vector<400x128xf32>
    %58 = arith.mulf %39, %57 : vector<400x128xf32>
    %cst_43 = arith.constant dense<0.000000e+00> : vector<128xf32>
    %59 = vector.multi_reduction <add>, %58, %cst_43 [0] : vector<400x128xf32> to vector<128xf32>
    %60 = vector.shape_cast %59 : vector<128xf32> to vector<1x128xf32>
    %cst_44 = arith.constant dense<0.000000e+00> : vector<1xf32>
    %61 = vector.multi_reduction <add>, %60, %cst_44 [1] : vector<1x128xf32> to vector<1xf32>
    %62 = vector.shape_cast %61 : vector<1xf32> to vector<1x1xf32>
    %c1_i32 = arith.constant 1 : i32
    %63 = vector.broadcast %c1_i32 : i32 to vector<1x10xi32>
    %64 = arith.cmpi eq, %40, %63 : vector<1x10xi32>
    %cst_45 = arith.constant 0.000000e+00 : f32
    %65 = vector.shape_cast %62 : vector<1x1xf32> to vector<1x1xf32>
    %66 = vector.broadcast %65 : vector<1x1xf32> to vector<1x10xf32>
    %67 = vector.broadcast %cst_45 : f32 to vector<1x10xf32>
    %68 = arith.select %64, %66, %67 : vector<1x10xi1>, vector<1x10xf32>
    %69 = arith.addf %55, %68 : vector<1x10xf32>
    %c2_46 = arith.constant 2 : index
    %c0_47 = arith.constant 0 : index
    %c0_48 = arith.constant 0 : index
    %70 = vector.load %arg5[%c2_46, %c0_47, %c0_48] : memref<10x400x128xf32, #tpu.memory_space<vmem>>, vector<1x400x128xf32>
    %71 = vector.shape_cast %70 : vector<1x400x128xf32> to vector<400x128xf32>
    %72 = arith.mulf %39, %71 : vector<400x128xf32>
    %cst_49 = arith.constant dense<0.000000e+00> : vector<128xf32>
    %73 = vector.multi_reduction <add>, %72, %cst_49 [0] : vector<400x128xf32> to vector<128xf32>
    %74 = vector.shape_cast %73 : vector<128xf32> to vector<1x128xf32>
    %cst_50 = arith.constant dense<0.000000e+00> : vector<1xf32>
    %75 = vector.multi_reduction <add>, %74, %cst_50 [1] : vector<1x128xf32> to vector<1xf32>
    %76 = vector.shape_cast %75 : vector<1xf32> to vector<1x1xf32>
    %c2_i32 = arith.constant 2 : i32
    %77 = vector.broadcast %c2_i32 : i32 to vector<1x10xi32>
    %78 = arith.cmpi eq, %40, %77 : vector<1x10xi32>
    %cst_51 = arith.constant 0.000000e+00 : f32
    %79 = vector.shape_cast %76 : vector<1x1xf32> to vector<1x1xf32>
    %80 = vector.broadcast %79 : vector<1x1xf32> to vector<1x10xf32>
    %81 = vector.broadcast %cst_51 : f32 to vector<1x10xf32>
    %82 = arith.select %78, %80, %81 : vector<1x10xi1>, vector<1x10xf32>
    %83 = arith.addf %69, %82 : vector<1x10xf32>
    %c3_52 = arith.constant 3 : index
    %c0_53 = arith.constant 0 : index
    %c0_54 = arith.constant 0 : index
    %84 = vector.load %arg5[%c3_52, %c0_53, %c0_54] : memref<10x400x128xf32, #tpu.memory_space<vmem>>, vector<1x400x128xf32>
    %85 = vector.shape_cast %84 : vector<1x400x128xf32> to vector<400x128xf32>
    %86 = arith.mulf %39, %85 : vector<400x128xf32>
    %cst_55 = arith.constant dense<0.000000e+00> : vector<128xf32>
    %87 = vector.multi_reduction <add>, %86, %cst_55 [0] : vector<400x128xf32> to vector<128xf32>
    %88 = vector.shape_cast %87 : vector<128xf32> to vector<1x128xf32>
    %cst_56 = arith.constant dense<0.000000e+00> : vector<1xf32>
    %89 = vector.multi_reduction <add>, %88, %cst_56 [1] : vector<1x128xf32> to vector<1xf32>
    %90 = vector.shape_cast %89 : vector<1xf32> to vector<1x1xf32>
    %c3_i32 = arith.constant 3 : i32
    %91 = vector.broadcast %c3_i32 : i32 to vector<1x10xi32>
    %92 = arith.cmpi eq, %40, %91 : vector<1x10xi32>
    %cst_57 = arith.constant 0.000000e+00 : f32
    %93 = vector.shape_cast %90 : vector<1x1xf32> to vector<1x1xf32>
    %94 = vector.broadcast %93 : vector<1x1xf32> to vector<1x10xf32>
    %95 = vector.broadcast %cst_57 : f32 to vector<1x10xf32>
    %96 = arith.select %92, %94, %95 : vector<1x10xi1>, vector<1x10xf32>
    %97 = arith.addf %83, %96 : vector<1x10xf32>
    %c4 = arith.constant 4 : index
    %c0_58 = arith.constant 0 : index
    %c0_59 = arith.constant 0 : index
    %98 = vector.load %arg5[%c4, %c0_58, %c0_59] : memref<10x400x128xf32, #tpu.memory_space<vmem>>, vector<1x400x128xf32>
    %99 = vector.shape_cast %98 : vector<1x400x128xf32> to vector<400x128xf32>
    %100 = arith.mulf %39, %99 : vector<400x128xf32>
    %cst_60 = arith.constant dense<0.000000e+00> : vector<128xf32>
    %101 = vector.multi_reduction <add>, %100, %cst_60 [0] : vector<400x128xf32> to vector<128xf32>
    %102 = vector.shape_cast %101 : vector<128xf32> to vector<1x128xf32>
    %cst_61 = arith.constant dense<0.000000e+00> : vector<1xf32>
    %103 = vector.multi_reduction <add>, %102, %cst_61 [1] : vector<1x128xf32> to vector<1xf32>
    %104 = vector.shape_cast %103 : vector<1xf32> to vector<1x1xf32>
    %c4_i32 = arith.constant 4 : i32
    %105 = vector.broadcast %c4_i32 : i32 to vector<1x10xi32>
    %106 = arith.cmpi eq, %40, %105 : vector<1x10xi32>
    %cst_62 = arith.constant 0.000000e+00 : f32
    %107 = vector.shape_cast %104 : vector<1x1xf32> to vector<1x1xf32>
    %108 = vector.broadcast %107 : vector<1x1xf32> to vector<1x10xf32>
    %109 = vector.broadcast %cst_62 : f32 to vector<1x10xf32>
    %110 = arith.select %106, %108, %109 : vector<1x10xi1>, vector<1x10xf32>
    %111 = arith.addf %97, %110 : vector<1x10xf32>
    %c5 = arith.constant 5 : index
    %c0_63 = arith.constant 0 : index
    %c0_64 = arith.constant 0 : index
    %112 = vector.load %arg5[%c5, %c0_63, %c0_64] : memref<10x400x128xf32, #tpu.memory_space<vmem>>, vector<1x400x128xf32>
    %113 = vector.shape_cast %112 : vector<1x400x128xf32> to vector<400x128xf32>
    %114 = arith.mulf %39, %113 : vector<400x128xf32>
    %cst_65 = arith.constant dense<0.000000e+00> : vector<128xf32>
    %115 = vector.multi_reduction <add>, %114, %cst_65 [0] : vector<400x128xf32> to vector<128xf32>
    %116 = vector.shape_cast %115 : vector<128xf32> to vector<1x128xf32>
    %cst_66 = arith.constant dense<0.000000e+00> : vector<1xf32>
    %117 = vector.multi_reduction <add>, %116, %cst_66 [1] : vector<1x128xf32> to vector<1xf32>
    %118 = vector.shape_cast %117 : vector<1xf32> to vector<1x1xf32>
    %c5_i32 = arith.constant 5 : i32
    %119 = vector.broadcast %c5_i32 : i32 to vector<1x10xi32>
    %120 = arith.cmpi eq, %40, %119 : vector<1x10xi32>
    %cst_67 = arith.constant 0.000000e+00 : f32
    %121 = vector.shape_cast %118 : vector<1x1xf32> to vector<1x1xf32>
    %122 = vector.broadcast %121 : vector<1x1xf32> to vector<1x10xf32>
    %123 = vector.broadcast %cst_67 : f32 to vector<1x10xf32>
    %124 = arith.select %120, %122, %123 : vector<1x10xi1>, vector<1x10xf32>
    %125 = arith.addf %111, %124 : vector<1x10xf32>
    %c6 = arith.constant 6 : index
    %c0_68 = arith.constant 0 : index
    %c0_69 = arith.constant 0 : index
    %126 = vector.load %arg5[%c6, %c0_68, %c0_69] : memref<10x400x128xf32, #tpu.memory_space<vmem>>, vector<1x400x128xf32>
    %127 = vector.shape_cast %126 : vector<1x400x128xf32> to vector<400x128xf32>
    %128 = arith.mulf %39, %127 : vector<400x128xf32>
    %cst_70 = arith.constant dense<0.000000e+00> : vector<128xf32>
    %129 = vector.multi_reduction <add>, %128, %cst_70 [0] : vector<400x128xf32> to vector<128xf32>
    %130 = vector.shape_cast %129 : vector<128xf32> to vector<1x128xf32>
    %cst_71 = arith.constant dense<0.000000e+00> : vector<1xf32>
    %131 = vector.multi_reduction <add>, %130, %cst_71 [1] : vector<1x128xf32> to vector<1xf32>
    %132 = vector.shape_cast %131 : vector<1xf32> to vector<1x1xf32>
    %c6_i32 = arith.constant 6 : i32
    %133 = vector.broadcast %c6_i32 : i32 to vector<1x10xi32>
    %134 = arith.cmpi eq, %40, %133 : vector<1x10xi32>
    %cst_72 = arith.constant 0.000000e+00 : f32
    %135 = vector.shape_cast %132 : vector<1x1xf32> to vector<1x1xf32>
    %136 = vector.broadcast %135 : vector<1x1xf32> to vector<1x10xf32>
    %137 = vector.broadcast %cst_72 : f32 to vector<1x10xf32>
    %138 = arith.select %134, %136, %137 : vector<1x10xi1>, vector<1x10xf32>
    %139 = arith.addf %125, %138 : vector<1x10xf32>
    %c7 = arith.constant 7 : index
    %c0_73 = arith.constant 0 : index
    %c0_74 = arith.constant 0 : index
    %140 = vector.load %arg5[%c7, %c0_73, %c0_74] : memref<10x400x128xf32, #tpu.memory_space<vmem>>, vector<1x400x128xf32>
    %141 = vector.shape_cast %140 : vector<1x400x128xf32> to vector<400x128xf32>
    %142 = arith.mulf %39, %141 : vector<400x128xf32>
    %cst_75 = arith.constant dense<0.000000e+00> : vector<128xf32>
    %143 = vector.multi_reduction <add>, %142, %cst_75 [0] : vector<400x128xf32> to vector<128xf32>
    %144 = vector.shape_cast %143 : vector<128xf32> to vector<1x128xf32>
    %cst_76 = arith.constant dense<0.000000e+00> : vector<1xf32>
    %145 = vector.multi_reduction <add>, %144, %cst_76 [1] : vector<1x128xf32> to vector<1xf32>
    %146 = vector.shape_cast %145 : vector<1xf32> to vector<1x1xf32>
    %c7_i32 = arith.constant 7 : i32
    %147 = vector.broadcast %c7_i32 : i32 to vector<1x10xi32>
    %148 = arith.cmpi eq, %40, %147 : vector<1x10xi32>
    %cst_77 = arith.constant 0.000000e+00 : f32
    %149 = vector.shape_cast %146 : vector<1x1xf32> to vector<1x1xf32>
    %150 = vector.broadcast %149 : vector<1x1xf32> to vector<1x10xf32>
    %151 = vector.broadcast %cst_77 : f32 to vector<1x10xf32>
    %152 = arith.select %148, %150, %151 : vector<1x10xi1>, vector<1x10xf32>
    %153 = arith.addf %139, %152 : vector<1x10xf32>
    %c8 = arith.constant 8 : index
    %c0_78 = arith.constant 0 : index
    %c0_79 = arith.constant 0 : index
    %154 = vector.load %arg5[%c8, %c0_78, %c0_79] : memref<10x400x128xf32, #tpu.memory_space<vmem>>, vector<1x400x128xf32>
    %155 = vector.shape_cast %154 : vector<1x400x128xf32> to vector<400x128xf32>
    %156 = arith.mulf %39, %155 : vector<400x128xf32>
    %cst_80 = arith.constant dense<0.000000e+00> : vector<128xf32>
    %157 = vector.multi_reduction <add>, %156, %cst_80 [0] : vector<400x128xf32> to vector<128xf32>
    %158 = vector.shape_cast %157 : vector<128xf32> to vector<1x128xf32>
    %cst_81 = arith.constant dense<0.000000e+00> : vector<1xf32>
    %159 = vector.multi_reduction <add>, %158, %cst_81 [1] : vector<1x128xf32> to vector<1xf32>
    %160 = vector.shape_cast %159 : vector<1xf32> to vector<1x1xf32>
    %c8_i32 = arith.constant 8 : i32
    %161 = vector.broadcast %c8_i32 : i32 to vector<1x10xi32>
    %162 = arith.cmpi eq, %40, %161 : vector<1x10xi32>
    %cst_82 = arith.constant 0.000000e+00 : f32
    %163 = vector.shape_cast %160 : vector<1x1xf32> to vector<1x1xf32>
    %164 = vector.broadcast %163 : vector<1x1xf32> to vector<1x10xf32>
    %165 = vector.broadcast %cst_82 : f32 to vector<1x10xf32>
    %166 = arith.select %162, %164, %165 : vector<1x10xi1>, vector<1x10xf32>
    %167 = arith.addf %153, %166 : vector<1x10xf32>
    %c9 = arith.constant 9 : index
    %c0_83 = arith.constant 0 : index
    %c0_84 = arith.constant 0 : index
    %168 = vector.load %arg5[%c9, %c0_83, %c0_84] : memref<10x400x128xf32, #tpu.memory_space<vmem>>, vector<1x400x128xf32>
    %169 = vector.shape_cast %168 : vector<1x400x128xf32> to vector<400x128xf32>
    %170 = arith.mulf %39, %169 : vector<400x128xf32>
    %cst_85 = arith.constant dense<0.000000e+00> : vector<128xf32>
    %171 = vector.multi_reduction <add>, %170, %cst_85 [0] : vector<400x128xf32> to vector<128xf32>
    %172 = vector.shape_cast %171 : vector<128xf32> to vector<1x128xf32>
    %cst_86 = arith.constant dense<0.000000e+00> : vector<1xf32>
    %173 = vector.multi_reduction <add>, %172, %cst_86 [1] : vector<1x128xf32> to vector<1xf32>
    %174 = vector.shape_cast %173 : vector<1xf32> to vector<1x1xf32>
    %c9_i32 = arith.constant 9 : i32
    %175 = vector.broadcast %c9_i32 : i32 to vector<1x10xi32>
    %176 = arith.cmpi eq, %40, %175 : vector<1x10xi32>
    %cst_87 = arith.constant 0.000000e+00 : f32
    %177 = vector.shape_cast %174 : vector<1x1xf32> to vector<1x1xf32>
    %178 = vector.broadcast %177 : vector<1x1xf32> to vector<1x10xf32>
    %179 = vector.broadcast %cst_87 : f32 to vector<1x10xf32>
    %180 = arith.select %176, %178, %179 : vector<1x10xi1>, vector<1x10xf32>
    %181 = arith.addf %167, %180 : vector<1x10xf32>
    %cst_88 = arith.constant dense<0xFF800000> : vector<1xf32>
    %182 = vector.multi_reduction <maximumf>, %181, %cst_88 [1] : vector<1x10xf32> to vector<1xf32>
    %183 = vector.shape_cast %182 : vector<1xf32> to vector<1x1xf32>
    %184 = vector.broadcast %183 : vector<1x1xf32> to vector<1x10xf32>
    %185 = arith.subf %181, %184 : vector<1x10xf32>
    %186 = math.exp %185 : vector<1x10xf32>
    %cst_89 = arith.constant dense<0.000000e+00> : vector<1xf32>
    %187 = vector.multi_reduction <add>, %186, %cst_89 [1] : vector<1x10xf32> to vector<1xf32>
    %188 = vector.shape_cast %187 : vector<1xf32> to vector<1x1xf32>
    %189 = math.log %188 : vector<1x1xf32>
    %190 = vector.broadcast %189 : vector<1x1xf32> to vector<1x10xf32>
    %191 = arith.subf %185, %190 : vector<1x10xf32>
    %c0_90 = arith.constant 0 : index
    %c0_91 = arith.constant 0 : index
    %c0_92 = arith.constant 0 : index
    %192 = vector.load %arg6[%c0_90, %c0_91, %c0_92] : memref<1x1x10xf32, #tpu.memory_space<vmem>>, vector<1x1x10xf32>
    %193 = vector.shape_cast %192 : vector<1x1x10xf32> to vector<1x10xf32>
    %194 = vector.shape_cast %191 : vector<1x10xf32> to vector<1x1x10xf32>
    tpu.vector_store %arg6[%c0_90, %c0_91, %c0_92], %194 {strides = array<i32>} : memref<1x1x10xf32, #tpu.memory_space<vmem>>, vector<1x1x10xf32>,
    return
  }
  func.func @transform_0(%arg0: i32) -> (i32, i32, i32) {
    %c0_i32 = arith.constant 0 : i32
    %c0_i32_0 = arith.constant 0 : i32
    %c0_i32_1 = arith.constant 0 : i32
    return %arg0, %c0_i32, %c0_i32_0 : i32, i32, i32
  }
  func.func @transform_1(%arg0: i32) -> (i32, i32, i32) {
    %c0_i32 = arith.constant 0 : i32
    %c0_i32_0 = arith.constant 0 : i32
    %c0_i32_1 = arith.constant 0 : i32
    %c0_i32_2 = arith.constant 0 : i32
    return %c0_i32, %c0_i32_0, %c0_i32_1 : i32, i32, i32
  }
  func.func @transform_2(%arg0: i32) -> (i32, i32) {
    %c0_i32 = arith.constant 0 : i32
    %c0_i32_0 = arith.constant 0 : i32
    %c0_i32_1 = arith.constant 0 : i32
    return %c0_i32, %c0_i32_0 : i32, i32
  }
  func.func @transform_3(%arg0: i32) -> (i32, i32, i32) {
    %c0_i32 = arith.constant 0 : i32
    %c0_i32_0 = arith.constant 0 : i32
    %c0_i32_1 = arith.constant 0 : i32
    %c0_i32_2 = arith.constant 0 : i32
    return %c0_i32, %c0_i32_0, %c0_i32_1 : i32, i32, i32
  }
  func.func @transform_4(%arg0: i32) -> (i32, i32, i32) {
    %c0_i32 = arith.constant 0 : i32
    %c0_i32_0 = arith.constant 0 : i32
    %c0_i32_1 = arith.constant 0 : i32
    %c0_i32_2 = arith.constant 0 : i32
    return %c0_i32, %c0_i32_0, %c0_i32_1 : i32, i32, i32
  }
  func.func @transform_5(%arg0: i32) -> (i32, i32, i32) {
    %c0_i32 = arith.constant 0 : i32
    %c0_i32_0 = arith.constant 0 : i32
    %c0_i32_1 = arith.constant 0 : i32
    return %arg0, %c0_i32, %c0_i32_0 : i32, i32, i32
  }
}

</mosaic_0001>

<llo_original>
// kernel: forward.1
$region0: #{forward.1}
  #allocation0 [shape = 'u32[]', space=smem, size = 0x4, offset = 0x4, fixed_abs, tag = 'smem constant byte address 0x4 - core index']
  #allocation1 [shape = 'u32[144,128]{1,0:T(1,128)}', space=vmem, size = 0x12000, scoped, tag = 'internal scratch']
  %s0 = inlined_call_operand.vmem [shape: f32[2,400,128], index: 0, kind: input, shape index: {}]
  %s1 = inlined_call_operand.vmem [shape: f32[4,128,128], index: 1, kind: input, shape index: {}]
  %s2 = inlined_call_operand.vmem [shape: f32[1,128], index: 2, kind: input, shape index: {}]
  %s3 = inlined_call_operand.hbm [shape: f32[4,128,128], index: 3, kind: input, shape index: {}]
  %s4 = inlined_call_operand.vmem [shape: f32[10,400,128], index: 4, kind: input, shape index: {}]
  %s5 = inlined_call_operand.hbm [shape: f32[2,1,10], index: 5, kind: output, shape index: {}]
  %s6 = sld [smem:[#allocation0]]
  $region57: #{forward.1} parent=0
    _
  %s8 = ssub.s32 1, %s6
  %s9 = scalar_select 0, %s8, %s6
  $region1: #{forward.1} parent=0
    #allocation2 [shape = 'u8[262144]{0}', space=vmem, size = 0x40000, scoped, tag = 'input window, operand 3, single buffered']
    #allocation3 [shape = 's32[2]{0}', space=sflag, size = 0x8, scoped, tag = 'scoped memory for forward.1']
    #allocation4 [shape = 's32[2]{0}', space=sflag, size = 0x8, scoped, tag = 'scoped memory for forward.1']
    #allocation5 [shape = 'u8[1024]{0}', space=vmem, size = 0x400, scoped, tag = 'output window, operand 0']
    %10 = vsyncpa [#allocation3], 0
    %11 = vsyncpa [#allocation4], 0
    %s12 = scalar_lea.sflag [#allocation4], 1
    %13 = vsyncpa %s12, 0
    loop: start=0, step=1, limit=4
    $region2: #{forward.1} parent=1 // loop_pre_header
      _
    $region3: #{forward.1} parent=1 // loop_header
      %s15 = sphi 0, %s19
      %p16 = scmp.ge.s32.totalorder %s15, 4
      %s25 = sphi 0, %s27
      %s28 = sphi 0, %s25
      %s29 = sphi 0, %s28
      %s45 = sphi 0, %s29
      %s49 = sphi 0, %s49
      %s51 = sphi 0, %s49
      %s52 = sphi 0, %s51
      %s66 = sphi 0, %s52
      %s70 = sphi 0, %s70
      %s72 = sphi 0, %s70
      %s73 = sphi 0, %s72
      %s87 = sphi 0, %s73
      %s91 = sphi 0, %s91
      %s93 = sphi 0, %s91
      %s94 = sphi 0, %s93
      %s108 = sphi 0, %s94
      %s112 = sphi 0, %s112
      %s114 = sphi 0, %s112
      %s115 = sphi 0, %s114
      %s129 = sphi 0, %s115
      %s135 = sphi 0, %s137
      %s138 = sphi 0, %s135
      %s139 = sphi 0, %s138
      %s155 = sphi 0, %s139
    $region4: #{forward.1} parent=1 // loop_header_branch
      %18 = sbr.rel (%p16) target = $region8
    $region5: #{forward.1} parent=1 // loop_body
      %s20 = ssub.s32 %s15, 1
      %s21 = ssub.s32 %s15, 2
      %s22 = sadd.s32 %s15, 1
      %s23 = ssub.s32 %s15, %s22
      %p24 = scmp.eq.s32.totalorder %s23, 0
      %s26 = sadd.s32 %s25, 1
      %s27 = scalar_select %p24, %s25, %s26
      %p30 = pneg %p24
      %p31 = scmp.eq.s32.totalorder %s15, 1
      %p32 = por %p30, %p31
      %p33 = scmp.ne.s32.totalorder %s25, %s28
      %p34 = scmp.eq.s32.totalorder %s15, 0
      %p35 = por %p33, %p34
      %p36 = scmp.ne.s32.totalorder %s25, %s28
      %p37 = scmp.eq.s32.totalorder %s20, 1
      %p38 = por %p36, %p37
      %p39 = scmp.ne.s32.totalorder %s28, %s29
      %p40 = scmp.eq.s32.totalorder %s20, 0
      %p41 = por %p39, %p40
      %p42 = scmp.ne.s32.totalorder %s28, %s29
      %p43 = scmp.eq.s32.totalorder %s21, 1
      %p44 = por %p42, %p43
      %p46 = scmp.ne.s32.totalorder %s29, %s45
      %p47 = scmp.eq.s32.totalorder %s21, 0
      %p48 = por %p46, %p47
      %s50 = sadd.s32 %s49, 1
      %p53 = scmp.eq.s32.totalorder %s15, 1
      %p54 = scmp.ne.s32.totalorder %s49, %s51
      %p55 = scmp.eq.s32.totalorder %s15, 0
      %p56 = por %p54, %p55
      %p57 = scmp.ne.s32.totalorder %s49, %s51
      %p58 = scmp.eq.s32.totalorder %s20, 1
      %p59 = por %p57, %p58
      %p60 = scmp.ne.s32.totalorder %s51, %s52
      %p61 = scmp.eq.s32.totalorder %s20, 0
      %p62 = por %p60, %p61
      %p63 = scmp.ne.s32.totalorder %s51, %s52
      %p64 = scmp.eq.s32.totalorder %s21, 1
      %p65 = por %p63, %p64
      %p67 = scmp.ne.s32.totalorder %s52, %s66
      %p68 = scmp.eq.s32.totalorder %s21, 0
      %p69 = por %p67, %p68
      %s71 = sadd.s32 %s70, 1
      %p74 = scmp.eq.s32.totalorder %s15, 1
      %p75 = scmp.ne.s32.totalorder %s70, %s72
      %p76 = scmp.eq.s32.totalorder %s15, 0
      %p77 = por %p75, %p76
      %p78 = scmp.ne.s32.totalorder %s70, %s72
      %p79 = scmp.eq.s32.totalorder %s20, 1
      %p80 = por %p78, %p79
      %p81 = scmp.ne.s32.totalorder %s72, %s73
      %p82 = scmp.eq.s32.totalorder %s20, 0
      %p83 = por %p81, %p82
      %p84 = scmp.ne.s32.totalorder %s72, %s73
      %p85 = scmp.eq.s32.totalorder %s21, 1
      %p86 = por %p84, %p85
      %p88 = scmp.ne.s32.totalorder %s73, %s87
      %p89 = scmp.eq.s32.totalorder %s21, 0
      %p90 = por %p88, %p89
      %s92 = sadd.s32 %s91, 1
      %p95 = scmp.eq.s32.totalorder %s15, 1
      %p96 = scmp.ne.s32.totalorder %s91, %s93
      %p97 = scmp.eq.s32.totalorder %s15, 0
      %p98 = por %p96, %p97
      %p99 = scmp.ne.s32.totalorder %s91, %s93
      %p100 = scmp.eq.s32.totalorder %s20, 1
      %p101 = por %p99, %p100
      %p102 = scmp.ne.s32.totalorder %s93, %s94
      %p103 = scmp.eq.s32.totalorder %s20, 0
      %p104 = por %p102, %p103
      %p105 = scmp.ne.s32.totalorder %s93, %s94
      %p106 = scmp.eq.s32.totalorder %s21, 1
      %p107 = por %p105, %p106
      %p109 = scmp.ne.s32.totalorder %s94, %s108
      %p110 = scmp.eq.s32.totalorder %s21, 0
      %p111 = por %p109, %p110
      %s113 = sadd.s32 %s112, 1
      %p116 = scmp.eq.s32.totalorder %s15, 1
      %p117 = scmp.ne.s32.totalorder %s112, %s114
      %p118 = scmp.eq.s32.totalorder %s15, 0
      %p119 = por %p117, %p118
      %p120 = scmp.ne.s32.totalorder %s112, %s114
      %p121 = scmp.eq.s32.totalorder %s20, 1
      %p122 = por %p120, %p121
      %p123 = scmp.ne.s32.totalorder %s114, %s115
      %p124 = scmp.eq.s32.totalorder %s20, 0
      %p125 = por %p123, %p124
      %p126 = scmp.ne.s32.totalorder %s114, %s115
      %p127 = scmp.eq.s32.totalorder %s21, 1
      %p128 = por %p126, %p127
      %p130 = scmp.ne.s32.totalorder %s115, %s129
      %p131 = scmp.eq.s32.totalorder %s21, 0
      %p132 = por %p130, %p131
      %s133 = ssub.s32 %s15, %s22
      %p134 = scmp.eq.s32.totalorder %s133, 0
      %s136 = sadd.s32 %s135, 1
      %s137 = scalar_select %p134, %s135, %s136
      %p140 = pneg %p134
      %p141 = scmp.eq.s32.totalorder %s15, 1
      %p142 = por %p140, %p141
      %p143 = scmp.ne.s32.totalorder %s135, %s138
      %p144 = scmp.eq.s32.totalorder %s15, 0
      %p145 = por %p143, %p144
      %p146 = scmp.ne.s32.totalorder %s135, %s138
      %p147 = scmp.eq.s32.totalorder %s20, 1
      %p148 = por %p146, %p147
      %p149 = scmp.ne.s32.totalorder %s138, %s139
      %p150 = scmp.eq.s32.totalorder %s20, 0
      %p151 = por %p149, %p150
      %p152 = scmp.ne.s32.totalorder %s138, %s139
      %p153 = scmp.eq.s32.totalorder %s21, 1
      %p154 = por %p152, %p153
      %p156 = scmp.ne.s32.totalorder %s139, %s155
      %p157 = scmp.eq.s32.totalorder %s21, 0
      %p158 = por %p156, %p157
      %p159 = scmp.le.s32.totalorder 1, %s15
      %p160 = scmp.lt.s32.totalorder %s15, 3
      %p161 = pnand %p159, %p160
      %p162 = pneg %p161
      // Predicated region
      $region9: #{forward.1} parent=5 // pred_check
        _
      $region10: #{forward.1} parent=5 // pred_check_branch
        %164 = sbr.rel (%p161) target = $region12
      $region11: #{forward.1} parent=5 // pred_region
        %s165 = ssub.s32 %s15, 1
        // Predicated region
        $region13: #{forward.1} parent=11 // pred_check
          %p166 = pneg %p62
        $region14: #{forward.1} parent=11 // pred_check_branch
          %168 = sbr.rel (%p166) target = $region16
        $region15: #{forward.1} parent=11 // pred_region
          _
        $region16: #{forward.1} parent=11 // pred_fallthru
          _
        // Predicated region
        $region17: #{forward.1} parent=11 // pred_check
          %p169 = pneg %p83
        $region18: #{forward.1} parent=11 // pred_check_branch
          %171 = sbr.rel (%p169) target = $region20
        $region19: #{forward.1} parent=11 // pred_region
          _
        $region20: #{forward.1} parent=11 // pred_fallthru
          _
        // Predicated region
        $region21: #{forward.1} parent=11 // pred_check
          %p172 = pneg %p104
        $region22: #{forward.1} parent=11 // pred_check_branch
          %174 = sbr.rel (%p172) target = $region24
        $region23: #{forward.1} parent=11 // pred_region
          %s176 = ssub.s32 8192, 8192
          %177 = vsyncadd [#allocation3], %s176
          %s178 = sshll.u32 [#allocation2], 4
          %s179 = int_to_ptr.vmem [resolvable:$true] %s178
          %184 = dma.hbm_to_vmem [thread:$0]  %s3, 8192, %s179, [#allocation3], 128, 128, 8
        $region24: #{forward.1} parent=11 // pred_fallthru
          _
        // Predicated region
        $region25: #{forward.1} parent=11 // pred_check
          %p185 = pneg %p125
        $region26: #{forward.1} parent=11 // pred_check_branch
          %187 = sbr.rel (%p185) target = $region28
        $region27: #{forward.1} parent=11 // pred_region
          _
        $region28: #{forward.1} parent=11 // pred_fallthru
          _
      $region12: #{forward.1} parent=5 // pred_fallthru
        _
      %p188 = scmp.lt.s32.totalorder %s15, 2
      // Predicated region
      $region29: #{forward.1} parent=5 // pred_check
        %p189 = pneg %p188
      $region30: #{forward.1} parent=5 // pred_check_branch
        %191 = sbr.rel (%p189) target = $region32
      $region31: #{forward.1} parent=5 // pred_region
        // Predicated region
        $region33: #{forward.1} parent=31 // pred_check
          %p192 = pneg %p35
        $region34: #{forward.1} parent=31 // pred_check_branch
          %194 = sbr.rel (%p192) target = $region36
        $region35: #{forward.1} parent=31 // pred_region
          %p195 = scmp.lt.s32.totalorder %s15, 1
          %s196 = scalar_select %p195, %s15, 1
          %s197 = smul.addr %s196, 50
          %s198 = smul.addr %s197, 8
          %s199 = scalar_lea.vmem %s0, %s198
        $region36: #{forward.1} parent=31 // pred_fallthru
          _
      $region32: #{forward.1} parent=5 // pred_fallthru
        _
      %p200 = scmp.le.s32.totalorder 1, %s15
      %p201 = scmp.lt.s32.totalorder %s15, 3
      %p202 = pnand %p200, %p201
      %p203 = pneg %p202
      // Predicated region
      $region37: #{forward.1} parent=5 // pred_check
        _
      $region38: #{forward.1} parent=5 // pred_check_branch
        %205 = sbr.rel (%p202) target = $region40
      $region39: #{forward.1} parent=5 // pred_region
        %s206 = ssub.s32 %s15, 1
        // Predicated region
        $region41: #{forward.1} parent=39 // pred_check
          %p207 = pneg %p104
        $region42: #{forward.1} parent=39 // pred_check_branch
          %209 = sbr.rel (%p207) target = $region44
        $region43: #{forward.1} parent=39 // pred_region
          %210 = dma.done [#allocation3], 8192
        $region44: #{forward.1} parent=39 // pred_fallthru
          _
        %p211 = scmp.lt.s32.totalorder %s20, 1
        %s212 = scalar_select %p211, %s20, 1
        %s213 = smul.addr %s212, 50
        %s214 = smul.addr %s213, 8
        %s215 = scalar_lea.vmem %s0, %s214
        %p216 = pneg %p41
        %p217 = pneg %p38
        %p218 = pneg %p62
        %p219 = pneg %p59
        %p220 = pneg %p83
        %p221 = pneg %p80
        %p222 = pneg %p104
        %p223 = pneg %p101
        %p224 = pneg %p125
        %p225 = pneg %p122
        %p226 = pneg %p151
        %p227 = pneg %p148
        %s228 = sand.u32 %s138, 1
        %s229 = scalar_lea.sflag [#allocation4], %s228
        %s230 = sand.u32 %s138, 1
        %s231 = scalar_lea.vmem [#allocation5], %s230
        %p232 = scmp.lt.s32.totalorder %s20, 1
        %s233 = scalar_select %p232, %s20, 1
        %s234 = smul.addr %s233, 50
        %s235 = smul.addr %s234, 8
        %s236 = scalar_lea.vmem %s0, %s235
        %v237 = vld [vmem:[%s236] sm:$0xff]
        %v238 = vld [vmem:[%s236 + $0x8] sm:$0xff]
        %v239 = vld [vmem:[%s236 + $0x10] sm:$0xff]
        %v240 = vld [vmem:[%s236 + $0x18] sm:$0xff]
        %v241 = vld [vmem:[%s236 + $0x20] sm:$0xff]
        %v242 = vld [vmem:[%s236 + $0x28] sm:$0xff]
        %v243 = vld [vmem:[%s236 + $0x30] sm:$0xff]
        %v244 = vld [vmem:[%s236 + $0x38] sm:$0xff]
        %v245 = vld [vmem:[%s236 + $0x40] sm:$0xff]
        %v246 = vld [vmem:[%s236 + $0x48] sm:$0xff]
        %v247 = vld [vmem:[%s236 + $0x50] sm:$0xff]
        %v248 = vld [vmem:[%s236 + $0x58] sm:$0xff]
        %v249 = vld [vmem:[%s236 + $0x60] sm:$0xff]
        %v250 = vld [vmem:[%s236 + $0x68] sm:$0xff]
        %v251 = vld [vmem:[%s236 + $0x70] sm:$0xff]
        %v252 = vld [vmem:[%s236 + $0x78] sm:$0xff]
        %v253 = vld [vmem:[%s236 + $0x80] sm:$0xff]
        %v254 = vld [vmem:[%s236 + $0x88] sm:$0xff]
        %v255 = vld [vmem:[%s236 + $0x90] sm:$0xff]
        %v256 = vld [vmem:[%s236 + $0x98] sm:$0xff]
        %v257 = vld [vmem:[%s236 + $0xa0] sm:$0xff]
        %v258 = vld [vmem:[%s236 + $0xa8] sm:$0xff]
        %v259 = vld [vmem:[%s236 + $0xb0] sm:$0xff]
        %v260 = vld [vmem:[%s236 + $0xb8] sm:$0xff]
        %v261 = vld [vmem:[%s236 + $0xc0] sm:$0xff]
        %v262 = vld [vmem:[%s236 + $0xc8] sm:$0xff]
        %v263 = vld [vmem:[%s236 + $0xd0] sm:$0xff]
        %v264 = vld [vmem:[%s236 + $0xd8] sm:$0xff]
        %v265 = vld [vmem:[%s236 + $0xe0] sm:$0xff]
        %v266 = vld [vmem:[%s236 + $0xe8] sm:$0xff]
        %v267 = vld [vmem:[%s236 + $0xf0] sm:$0xff]
        %v268 = vld [vmem:[%s236 + $0xf8] sm:$0xff]
        %v269 = vld [vmem:[%s236 + $0x100] sm:$0xff]
        %v270 = vld [vmem:[%s236 + $0x108] sm:$0xff]
        %v271 = vld [vmem:[%s236 + $0x110] sm:$0xff]
        %v272 = vld [vmem:[%s236 + $0x118] sm:$0xff]
        %v273 = vld [vmem:[%s236 + $0x120] sm:$0xff]
        %v274 = vld [vmem:[%s236 + $0x128] sm:$0xff]
        %v275 = vld [vmem:[%s236 + $0x130] sm:$0xff]
        %v276 = vld [vmem:[%s236 + $0x138] sm:$0xff]
        %v277 = vld [vmem:[%s236 + $0x140] sm:$0xff]
        %v278 = vld [vmem:[%s236 + $0x148] sm:$0xff]
        %v279 = vld [vmem:[%s236 + $0x150] sm:$0xff]
        %v280 = vld [vmem:[%s236 + $0x158] sm:$0xff]
        %v281 = vld [vmem:[%s236 + $0x160] sm:$0xff]
        %v282 = vld [vmem:[%s236 + $0x168] sm:$0xff]
        %v283 = vld [vmem:[%s236 + $0x170] sm:$0xff]
        %v284 = vld [vmem:[%s236 + $0x178] sm:$0xff]
        %v285 = vld [vmem:[%s236 + $0x180] sm:$0xff]
        %v286 = vld [vmem:[%s236 + $0x188] sm:$0xff]
        %v287 = vld [vmem:[%s2] sm:$0x1]
        %v288 = vld [vmem:[%s1] sm:$0xff]
        %v289 = vld [vmem:[%s1 + $0x8] sm:$0xff]
        %v290 = vld [vmem:[%s1 + $0x10] sm:$0xff]
        %v291 = vld [vmem:[%s1 + $0x18] sm:$0xff]
        %v292 = vld [vmem:[%s1 + $0x20] sm:$0xff]
        %v293 = vld [vmem:[%s1 + $0x28] sm:$0xff]
        %v294 = vld [vmem:[%s1 + $0x30] sm:$0xff]
        %v295 = vld [vmem:[%s1 + $0x38] sm:$0xff]
        %v296 = vld [vmem:[%s1 + $0x40] sm:$0xff]
        %v297 = vld [vmem:[%s1 + $0x48] sm:$0xff]
        %v298 = vld [vmem:[%s1 + $0x50] sm:$0xff]
        %v299 = vld [vmem:[%s1 + $0x58] sm:$0xff]
        %v300 = vld [vmem:[%s1 + $0x60] sm:$0xff]
        %v301 = vld [vmem:[%s1 + $0x68] sm:$0xff]
        %v302 = vld [vmem:[%s1 + $0x70] sm:$0xff]
        %v303 = vld [vmem:[%s1 + $0x78] sm:$0xff]
        %v305 = vlaneseq
        %v306 = vshrl.u32 %v305, 7
        %v307 = vsub.s32 0, %v306
        %v308 = vrot.slane %v287, %v307
        %310 = vmatprep.subr.mxu0 0.0
        %311 = vmatpush1.msra.mxu0 %v288
        %312 = vmatprep.subr.mxu0 0.0
        %313 = vmatpush1.msra.mxu0 %v289
        %314 = vmatprep.subr.mxu0 0.0
        %315 = vmatpush1.msra.mxu0 %v290
        %316 = vmatprep.subr.mxu0 0.0
        %317 = vmatpush1.msra.mxu0 %v291
        %318 = vmatprep.subr.mxu0 0.0
        %319 = vmatpush1.msra.mxu0 %v292
        %320 = vmatprep.subr.mxu0 0.0
        %321 = vmatpush1.msra.mxu0 %v293
        %322 = vmatprep.subr.mxu0 0.0
        %323 = vmatpush1.msra.mxu0 %v294
        %324 = vmatprep.subr.mxu0 0.0
        %325 = vmatpush1.msra.mxu0 %v295
        %326 = vmatprep.subr.mxu0 0.0
        %327 = vmatpush1.msra.mxu0 %v296
        %328 = vmatprep.subr.mxu0 0.0
        %329 = vmatpush1.msra.mxu0 %v297
        %330 = vmatprep.subr.mxu0 0.0
        %331 = vmatpush1.msra.mxu0 %v298
        %332 = vmatprep.subr.mxu0 0.0
        %333 = vmatpush1.msra.mxu0 %v299
        %334 = vmatprep.subr.mxu0 0.0
        %335 = vmatpush1.msra.mxu0 %v300
        %336 = vmatprep.subr.mxu0 0.0
        %337 = vmatpush1.msra.mxu0 %v301
        %338 = vmatprep.subr.mxu0 0.0
        %339 = vmatpush1.msra.mxu0 %v302
        %340 = vmatprep.subr.mxu0 0.0
        %341 = vmatpush1.msra.mxu0 %v303
        %342 = vmatprep.subr.mxu0 0.0
        %343 = vmatpush1.msra.mxu0 0.0
        %344 = vmatprep.subr.mxu0 0.0
        %345 = vmatpush1.msra.mxu0 0.0
        %346 = vmatprep.subr.mxu0 0.0
        %347 = vmatpush1.msra.mxu0 0.0
        %348 = vmatprep.subr.mxu0 0.0
        %349 = vmatpush1.msra.mxu0 0.0
        %350 = vmatprep.subr.mxu0 0.0
        %351 = vmatpush1.msra.mxu0 0.0
        %352 = vmatprep.subr.mxu0 0.0
        %353 = vmatpush1.msra.mxu0 0.0
        %354 = vmatprep.subr.mxu0 0.0
        %355 = vmatpush1.msra.mxu0 0.0
        %356 = vmatprep.subr.mxu0 0.0
        %357 = vmatpush1.msra.mxu0 0.0
        %358 = vmatprep.subr.mxu0 0.0
        %359 = vmatpush1.msra.mxu0 0.0
        %360 = vmatprep.subr.mxu0 0.0
        %361 = vmatpush1.msra.mxu0 0.0
        %362 = vmatprep.subr.mxu0 0.0
        %363 = vmatpush1.msra.mxu0 0.0
        %364 = vmatprep.subr.mxu0 0.0
        %365 = vmatpush1.msra.mxu0 0.0
        %366 = vmatprep.subr.mxu0 0.0
        %367 = vmatpush1.msra.mxu0 0.0
        %368 = vmatprep.subr.mxu0 0.0
        %369 = vmatpush1.msra.mxu0 0.0
        %370 = vmatprep.subr.mxu0 0.0
        %371 = vmatpush1.msra.mxu0 0.0
        %372 = vmatprep.subr.mxu0 0.0
        %373 = vmatpush1.msra.mxu0 0.0
        %374 = vmatprep.mubr.f32.mxu0 0.0
        %375 = vmatmul.mubr.f32.gmra.mrb[0].mxu0 %v237
        %v376 = vpop.f32.mrb[0].mxu0
        %v377 = vadd.f32 %v308, %v376
        %v378 = vpop.f32.mrb[0].mxu0
        %379 = vmatprep.mubr.f32.mxu0 0.0
        %380 = vmatmul.mubr.f32.gmra.mrb[0].mxu0 %v238
        %v381 = vpop.f32.mrb[0].mxu0
        %v382 = vadd.f32 %v308, %v381
        %v383 = vpop.f32.mrb[0].mxu0
        %384 = vmatprep.mubr.f32.mxu0 0.0
        %385 = vmatmul.mubr.f32.gmra.mrb[0].mxu0 %v239
        %v386 = vpop.f32.mrb[0].mxu0
        %v387 = vadd.f32 %v308, %v386
        %v388 = vpop.f32.mrb[0].mxu0
        %389 = vmatprep.mubr.f32.mxu0 0.0
        %390 = vmatmul.mubr.f32.gmra.mrb[0].mxu0 %v240
        %v391 = vpop.f32.mrb[0].mxu0
        %v392 = vadd.f32 %v308, %v391
        %v393 = vpop.f32.mrb[0].mxu0
        %394 = vmatprep.mubr.f32.mxu0 0.0
        %395 = vmatmul.mubr.f32.gmra.mrb[0].mxu0 %v241
        %v396 = vpop.f32.mrb[0].mxu0
        %v397 = vadd.f32 %v308, %v396
        %v398 = vpop.f32.mrb[0].mxu0
        %399 = vmatprep.mubr.f32.mxu0 0.0
        %400 = vmatmul.mubr.f32.gmra.mrb[0].mxu0 %v242
        %v401 = vpop.f32.mrb[0].mxu0
        %v402 = vadd.f32 %v308, %v401
        %v403 = vpop.f32.mrb[0].mxu0
        %404 = vmatprep.mubr.f32.mxu0 0.0
        %405 = vmatmul.mubr.f32.gmra.mrb[0].mxu0 %v243
        %v406 = vpop.f32.mrb[0].mxu0
        %v407 = vadd.f32 %v308, %v406
        %v408 = vpop.f32.mrb[0].mxu0
        %409 = vmatprep.mubr.f32.mxu0 0.0
        %410 = vmatmul.mubr.f32.gmra.mrb[0].mxu0 %v244
        %v411 = vpop.f32.mrb[0].mxu0
        %v412 = vadd.f32 %v308, %v411
        %v413 = vpop.f32.mrb[0].mxu0
        %414 = vmatprep.mubr.f32.mxu0 0.0
        %415 = vmatmul.mubr.f32.gmra.mrb[0].mxu0 %v245
        %v416 = vpop.f32.mrb[0].mxu0
        %v417 = vadd.f32 %v308, %v416
        %v418 = vpop.f32.mrb[0].mxu0
        %419 = vmatprep.mubr.f32.mxu0 0.0
        %420 = vmatmul.mubr.f32.gmra.mrb[0].mxu0 %v246
        %v421 = vpop.f32.mrb[0].mxu0
        %v422 = vadd.f32 %v308, %v421
        %v423 = vpop.f32.mrb[0].mxu0
        %424 = vmatprep.mubr.f32.mxu0 0.0
        %425 = vmatmul.mubr.f32.gmra.mrb[0].mxu0 %v247
        %v426 = vpop.f32.mrb[0].mxu0
        %v427 = vadd.f32 %v308, %v426
        %v428 = vpop.f32.mrb[0].mxu0
        %429 = vmatprep.mubr.f32.mxu0 0.0
        %430 = vmatmul.mubr.f32.gmra.mrb[0].mxu0 %v248
        %v431 = vpop.f32.mrb[0].mxu0
        %v432 = vadd.f32 %v308, %v431
        %v433 = vpop.f32.mrb[0].mxu0
        %434 = vmatprep.mubr.f32.mxu0 0.0
        %435 = vmatmul.mubr.f32.gmra.mrb[0].mxu0 %v249
        %v436 = vpop.f32.mrb[0].mxu0
        %v437 = vadd.f32 %v308, %v436
        %v438 = vpop.f32.mrb[0].mxu0
        %439 = vmatprep.mubr.f32.mxu0 0.0
        %440 = vmatmul.mubr.f32.gmra.mrb[0].mxu0 %v250
        %v441 = vpop.f32.mrb[0].mxu0
        %v442 = vadd.f32 %v308, %v441
        %v443 = vpop.f32.mrb[0].mxu0
        %444 = vmatprep.mubr.f32.mxu0 0.0
        %445 = vmatmul.mubr.f32.gmra.mrb[0].mxu0 %v251
        %v446 = vpop.f32.mrb[0].mxu0
        %v447 = vadd.f32 %v308, %v446
        %v448 = vpop.f32.mrb[0].mxu0
        %449 = vmatprep.mubr.f32.mxu0 0.0
        %450 = vmatmul.mubr.f32.gmra.mrb[0].mxu0 %v252
        %v451 = vpop.f32.mrb[0].mxu0
        %v452 = vadd.f32 %v308, %v451
        %v453 = vpop.f32.mrb[0].mxu0
        %454 = vmatprep.mubr.f32.mxu0 0.0
        %455 = vmatmul.mubr.f32.gmra.mrb[0].mxu0 %v253
        %v456 = vpop.f32.mrb[0].mxu0
        %v457 = vadd.f32 %v308, %v456
        %v458 = vpop.f32.mrb[0].mxu0
        %459 = vmatprep.mubr.f32.mxu0 0.0
        %460 = vmatmul.mubr.f32.gmra.mrb[0].mxu0 %v254
        %v461 = vpop.f32.mrb[0].mxu0
        %v462 = vadd.f32 %v308, %v461
        %v463 = vpop.f32.mrb[0].mxu0
        %464 = vmatprep.mubr.f32.mxu0 0.0
        %465 = vmatmul.mubr.f32.gmra.mrb[0].mxu0 %v255
        %v466 = vpop.f32.mrb[0].mxu0
        %v467 = vadd.f32 %v308, %v466
        %v468 = vpop.f32.mrb[0].mxu0
        %469 = vmatprep.mubr.f32.mxu0 0.0
        %470 = vmatmul.mubr.f32.gmra.mrb[0].mxu0 %v256
        %v471 = vpop.f32.mrb[0].mxu0
        %v472 = vadd.f32 %v308, %v471
        %v473 = vpop.f32.mrb[0].mxu0
        %474 = vmatprep.mubr.f32.mxu0 0.0
        %475 = vmatmul.mubr.f32.gmra.mrb[0].mxu0 %v257
        %v476 = vpop.f32.mrb[0].mxu0
        %v477 = vadd.f32 %v308, %v476
        %v478 = vpop.f32.mrb[0].mxu0
        %479 = vmatprep.mubr.f32.mxu0 0.0
        %480 = vmatmul.mubr.f32.gmra.mrb[0].mxu0 %v258
        %v481 = vpop.f32.mrb[0].mxu0
        %v482 = vadd.f32 %v308, %v481
        %v483 = vpop.f32.mrb[0].mxu0
        %484 = vmatprep.mubr.f32.mxu0 0.0
        %485 = vmatmul.mubr.f32.gmra.mrb[0].mxu0 %v259
        %v486 = vpop.f32.mrb[0].mxu0
        %v487 = vadd.f32 %v308, %v486
        %v488 = vpop.f32.mrb[0].mxu0
        %489 = vmatprep.mubr.f32.mxu0 0.0
        %490 = vmatmul.mubr.f32.gmra.mrb[0].mxu0 %v260
        %v491 = vpop.f32.mrb[0].mxu0
        %v492 = vadd.f32 %v308, %v491
        %v493 = vpop.f32.mrb[0].mxu0
        %494 = vmatprep.mubr.f32.mxu0 0.0
        %495 = vmatmul.mubr.f32.gmra.mrb[0].mxu0 %v261
        %v496 = vpop.f32.mrb[0].mxu0
        %v497 = vadd.f32 %v308, %v496
        %v498 = vpop.f32.mrb[0].mxu0
        %499 = vmatprep.mubr.f32.mxu0 0.0
        %500 = vmatmul.mubr.f32.gmra.mrb[0].mxu0 %v262
        %v501 = vpop.f32.mrb[0].mxu0
        %v502 = vadd.f32 %v308, %v501
        %v503 = vpop.f32.mrb[0].mxu0
        %504 = vmatprep.mubr.f32.mxu0 0.0
        %505 = vmatmul.mubr.f32.gmra.mrb[0].mxu0 %v263
        %v506 = vpop.f32.mrb[0].mxu0
        %v507 = vadd.f32 %v308, %v506
        %v508 = vpop.f32.mrb[0].mxu0
        %509 = vmatprep.mubr.f32.mxu0 0.0
        %510 = vmatmul.mubr.f32.gmra.mrb[0].mxu0 %v264
        %v511 = vpop.f32.mrb[0].mxu0
        %v512 = vadd.f32 %v308, %v511
        %v513 = vpop.f32.mrb[0].mxu0
        %514 = vmatprep.mubr.f32.mxu0 0.0
        %515 = vmatmul.mubr.f32.gmra.mrb[0].mxu0 %v265
        %v516 = vpop.f32.mrb[0].mxu0
        %v517 = vadd.f32 %v308, %v516
        %v518 = vpop.f32.mrb[0].mxu0
        %519 = vmatprep.mubr.f32.mxu0 0.0
        %520 = vmatmul.mubr.f32.gmra.mrb[0].mxu0 %v266
        %v521 = vpop.f32.mrb[0].mxu0
        %v522 = vadd.f32 %v308, %v521
        %v523 = vpop.f32.mrb[0].mxu0
        %524 = vmatprep.mubr.f32.mxu0 0.0
        %525 = vmatmul.mubr.f32.gmra.mrb[0].mxu0 %v267
        %v526 = vpop.f32.mrb[0].mxu0
        %v527 = vadd.f32 %v308, %v526
        %v528 = vpop.f32.mrb[0].mxu0
        %529 = vmatprep.mubr.f32.mxu0 0.0
        %530 = vmatmul.mubr.f32.gmra.mrb[0].mxu0 %v268
        %v531 = vpop.f32.mrb[0].mxu0
        %v532 = vadd.f32 %v308, %v531
        %v533 = vpop.f32.mrb[0].mxu0
        %534 = vmatprep.mubr.f32.mxu0 0.0
        %535 = vmatmul.mubr.f32.gmra.mrb[0].mxu0 %v269
        %v536 = vpop.f32.mrb[0].mxu0
        %v537 = vadd.f32 %v308, %v536
        %v538 = vpop.f32.mrb[0].mxu0
        %539 = vmatprep.mubr.f32.mxu0 0.0
        %540 = vmatmul.mubr.f32.gmra.mrb[0].mxu0 %v270
        %v541 = vpop.f32.mrb[0].mxu0
        %v542 = vadd.f32 %v308, %v541
        %v543 = vpop.f32.mrb[0].mxu0
        %544 = vmatprep.mubr.f32.mxu0 0.0
        %545 = vmatmul.mubr.f32.gmra.mrb[0].mxu0 %v271
        %v546 = vpop.f32.mrb[0].mxu0
        %v547 = vadd.f32 %v308, %v546
        %v548 = vpop.f32.mrb[0].mxu0
        %549 = vmatprep.mubr.f32.mxu0 0.0
        %550 = vmatmul.mubr.f32.gmra.mrb[0].mxu0 %v272
        %v551 = vpop.f32.mrb[0].mxu0
        %v552 = vadd.f32 %v308, %v551
        %v553 = vpop.f32.mrb[0].mxu0
        %554 = vmatprep.mubr.f32.mxu0 0.0
        %555 = vmatmul.mubr.f32.gmra.mrb[0].mxu0 %v273
        %v556 = vpop.f32.mrb[0].mxu0
        %v557 = vadd.f32 %v308, %v556
        %v558 = vpop.f32.mrb[0].mxu0
        %559 = vmatprep.mubr.f32.mxu0 0.0
        %560 = vmatmul.mubr.f32.gmra.mrb[0].mxu0 %v274
        %v561 = vpop.f32.mrb[0].mxu0
        %v562 = vadd.f32 %v308, %v561
        %v563 = vpop.f32.mrb[0].mxu0
        %564 = vmatprep.mubr.f32.mxu0 0.0
        %565 = vmatmul.mubr.f32.gmra.mrb[0].mxu0 %v275
        %v566 = vpop.f32.mrb[0].mxu0
        %v567 = vadd.f32 %v308, %v566
        %v568 = vpop.f32.mrb[0].mxu0
        %569 = vmatprep.mubr.f32.mxu0 0.0
        %570 = vmatmul.mubr.f32.gmra.mrb[0].mxu0 %v276
        %v571 = vpop.f32.mrb[0].mxu0
        %v572 = vadd.f32 %v308, %v571
        %v573 = vpop.f32.mrb[0].mxu0
        %574 = vmatprep.mubr.f32.mxu0 0.0
        %575 = vmatmul.mubr.f32.gmra.mrb[0].mxu0 %v277
        %v576 = vpop.f32.mrb[0].mxu0
        %v577 = vadd.f32 %v308, %v576
        %v578 = vpop.f32.mrb[0].mxu0
        %579 = vmatprep.mubr.f32.mxu0 0.0
        %580 = vmatmul.mubr.f32.gmra.mrb[0].mxu0 %v278
        %v581 = vpop.f32.mrb[0].mxu0
        %v582 = vadd.f32 %v308, %v581
        %v583 = vpop.f32.mrb[0].mxu0
        %584 = vmatprep.mubr.f32.mxu0 0.0
        %585 = vmatmul.mubr.f32.gmra.mrb[0].mxu0 %v279
        %v586 = vpop.f32.mrb[0].mxu0
        %v587 = vadd.f32 %v308, %v586
        %v588 = vpop.f32.mrb[0].mxu0
        %589 = vmatprep.mubr.f32.mxu0 0.0
        %590 = vmatmul.mubr.f32.gmra.mrb[0].mxu0 %v280
        %v591 = vpop.f32.mrb[0].mxu0
        %v592 = vadd.f32 %v308, %v591
        %v593 = vpop.f32.mrb[0].mxu0
        %594 = vmatprep.mubr.f32.mxu0 0.0
        %595 = vmatmul.mubr.f32.gmra.mrb[0].mxu0 %v281
        %v596 = vpop.f32.mrb[0].mxu0
        %v597 = vadd.f32 %v308, %v596
        %v598 = vpop.f32.mrb[0].mxu0
        %599 = vmatprep.mubr.f32.mxu0 0.0
        %600 = vmatmul.mubr.f32.gmra.mrb[0].mxu0 %v282
        %v601 = vpop.f32.mrb[0].mxu0
        %v602 = vadd.f32 %v308, %v601
        %v603 = vpop.f32.mrb[0].mxu0
        %604 = vmatprep.mubr.f32.mxu0 0.0
        %605 = vmatmul.mubr.f32.gmra.mrb[0].mxu0 %v283
        %v606 = vpop.f32.mrb[0].mxu0
        %v607 = vadd.f32 %v308, %v606
        %v608 = vpop.f32.mrb[0].mxu0
        %609 = vmatprep.mubr.f32.mxu0 0.0
        %610 = vmatmul.mubr.f32.gmra.mrb[0].mxu0 %v284
        %v611 = vpop.f32.mrb[0].mxu0
        %v612 = vadd.f32 %v308, %v611
        %v613 = vpop.f32.mrb[0].mxu0
        %614 = vmatprep.mubr.f32.mxu0 0.0
        %615 = vmatmul.mubr.f32.gmra.mrb[0].mxu0 %v285
        %v616 = vpop.f32.mrb[0].mxu0
        %v617 = vadd.f32 %v308, %v616
        %v618 = vpop.f32.mrb[0].mxu0
        %619 = vmatprep.mubr.f32.mxu0 0.0
        %620 = vmatmul.mubr.f32.gmra.mrb[0].mxu0 %v286
        %v621 = vpop.f32.mrb[0].mxu0
        %v622 = vadd.f32 %v308, %v621
        %v623 = vpop.f32.mrb[0].mxu0
        %624 = vdwg.mxu0
        %v625 = vld [vmem:[#allocation2] sm:$0xff]
        %v626 = vld [vmem:[#allocation2 + $0x8] sm:$0xff]
        %v627 = vld [vmem:[#allocation2 + $0x10] sm:$0xff]
        %v628 = vld [vmem:[#allocation2 + $0x18] sm:$0xff]
        %v629 = vld [vmem:[#allocation2 + $0x20] sm:$0xff]
        %v630 = vld [vmem:[#allocation2 + $0x28] sm:$0xff]
        %v631 = vld [vmem:[#allocation2 + $0x30] sm:$0xff]
        %v632 = vld [vmem:[#allocation2 + $0x38] sm:$0xff]
        %v633 = vld [vmem:[#allocation2 + $0x40] sm:$0xff]
        %v634 = vld [vmem:[#allocation2 + $0x48] sm:$0xff]
        %v635 = vld [vmem:[#allocation2 + $0x50] sm:$0xff]
        %v636 = vld [vmem:[#allocation2 + $0x58] sm:$0xff]
        %v637 = vld [vmem:[#allocation2 + $0x60] sm:$0xff]
        %v638 = vld [vmem:[#allocation2 + $0x68] sm:$0xff]
        %v639 = vld [vmem:[#allocation2 + $0x70] sm:$0xff]
        %v640 = vld [vmem:[#allocation2 + $0x78] sm:$0xff]
        %s641 = scalar_lea.vmem %s1, 128
        %v642 = vld [vmem:[%s641] sm:$0xff]
        %v643 = vld [vmem:[%s641 + $0x8] sm:$0xff]
        %v644 = vld [vmem:[%s641 + $0x10] sm:$0xff]
        %v645 = vld [vmem:[%s641 + $0x18] sm:$0xff]
        %v646 = vld [vmem:[%s641 + $0x20] sm:$0xff]
        %v647 = vld [vmem:[%s641 + $0x28] sm:$0xff]
        %v648 = vld [vmem:[%s641 + $0x30] sm:$0xff]
        %v649 = vld [vmem:[%s641 + $0x38] sm:$0xff]
        %v650 = vld [vmem:[%s641 + $0x40] sm:$0xff]
        %v651 = vld [vmem:[%s641 + $0x48] sm:$0xff]
        %v652 = vld [vmem:[%s641 + $0x50] sm:$0xff]
        %v653 = vld [vmem:[%s641 + $0x58] sm:$0xff]
        %v654 = vld [vmem:[%s641 + $0x60] sm:$0xff]
        %v655 = vld [vmem:[%s641 + $0x68] sm:$0xff]
        %v656 = vld [vmem:[%s641 + $0x70] sm:$0xff]
        %v657 = vld [vmem:[%s641 + $0x78] sm:$0xff]
        %658 = vmatprep.subr.mxu0 0.0
        %659 = vmatpush1.msra.mxu0 %v642
        %660 = vmatprep.subr.mxu0 0.0
        %661 = vmatpush1.msra.mxu0 %v643
        %662 = vmatprep.subr.mxu0 0.0
        %663 = vmatpush1.msra.mxu0 %v644
        %664 = vmatprep.subr.mxu0 0.0
        %665 = vmatpush1.msra.mxu0 %v645
        %666 = vmatprep.subr.mxu0 0.0
        %667 = vmatpush1.msra.mxu0 %v646
        %668 = vmatprep.subr.mxu0 0.0
        %669 = vmatpush1.msra.mxu0 %v647
        %670 = vmatprep.subr.mxu0 0.0
        %671 = vmatpush1.msra.mxu0 %v648
        %672 = vmatprep.subr.mxu0 0.0
        %673 = vmatpush1.msra.mxu0 %v649
        %674 = vmatprep.subr.mxu0 0.0
        %675 = vmatpush1.msra.mxu0 %v650
        %676 = vmatprep.subr.mxu0 0.0
        %677 = vmatpush1.msra.mxu0 %v651
        %678 = vmatprep.subr.mxu0 0.0
        %679 = vmatpush1.msra.mxu0 %v652
        %680 = vmatprep.subr.mxu0 0.0
        %681 = vmatpush1.msra.mxu0 %v653
        %682 = vmatprep.subr.mxu0 0.0
        %683 = vmatpush1.msra.mxu0 %v654
        %684 = vmatprep.subr.mxu0 0.0
        %685 = vmatpush1.msra.mxu0 %v655
        %686 = vmatprep.subr.mxu0 0.0
        %687 = vmatpush1.msra.mxu0 %v656
        %688 = vmatprep.subr.mxu0 0.0
        %689 = vmatpush1.msra.mxu0 %v657
        %690 = vmatprep.subr.mxu0 0.0
        %691 = vmatpush1.msra.mxu0 0.0
        %692 = vmatprep.subr.mxu0 0.0
        %693 = vmatpush1.msra.mxu0 0.0
        %694 = vmatprep.subr.mxu0 0.0
        %695 = vmatpush1.msra.mxu0 0.0
        %696 = vmatprep.subr.mxu0 0.0
        %697 = vmatpush1.msra.mxu0 0.0
        %698 = vmatprep.subr.mxu0 0.0
        %699 = vmatpush1.msra.mxu0 0.0
        %700 = vmatprep.subr.mxu0 0.0
        %701 = vmatpush1.msra.mxu0 0.0
        %702 = vmatprep.subr.mxu0 0.0
        %703 = vmatpush1.msra.mxu0 0.0
        %704 = vmatprep.subr.mxu0 0.0
        %705 = vmatpush1.msra.mxu0 0.0
        %706 = vmatprep.subr.mxu0 0.0
        %707 = vmatpush1.msra.mxu0 0.0
        %708 = vmatprep.subr.mxu0 0.0
        %709 = vmatpush1.msra.mxu0 0.0
        %710 = vmatprep.subr.mxu0 0.0
        %711 = vmatpush1.msra.mxu0 0.0
        %712 = vmatprep.subr.mxu0 0.0
        %713 = vmatpush1.msra.mxu0 0.0
        %714 = vmatprep.subr.mxu0 0.0
        %715 = vmatpush1.msra.mxu0 0.0
        %716 = vmatprep.subr.mxu0 0.0
        %717 = vmatpush1.msra.mxu0 0.0
        %718 = vmatprep.subr.mxu0 0.0
        %719 = vmatpush1.msra.mxu0 0.0
        %720 = vmatprep.subr.mxu0 0.0
        %721 = vmatpush1.msra.mxu0 0.0
        %722 = vmatprep.mubr.f32.mxu0 0.0
        %723 = vmatmul.mubr.f32.gmra.mrb[0].mxu0 %v237
        %v724 = vpop.f32.mrb[0].mxu0
        %v725 = vadd.f32 %v308, %v724
        %v726 = vpop.f32.mrb[0].mxu0
        %727 = vmatprep.mubr.f32.mxu0 0.0
        %728 = vmatmul.mubr.f32.gmra.mrb[0].mxu0 %v238
        %v729 = vpop.f32.mrb[0].mxu0
        %v730 = vadd.f32 %v308, %v729
        %v731 = vpop.f32.mrb[0].mxu0
        %732 = vmatprep.mubr.f32.mxu0 0.0
        %733 = vmatmul.mubr.f32.gmra.mrb[0].mxu0 %v239
        %v734 = vpop.f32.mrb[0].mxu0
        %v735 = vadd.f32 %v308, %v734
        %v736 = vpop.f32.mrb[0].mxu0
        %737 = vmatprep.mubr.f32.mxu0 0.0
        %738 = vmatmul.mubr.f32.gmra.mrb[0].mxu0 %v240
        %v739 = vpop.f32.mrb[0].mxu0
        %v740 = vadd.f32 %v308, %v739
        %v741 = vpop.f32.mrb[0].mxu0
        %742 = vmatprep.mubr.f32.mxu0 0.0
        %743 = vmatmul.mubr.f32.gmra.mrb[0].mxu0 %v241
        %v744 = vpop.f32.mrb[0].mxu0
        %v745 = vadd.f32 %v308, %v744
        %v746 = vpop.f32.mrb[0].mxu0
        %747 = vmatprep.mubr.f32.mxu0 0.0
        %748 = vmatmul.mubr.f32.gmra.mrb[0].mxu0 %v242
        %v749 = vpop.f32.mrb[0].mxu0
        %v750 = vadd.f32 %v308, %v749
        %v751 = vpop.f32.mrb[0].mxu0
        %752 = vmatprep.mubr.f32.mxu0 0.0
        %753 = vmatmul.mubr.f32.gmra.mrb[0].mxu0 %v243
        %v754 = vpop.f32.mrb[0].mxu0
        %v755 = vadd.f32 %v308, %v754
        %v756 = vpop.f32.mrb[0].mxu0
        %757 = vmatprep.mubr.f32.mxu0 0.0
        %758 = vmatmul.mubr.f32.gmra.mrb[0].mxu0 %v244
        %v759 = vpop.f32.mrb[0].mxu0
        %v760 = vadd.f32 %v308, %v759
        %v761 = vpop.f32.mrb[0].mxu0
        %762 = vmatprep.mubr.f32.mxu0 0.0
        %763 = vmatmul.mubr.f32.gmra.mrb[0].mxu0 %v245
        %v764 = vpop.f32.mrb[0].mxu0
        %v765 = vadd.f32 %v308, %v764
        %v766 = vpop.f32.mrb[0].mxu0
        %767 = vmatprep.mubr.f32.mxu0 0.0
        %768 = vmatmul.mubr.f32.gmra.mrb[0].mxu0 %v246
        %v769 = vpop.f32.mrb[0].mxu0
        %v770 = vadd.f32 %v308, %v769
        %v771 = vpop.f32.mrb[0].mxu0
        %772 = vmatprep.mubr.f32.mxu0 0.0
        %773 = vmatmul.mubr.f32.gmra.mrb[0].mxu0 %v247
        %v774 = vpop.f32.mrb[0].mxu0
        %v775 = vadd.f32 %v308, %v774
        %v776 = vpop.f32.mrb[0].mxu0
        %777 = vmatprep.mubr.f32.mxu0 0.0
        %778 = vmatmul.mubr.f32.gmra.mrb[0].mxu0 %v248
        %v779 = vpop.f32.mrb[0].mxu0
        %v780 = vadd.f32 %v308, %v779
        %v781 = vpop.f32.mrb[0].mxu0
        %782 = vmatprep.mubr.f32.mxu0 0.0
        %783 = vmatmul.mubr.f32.gmra.mrb[0].mxu0 %v249
        %v784 = vpop.f32.mrb[0].mxu0
        %v785 = vadd.f32 %v308, %v784
        %v786 = vpop.f32.mrb[0].mxu0
        %787 = vmatprep.mubr.f32.mxu0 0.0
        %788 = vmatmul.mubr.f32.gmra.mrb[0].mxu0 %v250
        %v789 = vpop.f32.mrb[0].mxu0
        %v790 = vadd.f32 %v308, %v789
        %v791 = vpop.f32.mrb[0].mxu0
        %792 = vmatprep.mubr.f32.mxu0 0.0
        %793 = vmatmul.mubr.f32.gmra.mrb[0].mxu0 %v251
        %v794 = vpop.f32.mrb[0].mxu0
        %v795 = vadd.f32 %v308, %v794
        %v796 = vpop.f32.mrb[0].mxu0
        %797 = vmatprep.mubr.f32.mxu0 0.0
        %798 = vmatmul.mubr.f32.gmra.mrb[0].mxu0 %v252
        %v799 = vpop.f32.mrb[0].mxu0
        %v800 = vadd.f32 %v308, %v799
        %v801 = vpop.f32.mrb[0].mxu0
        %802 = vmatprep.mubr.f32.mxu0 0.0
        %803 = vmatmul.mubr.f32.gmra.mrb[0].mxu0 %v253
        %v804 = vpop.f32.mrb[0].mxu0
        %v805 = vadd.f32 %v308, %v804
        %v806 = vpop.f32.mrb[0].mxu0
        %807 = vmatprep.mubr.f32.mxu0 0.0
        %808 = vmatmul.mubr.f32.gmra.mrb[0].mxu0 %v254
        %v809 = vpop.f32.mrb[0].mxu0
        %v810 = vadd.f32 %v308, %v809
        %v811 = vpop.f32.mrb[0].mxu0
        %812 = vmatprep.mubr.f32.mxu0 0.0
        %813 = vmatmul.mubr.f32.gmra.mrb[0].mxu0 %v255
        %v814 = vpop.f32.mrb[0].mxu0
        %v815 = vadd.f32 %v308, %v814
        %v816 = vpop.f32.mrb[0].mxu0
        %817 = vmatprep.mubr.f32.mxu0 0.0
        %818 = vmatmul.mubr.f32.gmra.mrb[0].mxu0 %v256
        %v819 = vpop.f32.mrb[0].mxu0
        %v820 = vadd.f32 %v308, %v819
        %v821 = vpop.f32.mrb[0].mxu0
        %822 = vmatprep.mubr.f32.mxu0 0.0
        %823 = vmatmul.mubr.f32.gmra.mrb[0].mxu0 %v257
        %v824 = vpop.f32.mrb[0].mxu0
        %v825 = vadd.f32 %v308, %v824
        %v826 = vpop.f32.mrb[0].mxu0
        %827 = vmatprep.mubr.f32.mxu0 0.0
        %828 = vmatmul.mubr.f32.gmra.mrb[0].mxu0 %v258
        %v829 = vpop.f32.mrb[0].mxu0
        %v830 = vadd.f32 %v308, %v829
        %v831 = vpop.f32.mrb[0].mxu0
        %832 = vmatprep.mubr.f32.mxu0 0.0
        %833 = vmatmul.mubr.f32.gmra.mrb[0].mxu0 %v259
        %v834 = vpop.f32.mrb[0].mxu0
        %v835 = vadd.f32 %v308, %v834
        %v836 = vpop.f32.mrb[0].mxu0
        %837 = vmatprep.mubr.f32.mxu0 0.0
        %838 = vmatmul.mubr.f32.gmra.mrb[0].mxu0 %v260
        %v839 = vpop.f32.mrb[0].mxu0
        %v840 = vadd.f32 %v308, %v839
        %v841 = vpop.f32.mrb[0].mxu0
        %842 = vmatprep.mubr.f32.mxu0 0.0
        %843 = vmatmul.mubr.f32.gmra.mrb[0].mxu0 %v261
        %v844 = vpop.f32.mrb[0].mxu0
        %v845 = vadd.f32 %v308, %v844
        %v846 = vpop.f32.mrb[0].mxu0
        %847 = vmatprep.mubr.f32.mxu0 0.0
        %848 = vmatmul.mubr.f32.gmra.mrb[0].mxu0 %v262
        %v849 = vpop.f32.mrb[0].mxu0
        %v850 = vadd.f32 %v308, %v849
        %v851 = vpop.f32.mrb[0].mxu0
        %852 = vmatprep.mubr.f32.mxu0 0.0
        %853 = vmatmul.mubr.f32.gmra.mrb[0].mxu0 %v263
        %v854 = vpop.f32.mrb[0].mxu0
        %v855 = vadd.f32 %v308, %v854
        %v856 = vpop.f32.mrb[0].mxu0
        %857 = vmatprep.mubr.f32.mxu0 0.0
        %858 = vmatmul.mubr.f32.gmra.mrb[0].mxu0 %v264
        %v859 = vpop.f32.mrb[0].mxu0
        %v860 = vadd.f32 %v308, %v859
        %v861 = vpop.f32.mrb[0].mxu0
        %862 = vmatprep.mubr.f32.mxu0 0.0
        %863 = vmatmul.mubr.f32.gmra.mrb[0].mxu0 %v265
        %v864 = vpop.f32.mrb[0].mxu0
        %v865 = vadd.f32 %v308, %v864
        %v866 = vpop.f32.mrb[0].mxu0
        %867 = vmatprep.mubr.f32.mxu0 0.0
        %868 = vmatmul.mubr.f32.gmra.mrb[0].mxu0 %v266
        %v869 = vpop.f32.mrb[0].mxu0
        %v870 = vadd.f32 %v308, %v869
        %v871 = vpop.f32.mrb[0].mxu0
        %872 = vmatprep.mubr.f32.mxu0 0.0
        %873 = vmatmul.mubr.f32.gmra.mrb[0].mxu0 %v267
        %v874 = vpop.f32.mrb[0].mxu0
        %v875 = vadd.f32 %v308, %v874
        %v876 = vpop.f32.mrb[0].mxu0
        %877 = vmatprep.mubr.f32.mxu0 0.0
        %878 = vmatmul.mubr.f32.gmra.mrb[0].mxu0 %v268
        %v879 = vpop.f32.mrb[0].mxu0
        %v880 = vadd.f32 %v308, %v879
        %v881 = vpop.f32.mrb[0].mxu0
        %882 = vmatprep.mubr.f32.mxu0 0.0
        %883 = vmatmul.mubr.f32.gmra.mrb[0].mxu0 %v269
        %v884 = vpop.f32.mrb[0].mxu0
        %v885 = vadd.f32 %v308, %v884
        %v886 = vpop.f32.mrb[0].mxu0
        %887 = vmatprep.mubr.f32.mxu0 0.0
        %888 = vmatmul.mubr.f32.gmra.mrb[0].mxu0 %v270
        %v889 = vpop.f32.mrb[0].mxu0
        %v890 = vadd.f32 %v308, %v889
        %v891 = vpop.f32.mrb[0].mxu0
        %892 = vmatprep.mubr.f32.mxu0 0.0
        %893 = vmatmul.mubr.f32.gmra.mrb[0].mxu0 %v271
        %v894 = vpop.f32.mrb[0].mxu0
        %v895 = vadd.f32 %v308, %v894
        %v896 = vpop.f32.mrb[0].mxu0
        %897 = vmatprep.mubr.f32.mxu0 0.0
        %898 = vmatmul.mubr.f32.gmra.mrb[0].mxu0 %v272
        %v899 = vpop.f32.mrb[0].mxu0
        %v900 = vadd.f32 %v308, %v899
        %v901 = vpop.f32.mrb[0].mxu0
        %902 = vmatprep.mubr.f32.mxu0 0.0
        %903 = vmatmul.mubr.f32.gmra.mrb[0].mxu0 %v273
        %v904 = vpop.f32.mrb[0].mxu0
        %v905 = vadd.f32 %v308, %v904
        %v906 = vpop.f32.mrb[0].mxu0
        %907 = vmatprep.mubr.f32.mxu0 0.0
        %908 = vmatmul.mubr.f32.gmra.mrb[0].mxu0 %v274
        %v909 = vpop.f32.mrb[0].mxu0
        %v910 = vadd.f32 %v308, %v909
        %v911 = vpop.f32.mrb[0].mxu0
        %912 = vmatprep.mubr.f32.mxu0 0.0
        %913 = vmatmul.mubr.f32.gmra.mrb[0].mxu0 %v275
        %v914 = vpop.f32.mrb[0].mxu0
        %v915 = vadd.f32 %v308, %v914
        %v916 = vpop.f32.mrb[0].mxu0
        %917 = vmatprep.mubr.f32.mxu0 0.0
        %918 = vmatmul.mubr.f32.gmra.mrb[0].mxu0 %v276
        %v919 = vpop.f32.mrb[0].mxu0
        %v920 = vadd.f32 %v308, %v919
        %v921 = vpop.f32.mrb[0].mxu0
        %922 = vmatprep.mubr.f32.mxu0 0.0
        %923 = vmatmul.mubr.f32.gmra.mrb[0].mxu0 %v277
        %v924 = vpop.f32.mrb[0].mxu0
        %v925 = vadd.f32 %v308, %v924
        %v926 = vpop.f32.mrb[0].mxu0
        %927 = vmatprep.mubr.f32.mxu0 0.0
        %928 = vmatmul.mubr.f32.gmra.mrb[0].mxu0 %v278
        %v929 = vpop.f32.mrb[0].mxu0
        %v930 = vadd.f32 %v308, %v929
        %v931 = vpop.f32.mrb[0].mxu0
        %932 = vmatprep.mubr.f32.mxu0 0.0
        %933 = vmatmul.mubr.f32.gmra.mrb[0].mxu0 %v279
        %v934 = vpop.f32.mrb[0].mxu0
        %v935 = vadd.f32 %v308, %v934
        %v936 = vpop.f32.mrb[0].mxu0
        %937 = vmatprep.mubr.f32.mxu0 0.0
        %938 = vmatmul.mubr.f32.gmra.mrb[0].mxu0 %v280
        %v939 = vpop.f32.mrb[0].mxu0
        %v940 = vadd.f32 %v308, %v939
        %v941 = vpop.f32.mrb[0].mxu0
        %942 = vmatprep.mubr.f32.mxu0 0.0
        %943 = vmatmul.mubr.f32.gmra.mrb[0].mxu0 %v281
        %v944 = vpop.f32.mrb[0].mxu0
        %v945 = vadd.f32 %v308, %v944
        %v946 = vpop.f32.mrb[0].mxu0
        %947 = vmatprep.mubr.f32.mxu0 0.0
        %948 = vmatmul.mubr.f32.gmra.mrb[0].mxu0 %v282
        %v949 = vpop.f32.mrb[0].mxu0
        %v950 = vadd.f32 %v308, %v949
        %v951 = vpop.f32.mrb[0].mxu0
        %952 = vmatprep.mubr.f32.mxu0 0.0
        %953 = vmatmul.mubr.f32.gmra.mrb[0].mxu0 %v283
        %v954 = vpop.f32.mrb[0].mxu0
        %v955 = vadd.f32 %v308, %v954
        %v956 = vpop.f32.mrb[0].mxu0
        %957 = vmatprep.mubr.f32.mxu0 0.0
        %958 = vmatmul.mubr.f32.gmra.mrb[0].mxu0 %v284
        %v959 = vpop.f32.mrb[0].mxu0
        %v960 = vadd.f32 %v308, %v959
        %v961 = vpop.f32.mrb[0].mxu0
        %962 = vmatprep.mubr.f32.mxu0 0.0
        %963 = vmatmul.mubr.f32.gmra.mrb[0].mxu0 %v285
        %v964 = vpop.f32.mrb[0].mxu0
        %v965 = vadd.f32 %v308, %v964
        %v966 = vpop.f32.mrb[0].mxu0
        %967 = vmatprep.mubr.f32.mxu0 0.0
        %968 = vmatmul.mubr.f32.gmra.mrb[0].mxu0 %v286
        %v969 = vpop.f32.mrb[0].mxu0
        %v970 = vadd.f32 %v308, %v969
        %v971 = vpop.f32.mrb[0].mxu0
        %972 = vdwg.mxu0
        %s973 = scalar_lea.vmem [#allocation2], 128
        %v974 = vld [vmem:[%s973] sm:$0xff]
        %v975 = vld [vmem:[%s973 + $0x8] sm:$0xff]
        %v976 = vld [vmem:[%s973 + $0x10] sm:$0xff]
        %v977 = vld [vmem:[%s973 + $0x18] sm:$0xff]
        %v978 = vld [vmem:[%s973 + $0x20] sm:$0xff]
        %v979 = vld [vmem:[%s973 + $0x28] sm:$0xff]
        %v980 = vld [vmem:[%s973 + $0x30] sm:$0xff]
        %v981 = vld [vmem:[%s973 + $0x38] sm:$0xff]
        %v982 = vld [vmem:[%s973 + $0x40] sm:$0xff]
        %v983 = vld [vmem:[%s973 + $0x48] sm:$0xff]
        %v984 = vld [vmem:[%s973 + $0x50] sm:$0xff]
        %v985 = vld [vmem:[%s973 + $0x58] sm:$0xff]
        %v986 = vld [vmem:[%s973 + $0x60] sm:$0xff]
        %v987 = vld [vmem:[%s973 + $0x68] sm:$0xff]
        %v988 = vld [vmem:[%s973 + $0x70] sm:$0xff]
        %v989 = vld [vmem:[%s973 + $0x78] sm:$0xff]
        %990 = vmatprep.subr.mxu0 0.0
        %991 = vmatpush1.msra.mxu0 %v974
        %992 = vmatprep.subr.mxu0 0.0
        %993 = vmatpush1.msra.mxu0 %v975
        %994 = vmatprep.subr.mxu0 0.0
        %995 = vmatpush1.msra.mxu0 %v976
        %996 = vmatprep.subr.mxu0 0.0
        %997 = vmatpush1.msra.mxu0 %v977
        %998 = vmatprep.subr.mxu0 0.0
        %999 = vmatpush1.msra.mxu0 %v978
        %1000 = vmatprep.subr.mxu0 0.0
        %1001 = vmatpush1.msra.mxu0 %v979
        %1002 = vmatprep.subr.mxu0 0.0
        %1003 = vmatpush1.msra.mxu0 %v980
        %1004 = vmatprep.subr.mxu0 0.0
        %1005 = vmatpush1.msra.mxu0 %v981
        %1006 = vmatprep.subr.mxu0 0.0
        %1007 = vmatpush1.msra.mxu0 %v982
        %1008 = vmatprep.subr.mxu0 0.0
        %1009 = vmatpush1.msra.mxu0 %v983
        %1010 = vmatprep.subr.mxu0 0.0
        %1011 = vmatpush1.msra.mxu0 %v984
        %1012 = vmatprep.subr.mxu0 0.0
        %1013 = vmatpush1.msra.mxu0 %v985
        %1014 = vmatprep.subr.mxu0 0.0
        %1015 = vmatpush1.msra.mxu0 %v986
        %1016 = vmatprep.subr.mxu0 0.0
        %1017 = vmatpush1.msra.mxu0 %v987
        %1018 = vmatprep.subr.mxu0 0.0
        %1019 = vmatpush1.msra.mxu0 %v988
        %1020 = vmatprep.subr.mxu0 0.0
        %1021 = vmatpush1.msra.mxu0 %v989
        %1022 = vmatprep.subr.mxu0 0.0
        %1023 = vmatpush1.msra.mxu0 0.0
        %1024 = vmatprep.subr.mxu0 0.0
        %1025 = vmatpush1.msra.mxu0 0.0
        %1026 = vmatprep.subr.mxu0 0.0
        %1027 = vmatpush1.msra.mxu0 0.0
        %1028 = vmatprep.subr.mxu0 0.0
        %1029 = vmatpush1.msra.mxu0 0.0
        %1030 = vmatprep.subr.mxu0 0.0
        %1031 = vmatpush1.msra.mxu0 0.0
        %1032 = vmatprep.subr.mxu0 0.0
        %1033 = vmatpush1.msra.mxu0 0.0
        %1034 = vmatprep.subr.mxu0 0.0
        %1035 = vmatpush1.msra.mxu0 0.0
        %1036 = vmatprep.subr.mxu0 0.0
        %1037 = vmatpush1.msra.mxu0 0.0
        %1038 = vmatprep.subr.mxu0 0.0
        %1039 = vmatpush1.msra.mxu0 0.0
        %1040 = vmatprep.subr.mxu0 0.0
        %1041 = vmatpush1.msra.mxu0 0.0
        %1042 = vmatprep.subr.mxu0 0.0
        %1043 = vmatpush1.msra.mxu0 0.0
        %1044 = vmatprep.subr.mxu0 0.0
        %1045 = vmatpush1.msra.mxu0 0.0
        %1046 = vmatprep.subr.mxu0 0.0
        %1047 = vmatpush1.msra.mxu0 0.0
        %1048 = vmatprep.subr.mxu0 0.0
        %1049 = vmatpush1.msra.mxu0 0.0
        %1050 = vmatprep.subr.mxu0 0.0
        %1051 = vmatpush1.msra.mxu0 0.0
        %1052 = vmatprep.subr.mxu0 0.0
        %1053 = vmatpush1.msra.mxu0 0.0
        %1054 = vmatprep.mubr.f32.mxu0 0.0
        %1055 = vmatmul.mubr.f32.gmra.mrb[0].mxu0 %v725
        %v1056 = vpop.f32.mrb[0].mxu0
        %v1057 = vadd.f32 0.0, %v1056
        %v1058 = vpop.f32.mrb[0].mxu0
        %1059 = vmatprep.mubr.f32.mxu0 0.0
        %1060 = vmatmul.mubr.f32.gmra.mrb[0].mxu0 %v730
        %v1061 = vpop.f32.mrb[0].mxu0
        %v1062 = vadd.f32 0.0, %v1061
        %v1063 = vpop.f32.mrb[0].mxu0
        %1064 = vmatprep.mubr.f32.mxu0 0.0
        %1065 = vmatmul.mubr.f32.gmra.mrb[0].mxu0 %v735
        %v1066 = vpop.f32.mrb[0].mxu0
        %v1067 = vadd.f32 0.0, %v1066
        %v1068 = vpop.f32.mrb[0].mxu0
        %1069 = vmatprep.mubr.f32.mxu0 0.0
        %1070 = vmatmul.mubr.f32.gmra.mrb[0].mxu0 %v740
        %v1071 = vpop.f32.mrb[0].mxu0
        %v1072 = vadd.f32 0.0, %v1071
        %v1073 = vpop.f32.mrb[0].mxu0
        %1074 = vmatprep.mubr.f32.mxu0 0.0
        %1075 = vmatmul.mubr.f32.gmra.mrb[0].mxu0 %v745
        %v1076 = vpop.f32.mrb[0].mxu0
        %v1077 = vadd.f32 0.0, %v1076
        %v1078 = vpop.f32.mrb[0].mxu0
        %1079 = vmatprep.mubr.f32.mxu0 0.0
        %1080 = vmatmul.mubr.f32.gmra.mrb[0].mxu0 %v750
        %v1081 = vpop.f32.mrb[0].mxu0
        %v1082 = vadd.f32 0.0, %v1081
        %v1083 = vpop.f32.mrb[0].mxu0
        %1084 = vmatprep.mubr.f32.mxu0 0.0
        %1085 = vmatmul.mubr.f32.gmra.mrb[0].mxu0 %v755
        %v1086 = vpop.f32.mrb[0].mxu0
        %v1087 = vadd.f32 0.0, %v1086
        %v1088 = vpop.f32.mrb[0].mxu0
        %1089 = vmatprep.mubr.f32.mxu0 0.0
        %1090 = vmatmul.mubr.f32.gmra.mrb[0].mxu0 %v760
        %v1091 = vpop.f32.mrb[0].mxu0
        %v1092 = vadd.f32 0.0, %v1091
        %v1093 = vpop.f32.mrb[0].mxu0
        %1094 = vmatprep.mubr.f32.mxu0 0.0
        %1095 = vmatmul.mubr.f32.gmra.mrb[0].mxu0 %v765
        %v1096 = vpop.f32.mrb[0].mxu0
        %v1097 = vadd.f32 0.0, %v1096
        %v1098 = vpop.f32.mrb[0].mxu0
        %1099 = vmatprep.mubr.f32.mxu0 0.0
        %1100 = vmatmul.mubr.f32.gmra.mrb[0].mxu0 %v770
        %v1101 = vpop.f32.mrb[0].mxu0
        %v1102 = vadd.f32 0.0, %v1101
        %v1103 = vpop.f32.mrb[0].mxu0
        %1104 = vmatprep.mubr.f32.mxu0 0.0
        %1105 = vmatmul.mubr.f32.gmra.mrb[0].mxu0 %v775
        %v1106 = vpop.f32.mrb[0].mxu0
        %v1107 = vadd.f32 0.0, %v1106
        %v1108 = vpop.f32.mrb[0].mxu0
        %1109 = vmatprep.mubr.f32.mxu0 0.0
        %1110 = vmatmul.mubr.f32.gmra.mrb[0].mxu0 %v780
        %v1111 = vpop.f32.mrb[0].mxu0
        %v1112 = vadd.f32 0.0, %v1111
        %v1113 = vpop.f32.mrb[0].mxu0
        %1114 = vmatprep.mubr.f32.mxu0 0.0
        %1115 = vmatmul.mubr.f32.gmra.mrb[0].mxu0 %v785
        %v1116 = vpop.f32.mrb[0].mxu0
        %v1117 = vadd.f32 0.0, %v1116
        %v1118 = vpop.f32.mrb[0].mxu0
        %1119 = vmatprep.mubr.f32.mxu0 0.0
        %1120 = vmatmul.mubr.f32.gmra.mrb[0].mxu0 %v790
        %v1121 = vpop.f32.mrb[0].mxu0
        %v1122 = vadd.f32 0.0, %v1121
        %v1123 = vpop.f32.mrb[0].mxu0
        %1124 = vmatprep.mubr.f32.mxu0 0.0
        %1125 = vmatmul.mubr.f32.gmra.mrb[0].mxu0 %v795
        %v1126 = vpop.f32.mrb[0].mxu0
        %v1127 = vadd.f32 0.0, %v1126
        %v1128 = vpop.f32.mrb[0].mxu0
        %1129 = vmatprep.mubr.f32.mxu0 0.0
        %1130 = vmatmul.mubr.f32.gmra.mrb[0].mxu0 %v800
        %v1131 = vpop.f32.mrb[0].mxu0
        %v1132 = vadd.f32 0.0, %v1131
        %v1133 = vpop.f32.mrb[0].mxu0
        %1134 = vmatprep.mubr.f32.mxu0 0.0
        %1135 = vmatmul.mubr.f32.gmra.mrb[0].mxu0 %v805
        %v1136 = vpop.f32.mrb[0].mxu0
        %v1137 = vadd.f32 0.0, %v1136
        %v1138 = vpop.f32.mrb[0].mxu0
        %1139 = vmatprep.mubr.f32.mxu0 0.0
        %1140 = vmatmul.mubr.f32.gmra.mrb[0].mxu0 %v810
        %v1141 = vpop.f32.mrb[0].mxu0
        %v1142 = vadd.f32 0.0, %v1141
        %v1143 = vpop.f32.mrb[0].mxu0
        %1144 = vmatprep.mubr.f32.mxu0 0.0
        %1145 = vmatmul.mubr.f32.gmra.mrb[0].mxu0 %v815
        %v1146 = vpop.f32.mrb[0].mxu0
        %v1147 = vadd.f32 0.0, %v1146
        %v1148 = vpop.f32.mrb[0].mxu0
        %1149 = vmatprep.mubr.f32.mxu0 0.0
        %1150 = vmatmul.mubr.f32.gmra.mrb[0].mxu0 %v820
        %v1151 = vpop.f32.mrb[0].mxu0
        %v1152 = vadd.f32 0.0, %v1151
        %v1153 = vpop.f32.mrb[0].mxu0
        %1154 = vmatprep.mubr.f32.mxu0 0.0
        %1155 = vmatmul.mubr.f32.gmra.mrb[0].mxu0 %v825
        %v1156 = vpop.f32.mrb[0].mxu0
        %v1157 = vadd.f32 0.0, %v1156
        %v1158 = vpop.f32.mrb[0].mxu0
        %1159 = vmatprep.mubr.f32.mxu0 0.0
        %1160 = vmatmul.mubr.f32.gmra.mrb[0].mxu0 %v830
        %v1161 = vpop.f32.mrb[0].mxu0
        %v1162 = vadd.f32 0.0, %v1161
        %v1163 = vpop.f32.mrb[0].mxu0
        %1164 = vmatprep.mubr.f32.mxu0 0.0
        %1165 = vmatmul.mubr.f32.gmra.mrb[0].mxu0 %v835
        %v1166 = vpop.f32.mrb[0].mxu0
        %v1167 = vadd.f32 0.0, %v1166
        %v1168 = vpop.f32.mrb[0].mxu0
        %1169 = vmatprep.mubr.f32.mxu0 0.0
        %1170 = vmatmul.mubr.f32.gmra.mrb[0].mxu0 %v840
        %v1171 = vpop.f32.mrb[0].mxu0
        %v1172 = vadd.f32 0.0, %v1171
        %v1173 = vpop.f32.mrb[0].mxu0
        %1174 = vmatprep.mubr.f32.mxu0 0.0
        %1175 = vmatmul.mubr.f32.gmra.mrb[0].mxu0 %v845
        %v1176 = vpop.f32.mrb[0].mxu0
        %v1177 = vadd.f32 0.0, %v1176
        %v1178 = vpop.f32.mrb[0].mxu0
        %1179 = vmatprep.mubr.f32.mxu0 0.0
        %1180 = vmatmul.mubr.f32.gmra.mrb[0].mxu0 %v850
        %v1181 = vpop.f32.mrb[0].mxu0
        %v1182 = vadd.f32 0.0, %v1181
        %v1183 = vpop.f32.mrb[0].mxu0
        %1184 = vmatprep.mubr.f32.mxu0 0.0
        %1185 = vmatmul.mubr.f32.gmra.mrb[0].mxu0 %v855
        %v1186 = vpop.f32.mrb[0].mxu0
        %v1187 = vadd.f32 0.0, %v1186
        %v1188 = vpop.f32.mrb[0].mxu0
        %1189 = vmatprep.mubr.f32.mxu0 0.0
        %1190 = vmatmul.mubr.f32.gmra.mrb[0].mxu0 %v860
        %v1191 = vpop.f32.mrb[0].mxu0
        %v1192 = vadd.f32 0.0, %v1191
        %v1193 = vpop.f32.mrb[0].mxu0
        %1194 = vmatprep.mubr.f32.mxu0 0.0
        %1195 = vmatmul.mubr.f32.gmra.mrb[0].mxu0 %v865
        %v1196 = vpop.f32.mrb[0].mxu0
        %v1197 = vadd.f32 0.0, %v1196
        %v1198 = vpop.f32.mrb[0].mxu0
        %1199 = vmatprep.mubr.f32.mxu0 0.0
        %1200 = vmatmul.mubr.f32.gmra.mrb[0].mxu0 %v870
        %v1201 = vpop.f32.mrb[0].mxu0
        %v1202 = vadd.f32 0.0, %v1201
        %v1203 = vpop.f32.mrb[0].mxu0
        %1204 = vmatprep.mubr.f32.mxu0 0.0
        %1205 = vmatmul.mubr.f32.gmra.mrb[0].mxu0 %v875
        %v1206 = vpop.f32.mrb[0].mxu0
        %v1207 = vadd.f32 0.0, %v1206
        %v1208 = vpop.f32.mrb[0].mxu0
        %1209 = vmatprep.mubr.f32.mxu0 0.0
        %1210 = vmatmul.mubr.f32.gmra.mrb[0].mxu0 %v880
        %v1211 = vpop.f32.mrb[0].mxu0
        %v1212 = vadd.f32 0.0, %v1211
        %v1213 = vpop.f32.mrb[0].mxu0
        %1214 = vmatprep.mubr.f32.mxu0 0.0
        %1215 = vmatmul.mubr.f32.gmra.mrb[0].mxu0 %v885
        %v1216 = vpop.f32.mrb[0].mxu0
        %v1217 = vadd.f32 0.0, %v1216
        %v1218 = vpop.f32.mrb[0].mxu0
        %1219 = vmatprep.mubr.f32.mxu0 0.0
        %1220 = vmatmul.mubr.f32.gmra.mrb[0].mxu0 %v890
        %v1221 = vpop.f32.mrb[0].mxu0
        %v1222 = vadd.f32 0.0, %v1221
        %v1223 = vpop.f32.mrb[0].mxu0
        %1224 = vmatprep.mubr.f32.mxu0 0.0
        %1225 = vmatmul.mubr.f32.gmra.mrb[0].mxu0 %v895
        %v1226 = vpop.f32.mrb[0].mxu0
        %v1227 = vadd.f32 0.0, %v1226
        %v1228 = vpop.f32.mrb[0].mxu0
        %1229 = vmatprep.mubr.f32.mxu0 0.0
        %1230 = vmatmul.mubr.f32.gmra.mrb[0].mxu0 %v900
        %v1231 = vpop.f32.mrb[0].mxu0
        %v1232 = vadd.f32 0.0, %v1231
        %v1233 = vpop.f32.mrb[0].mxu0
        %1234 = vmatprep.mubr.f32.mxu0 0.0
        %1235 = vmatmul.mubr.f32.gmra.mrb[0].mxu0 %v905
        %v1236 = vpop.f32.mrb[0].mxu0
        %v1237 = vadd.f32 0.0, %v1236
        %v1238 = vpop.f32.mrb[0].mxu0
        %1239 = vmatprep.mubr.f32.mxu0 0.0
        %1240 = vmatmul.mubr.f32.gmra.mrb[0].mxu0 %v910
        %v1241 = vpop.f32.mrb[0].mxu0
        %v1242 = vadd.f32 0.0, %v1241
        %v1243 = vpop.f32.mrb[0].mxu0
        %1244 = vmatprep.mubr.f32.mxu0 0.0
        %1245 = vmatmul.mubr.f32.gmra.mrb[0].mxu0 %v915
        %v1246 = vpop.f32.mrb[0].mxu0
        %v1247 = vadd.f32 0.0, %v1246
        %v1248 = vpop.f32.mrb[0].mxu0
        %1249 = vmatprep.mubr.f32.mxu0 0.0
        %1250 = vmatmul.mubr.f32.gmra.mrb[0].mxu0 %v920
        %v1251 = vpop.f32.mrb[0].mxu0
        %v1252 = vadd.f32 0.0, %v1251
        %v1253 = vpop.f32.mrb[0].mxu0
        %1254 = vmatprep.mubr.f32.mxu0 0.0
        %1255 = vmatmul.mubr.f32.gmra.mrb[0].mxu0 %v925
        %v1256 = vpop.f32.mrb[0].mxu0
        %v1257 = vadd.f32 0.0, %v1256
        %v1258 = vpop.f32.mrb[0].mxu0
        %1259 = vmatprep.mubr.f32.mxu0 0.0
        %1260 = vmatmul.mubr.f32.gmra.mrb[0].mxu0 %v930
        %v1261 = vpop.f32.mrb[0].mxu0
        %v1262 = vadd.f32 0.0, %v1261
        %v1263 = vpop.f32.mrb[0].mxu0
        %1264 = vmatprep.mubr.f32.mxu0 0.0
        %1265 = vmatmul.mubr.f32.gmra.mrb[0].mxu0 %v935
        %v1266 = vpop.f32.mrb[0].mxu0
        %v1267 = vadd.f32 0.0, %v1266
        %v1268 = vpop.f32.mrb[0].mxu0
        %1269 = vmatprep.mubr.f32.mxu0 0.0
        %1270 = vmatmul.mubr.f32.gmra.mrb[0].mxu0 %v940
        %v1271 = vpop.f32.mrb[0].mxu0
        %v1272 = vadd.f32 0.0, %v1271
        %v1273 = vpop.f32.mrb[0].mxu0
        %1274 = vmatprep.mubr.f32.mxu0 0.0
        %1275 = vmatmul.mubr.f32.gmra.mrb[0].mxu0 %v945
        %v1276 = vpop.f32.mrb[0].mxu0
        %v1277 = vadd.f32 0.0, %v1276
        %v1278 = vpop.f32.mrb[0].mxu0
        %1279 = vmatprep.mubr.f32.mxu0 0.0
        %1280 = vmatmul.mubr.f32.gmra.mrb[0].mxu0 %v950
        %v1281 = vpop.f32.mrb[0].mxu0
        %v1282 = vadd.f32 0.0, %v1281
        %v1283 = vpop.f32.mrb[0].mxu0
        %1284 = vmatprep.mubr.f32.mxu0 0.0
        %1285 = vmatmul.mubr.f32.gmra.mrb[0].mxu0 %v955
        %v1286 = vpop.f32.mrb[0].mxu0
        %v1287 = vadd.f32 0.0, %v1286
        %v1288 = vpop.f32.mrb[0].mxu0
        %1289 = vmatprep.mubr.f32.mxu0 0.0
        %1290 = vmatmul.mubr.f32.gmra.mrb[0].mxu0 %v960
        %v1291 = vpop.f32.mrb[0].mxu0
        %v1292 = vadd.f32 0.0, %v1291
        %v1293 = vpop.f32.mrb[0].mxu0
        %1294 = vmatprep.mubr.f32.mxu0 0.0
        %1295 = vmatmul.mubr.f32.gmra.mrb[0].mxu0 %v965
        %v1296 = vpop.f32.mrb[0].mxu0
        %v1297 = vadd.f32 0.0, %v1296
        %v1298 = vpop.f32.mrb[0].mxu0
        %1299 = vmatprep.mubr.f32.mxu0 0.0
        %1300 = vmatmul.mubr.f32.gmra.mrb[0].mxu0 %v970
        %v1301 = vpop.f32.mrb[0].mxu0
        %v1302 = vadd.f32 0.0, %v1301
        %v1303 = vpop.f32.mrb[0].mxu0
        %1304 = vdwg.mxu0
        %1305 = vmatprep.subr.mxu0 0.0
        %1306 = vmatpush1.msra.mxu0 %v625
        %1307 = vmatprep.subr.mxu0 0.0
        %1308 = vmatpush1.msra.mxu0 %v626
        %1309 = vmatprep.subr.mxu0 0.0
        %1310 = vmatpush1.msra.mxu0 %v627
        %1311 = vmatprep.subr.mxu0 0.0
        %1312 = vmatpush1.msra.mxu0 %v628
        %1313 = vmatprep.subr.mxu0 0.0
        %1314 = vmatpush1.msra.mxu0 %v629
        %1315 = vmatprep.subr.mxu0 0.0
        %1316 = vmatpush1.msra.mxu0 %v630
        %1317 = vmatprep.subr.mxu0 0.0
        %1318 = vmatpush1.msra.mxu0 %v631
        %1319 = vmatprep.subr.mxu0 0.0
        %1320 = vmatpush1.msra.mxu0 %v632
        %1321 = vmatprep.subr.mxu0 0.0
        %1322 = vmatpush1.msra.mxu0 %v633
        %1323 = vmatprep.subr.mxu0 0.0
        %1324 = vmatpush1.msra.mxu0 %v634
        %1325 = vmatprep.subr.mxu0 0.0
        %1326 = vmatpush1.msra.mxu0 %v635
        %1327 = vmatprep.subr.mxu0 0.0
        %1328 = vmatpush1.msra.mxu0 %v636
        %1329 = vmatprep.subr.mxu0 0.0
        %1330 = vmatpush1.msra.mxu0 %v637
        %1331 = vmatprep.subr.mxu0 0.0
        %1332 = vmatpush1.msra.mxu0 %v638
        %1333 = vmatprep.subr.mxu0 0.0
        %1334 = vmatpush1.msra.mxu0 %v639
        %1335 = vmatprep.subr.mxu0 0.0
        %1336 = vmatpush1.msra.mxu0 %v640
        %1337 = vmatprep.subr.mxu0 0.0
        %1338 = vmatpush1.msra.mxu0 0.0
        %1339 = vmatprep.subr.mxu0 0.0
        %1340 = vmatpush1.msra.mxu0 0.0
        %1341 = vmatprep.subr.mxu0 0.0
        %1342 = vmatpush1.msra.mxu0 0.0
        %1343 = vmatprep.subr.mxu0 0.0
        %1344 = vmatpush1.msra.mxu0 0.0
        %1345 = vmatprep.subr.mxu0 0.0
        %1346 = vmatpush1.msra.mxu0 0.0
        %1347 = vmatprep.subr.mxu0 0.0
        %1348 = vmatpush1.msra.mxu0 0.0
        %1349 = vmatprep.subr.mxu0 0.0
        %1350 = vmatpush1.msra.mxu0 0.0
        %1351 = vmatprep.subr.mxu0 0.0
        %1352 = vmatpush1.msra.mxu0 0.0
        %1353 = vmatprep.subr.mxu0 0.0
        %1354 = vmatpush1.msra.mxu0 0.0
        %1355 = vmatprep.subr.mxu0 0.0
        %1356 = vmatpush1.msra.mxu0 0.0
        %1357 = vmatprep.subr.mxu0 0.0
        %1358 = vmatpush1.msra.mxu0 0.0
        %1359 = vmatprep.subr.mxu0 0.0
        %1360 = vmatpush1.msra.mxu0 0.0
        %1361 = vmatprep.subr.mxu0 0.0
        %1362 = vmatpush1.msra.mxu0 0.0
        %1363 = vmatprep.subr.mxu0 0.0
        %1364 = vmatpush1.msra.mxu0 0.0
        %1365 = vmatprep.subr.mxu0 0.0
        %1366 = vmatpush1.msra.mxu0 0.0
        %1367 = vmatprep.subr.mxu0 0.0
        %1368 = vmatpush1.msra.mxu0 0.0
        %1369 = vmatprep.mubr.f32.mxu0 0.0
        %1370 = vmatmul.mubr.f32.gmra.mrb[0].mxu0 %v377
        %v1371 = vpop.f32.mrb[0].mxu0
        %v1372 = vadd.f32 %v1057, %v1371
        %v1373 = vpop.f32.mrb[0].mxu0
        %1374 = vmatprep.mubr.f32.mxu0 0.0
        %1375 = vmatmul.mubr.f32.gmra.mrb[0].mxu0 %v382
        %v1376 = vpop.f32.mrb[0].mxu0
        %v1377 = vadd.f32 %v1062, %v1376
        %v1378 = vpop.f32.mrb[0].mxu0
        %1379 = vmatprep.mubr.f32.mxu0 0.0
        %1380 = vmatmul.mubr.f32.gmra.mrb[0].mxu0 %v387
        %v1381 = vpop.f32.mrb[0].mxu0
        %v1382 = vadd.f32 %v1067, %v1381
        %v1383 = vpop.f32.mrb[0].mxu0
        %1384 = vmatprep.mubr.f32.mxu0 0.0
        %1385 = vmatmul.mubr.f32.gmra.mrb[0].mxu0 %v392
        %v1386 = vpop.f32.mrb[0].mxu0
        %v1387 = vadd.f32 %v1072, %v1386
        %v1388 = vpop.f32.mrb[0].mxu0
        %1389 = vmatprep.mubr.f32.mxu0 0.0
        %1390 = vmatmul.mubr.f32.gmra.mrb[0].mxu0 %v397
        %v1391 = vpop.f32.mrb[0].mxu0
        %v1392 = vadd.f32 %v1077, %v1391
        %v1393 = vpop.f32.mrb[0].mxu0
        %1394 = vmatprep.mubr.f32.mxu0 0.0
        %1395 = vmatmul.mubr.f32.gmra.mrb[0].mxu0 %v402
        %v1396 = vpop.f32.mrb[0].mxu0
        %v1397 = vadd.f32 %v1082, %v1396
        %v1398 = vpop.f32.mrb[0].mxu0
        %1399 = vmatprep.mubr.f32.mxu0 0.0
        %1400 = vmatmul.mubr.f32.gmra.mrb[0].mxu0 %v407
        %v1401 = vpop.f32.mrb[0].mxu0
        %v1402 = vadd.f32 %v1087, %v1401
        %v1403 = vpop.f32.mrb[0].mxu0
        %1404 = vmatprep.mubr.f32.mxu0 0.0
        %1405 = vmatmul.mubr.f32.gmra.mrb[0].mxu0 %v412
        %v1406 = vpop.f32.mrb[0].mxu0
        %v1407 = vadd.f32 %v1092, %v1406
        %v1408 = vpop.f32.mrb[0].mxu0
        %1409 = vmatprep.mubr.f32.mxu0 0.0
        %1410 = vmatmul.mubr.f32.gmra.mrb[0].mxu0 %v417
        %v1411 = vpop.f32.mrb[0].mxu0
        %v1412 = vadd.f32 %v1097, %v1411
        %v1413 = vpop.f32.mrb[0].mxu0
        %1414 = vmatprep.mubr.f32.mxu0 0.0
        %1415 = vmatmul.mubr.f32.gmra.mrb[0].mxu0 %v422
        %v1416 = vpop.f32.mrb[0].mxu0
        %v1417 = vadd.f32 %v1102, %v1416
        %v1418 = vpop.f32.mrb[0].mxu0
        %1419 = vmatprep.mubr.f32.mxu0 0.0
        %1420 = vmatmul.mubr.f32.gmra.mrb[0].mxu0 %v427
        %v1421 = vpop.f32.mrb[0].mxu0
        %v1422 = vadd.f32 %v1107, %v1421
        %v1423 = vpop.f32.mrb[0].mxu0
        %1424 = vmatprep.mubr.f32.mxu0 0.0
        %1425 = vmatmul.mubr.f32.gmra.mrb[0].mxu0 %v432
        %v1426 = vpop.f32.mrb[0].mxu0
        %v1427 = vadd.f32 %v1112, %v1426
        %v1428 = vpop.f32.mrb[0].mxu0
        %1429 = vmatprep.mubr.f32.mxu0 0.0
        %1430 = vmatmul.mubr.f32.gmra.mrb[0].mxu0 %v437
        %v1431 = vpop.f32.mrb[0].mxu0
        %v1432 = vadd.f32 %v1117, %v1431
        %v1433 = vpop.f32.mrb[0].mxu0
        %1434 = vmatprep.mubr.f32.mxu0 0.0
        %1435 = vmatmul.mubr.f32.gmra.mrb[0].mxu0 %v442
        %v1436 = vpop.f32.mrb[0].mxu0
        %v1437 = vadd.f32 %v1122, %v1436
        %v1438 = vpop.f32.mrb[0].mxu0
        %1439 = vmatprep.mubr.f32.mxu0 0.0
        %1440 = vmatmul.mubr.f32.gmra.mrb[0].mxu0 %v447
        %v1441 = vpop.f32.mrb[0].mxu0
        %v1442 = vadd.f32 %v1127, %v1441
        %v1443 = vpop.f32.mrb[0].mxu0
        %1444 = vmatprep.mubr.f32.mxu0 0.0
        %1445 = vmatmul.mubr.f32.gmra.mrb[0].mxu0 %v452
        %v1446 = vpop.f32.mrb[0].mxu0
        %v1447 = vadd.f32 %v1132, %v1446
        %v1448 = vpop.f32.mrb[0].mxu0
        %1449 = vmatprep.mubr.f32.mxu0 0.0
        %1450 = vmatmul.mubr.f32.gmra.mrb[0].mxu0 %v457
        %v1451 = vpop.f32.mrb[0].mxu0
        %v1452 = vadd.f32 %v1137, %v1451
        %v1453 = vpop.f32.mrb[0].mxu0
        %1454 = vmatprep.mubr.f32.mxu0 0.0
        %1455 = vmatmul.mubr.f32.gmra.mrb[0].mxu0 %v462
        %v1456 = vpop.f32.mrb[0].mxu0
        %v1457 = vadd.f32 %v1142, %v1456
        %v1458 = vpop.f32.mrb[0].mxu0
        %1459 = vmatprep.mubr.f32.mxu0 0.0
        %1460 = vmatmul.mubr.f32.gmra.mrb[0].mxu0 %v467
        %v1461 = vpop.f32.mrb[0].mxu0
        %v1462 = vadd.f32 %v1147, %v1461
        %v1463 = vpop.f32.mrb[0].mxu0
        %1464 = vmatprep.mubr.f32.mxu0 0.0
        %1465 = vmatmul.mubr.f32.gmra.mrb[0].mxu0 %v472
        %v1466 = vpop.f32.mrb[0].mxu0
        %v1467 = vadd.f32 %v1152, %v1466
        %v1468 = vpop.f32.mrb[0].mxu0
        %1469 = vmatprep.mubr.f32.mxu0 0.0
        %1470 = vmatmul.mubr.f32.gmra.mrb[0].mxu0 %v477
        %v1471 = vpop.f32.mrb[0].mxu0
        %v1472 = vadd.f32 %v1157, %v1471
        %v1473 = vpop.f32.mrb[0].mxu0
        %1474 = vmatprep.mubr.f32.mxu0 0.0
        %1475 = vmatmul.mubr.f32.gmra.mrb[0].mxu0 %v482
        %v1476 = vpop.f32.mrb[0].mxu0
        %v1477 = vadd.f32 %v1162, %v1476
        %v1478 = vpop.f32.mrb[0].mxu0
        %1479 = vmatprep.mubr.f32.mxu0 0.0
        %1480 = vmatmul.mubr.f32.gmra.mrb[0].mxu0 %v487
        %v1481 = vpop.f32.mrb[0].mxu0
        %v1482 = vadd.f32 %v1167, %v1481
        %v1483 = vpop.f32.mrb[0].mxu0
        %1484 = vmatprep.mubr.f32.mxu0 0.0
        %1485 = vmatmul.mubr.f32.gmra.mrb[0].mxu0 %v492
        %v1486 = vpop.f32.mrb[0].mxu0
        %v1487 = vadd.f32 %v1172, %v1486
        %v1488 = vpop.f32.mrb[0].mxu0
        %1489 = vmatprep.mubr.f32.mxu0 0.0
        %1490 = vmatmul.mubr.f32.gmra.mrb[0].mxu0 %v497
        %v1491 = vpop.f32.mrb[0].mxu0
        %v1492 = vadd.f32 %v1177, %v1491
        %v1493 = vpop.f32.mrb[0].mxu0
        %1494 = vmatprep.mubr.f32.mxu0 0.0
        %1495 = vmatmul.mubr.f32.gmra.mrb[0].mxu0 %v502
        %v1496 = vpop.f32.mrb[0].mxu0
        %v1497 = vadd.f32 %v1182, %v1496
        %v1498 = vpop.f32.mrb[0].mxu0
        %1499 = vmatprep.mubr.f32.mxu0 0.0
        %1500 = vmatmul.mubr.f32.gmra.mrb[0].mxu0 %v507
        %v1501 = vpop.f32.mrb[0].mxu0
        %v1502 = vadd.f32 %v1187, %v1501
        %v1503 = vpop.f32.mrb[0].mxu0
        %1504 = vmatprep.mubr.f32.mxu0 0.0
        %1505 = vmatmul.mubr.f32.gmra.mrb[0].mxu0 %v512
        %v1506 = vpop.f32.mrb[0].mxu0
        %v1507 = vadd.f32 %v1192, %v1506
        %v1508 = vpop.f32.mrb[0].mxu0
        %1509 = vmatprep.mubr.f32.mxu0 0.0
        %1510 = vmatmul.mubr.f32.gmra.mrb[0].mxu0 %v517
        %v1511 = vpop.f32.mrb[0].mxu0
        %v1512 = vadd.f32 %v1197, %v1511
        %v1513 = vpop.f32.mrb[0].mxu0
        %1514 = vmatprep.mubr.f32.mxu0 0.0
        %1515 = vmatmul.mubr.f32.gmra.mrb[0].mxu0 %v522
        %v1516 = vpop.f32.mrb[0].mxu0
        %v1517 = vadd.f32 %v1202, %v1516
        %v1518 = vpop.f32.mrb[0].mxu0
        %1519 = vmatprep.mubr.f32.mxu0 0.0
        %1520 = vmatmul.mubr.f32.gmra.mrb[0].mxu0 %v527
        %v1521 = vpop.f32.mrb[0].mxu0
        %v1522 = vadd.f32 %v1207, %v1521
        %v1523 = vpop.f32.mrb[0].mxu0
        %1524 = vmatprep.mubr.f32.mxu0 0.0
        %1525 = vmatmul.mubr.f32.gmra.mrb[0].mxu0 %v532
        %v1526 = vpop.f32.mrb[0].mxu0
        %v1527 = vadd.f32 %v1212, %v1526
        %v1528 = vpop.f32.mrb[0].mxu0
        %1529 = vmatprep.mubr.f32.mxu0 0.0
        %1530 = vmatmul.mubr.f32.gmra.mrb[0].mxu0 %v537
        %v1531 = vpop.f32.mrb[0].mxu0
        %v1532 = vadd.f32 %v1217, %v1531
        %v1533 = vpop.f32.mrb[0].mxu0
        %1534 = vmatprep.mubr.f32.mxu0 0.0
        %1535 = vmatmul.mubr.f32.gmra.mrb[0].mxu0 %v542
        %v1536 = vpop.f32.mrb[0].mxu0
        %v1537 = vadd.f32 %v1222, %v1536
        %v1538 = vpop.f32.mrb[0].mxu0
        %1539 = vmatprep.mubr.f32.mxu0 0.0
        %1540 = vmatmul.mubr.f32.gmra.mrb[0].mxu0 %v547
        %v1541 = vpop.f32.mrb[0].mxu0
        %v1542 = vadd.f32 %v1227, %v1541
        %v1543 = vpop.f32.mrb[0].mxu0
        %1544 = vmatprep.mubr.f32.mxu0 0.0
        %1545 = vmatmul.mubr.f32.gmra.mrb[0].mxu0 %v552
        %v1546 = vpop.f32.mrb[0].mxu0
        %v1547 = vadd.f32 %v1232, %v1546
        %v1548 = vpop.f32.mrb[0].mxu0
        %1549 = vmatprep.mubr.f32.mxu0 0.0
        %1550 = vmatmul.mubr.f32.gmra.mrb[0].mxu0 %v557
        %v1551 = vpop.f32.mrb[0].mxu0
        %v1552 = vadd.f32 %v1237, %v1551
        %v1553 = vpop.f32.mrb[0].mxu0
        %1554 = vmatprep.mubr.f32.mxu0 0.0
        %1555 = vmatmul.mubr.f32.gmra.mrb[0].mxu0 %v562
        %v1556 = vpop.f32.mrb[0].mxu0
        %v1557 = vadd.f32 %v1242, %v1556
        %v1558 = vpop.f32.mrb[0].mxu0
        %1559 = vmatprep.mubr.f32.mxu0 0.0
        %1560 = vmatmul.mubr.f32.gmra.mrb[0].mxu0 %v567
        %v1561 = vpop.f32.mrb[0].mxu0
        %v1562 = vadd.f32 %v1247, %v1561
        %v1563 = vpop.f32.mrb[0].mxu0
        %1564 = vmatprep.mubr.f32.mxu0 0.0
        %1565 = vmatmul.mubr.f32.gmra.mrb[0].mxu0 %v572
        %v1566 = vpop.f32.mrb[0].mxu0
        %v1567 = vadd.f32 %v1252, %v1566
        %v1568 = vpop.f32.mrb[0].mxu0
        %1569 = vmatprep.mubr.f32.mxu0 0.0
        %1570 = vmatmul.mubr.f32.gmra.mrb[0].mxu0 %v577
        %v1571 = vpop.f32.mrb[0].mxu0
        %v1572 = vadd.f32 %v1257, %v1571
        %v1573 = vpop.f32.mrb[0].mxu0
        %1574 = vmatprep.mubr.f32.mxu0 0.0
        %1575 = vmatmul.mubr.f32.gmra.mrb[0].mxu0 %v582
        %v1576 = vpop.f32.mrb[0].mxu0
        %v1577 = vadd.f32 %v1262, %v1576
        %v1578 = vpop.f32.mrb[0].mxu0
        %1579 = vmatprep.mubr.f32.mxu0 0.0
        %1580 = vmatmul.mubr.f32.gmra.mrb[0].mxu0 %v587
        %v1581 = vpop.f32.mrb[0].mxu0
        %v1582 = vadd.f32 %v1267, %v1581
        %v1583 = vpop.f32.mrb[0].mxu0
        %1584 = vmatprep.mubr.f32.mxu0 0.0
        %1585 = vmatmul.mubr.f32.gmra.mrb[0].mxu0 %v592
        %v1586 = vpop.f32.mrb[0].mxu0
        %v1587 = vadd.f32 %v1272, %v1586
        %v1588 = vpop.f32.mrb[0].mxu0
        %1589 = vmatprep.mubr.f32.mxu0 0.0
        %1590 = vmatmul.mubr.f32.gmra.mrb[0].mxu0 %v597
        %v1591 = vpop.f32.mrb[0].mxu0
        %v1592 = vadd.f32 %v1277, %v1591
        %v1593 = vpop.f32.mrb[0].mxu0
        %1594 = vmatprep.mubr.f32.mxu0 0.0
        %1595 = vmatmul.mubr.f32.gmra.mrb[0].mxu0 %v602
        %v1596 = vpop.f32.mrb[0].mxu0
        %v1597 = vadd.f32 %v1282, %v1596
        %v1598 = vpop.f32.mrb[0].mxu0
        %1599 = vmatprep.mubr.f32.mxu0 0.0
        %1600 = vmatmul.mubr.f32.gmra.mrb[0].mxu0 %v607
        %v1601 = vpop.f32.mrb[0].mxu0
        %v1602 = vadd.f32 %v1287, %v1601
        %v1603 = vpop.f32.mrb[0].mxu0
        %1604 = vmatprep.mubr.f32.mxu0 0.0
        %1605 = vmatmul.mubr.f32.gmra.mrb[0].mxu0 %v612
        %v1606 = vpop.f32.mrb[0].mxu0
        %v1607 = vadd.f32 %v1292, %v1606
        %v1608 = vpop.f32.mrb[0].mxu0
        %1609 = vmatprep.mubr.f32.mxu0 0.0
        %1610 = vmatmul.mubr.f32.gmra.mrb[0].mxu0 %v617
        %v1611 = vpop.f32.mrb[0].mxu0
        %v1612 = vadd.f32 %v1297, %v1611
        %v1613 = vpop.f32.mrb[0].mxu0
        %1614 = vmatprep.mubr.f32.mxu0 0.0
        %1615 = vmatmul.mubr.f32.gmra.mrb[0].mxu0 %v622
        %v1616 = vpop.f32.mrb[0].mxu0
        %v1617 = vadd.f32 %v1302, %v1616
        %v1618 = vpop.f32.mrb[0].mxu0
        %1619 = vdwg.mxu0
        %s1620 = scalar_lea.vmem %s1, 256
        %v1621 = vld [vmem:[%s1620] sm:$0xff]
        %v1622 = vld [vmem:[%s1620 + $0x8] sm:$0xff]
        %v1623 = vld [vmem:[%s1620 + $0x10] sm:$0xff]
        %v1624 = vld [vmem:[%s1620 + $0x18] sm:$0xff]
        %v1625 = vld [vmem:[%s1620 + $0x20] sm:$0xff]
        %v1626 = vld [vmem:[%s1620 + $0x28] sm:$0xff]
        %v1627 = vld [vmem:[%s1620 + $0x30] sm:$0xff]
        %v1628 = vld [vmem:[%s1620 + $0x38] sm:$0xff]
        %v1629 = vld [vmem:[%s1620 + $0x40] sm:$0xff]
        %v1630 = vld [vmem:[%s1620 + $0x48] sm:$0xff]
        %v1631 = vld [vmem:[%s1620 + $0x50] sm:$0xff]
        %v1632 = vld [vmem:[%s1620 + $0x58] sm:$0xff]
        %v1633 = vld [vmem:[%s1620 + $0x60] sm:$0xff]
        %v1634 = vld [vmem:[%s1620 + $0x68] sm:$0xff]
        %v1635 = vld [vmem:[%s1620 + $0x70] sm:$0xff]
        %v1636 = vld [vmem:[%s1620 + $0x78] sm:$0xff]
        %1637 = vmatprep.subr.mxu0 0.0
        %1638 = vmatpush1.msra.mxu0 %v1621
        %1639 = vmatprep.subr.mxu0 0.0
        %1640 = vmatpush1.msra.mxu0 %v1622
        %1641 = vmatprep.subr.mxu0 0.0
        %1642 = vmatpush1.msra.mxu0 %v1623
        %1643 = vmatprep.subr.mxu0 0.0
        %1644 = vmatpush1.msra.mxu0 %v1624
        %1645 = vmatprep.subr.mxu0 0.0
        %1646 = vmatpush1.msra.mxu0 %v1625
        %1647 = vmatprep.subr.mxu0 0.0
        %1648 = vmatpush1.msra.mxu0 %v1626
        %1649 = vmatprep.subr.mxu0 0.0
        %1650 = vmatpush1.msra.mxu0 %v1627
        %1651 = vmatprep.subr.mxu0 0.0
        %1652 = vmatpush1.msra.mxu0 %v1628
        %1653 = vmatprep.subr.mxu0 0.0
        %1654 = vmatpush1.msra.mxu0 %v1629
        %1655 = vmatprep.subr.mxu0 0.0
        %1656 = vmatpush1.msra.mxu0 %v1630
        %1657 = vmatprep.subr.mxu0 0.0
        %1658 = vmatpush1.msra.mxu0 %v1631
        %1659 = vmatprep.subr.mxu0 0.0
        %1660 = vmatpush1.msra.mxu0 %v1632
        %1661 = vmatprep.subr.mxu0 0.0
        %1662 = vmatpush1.msra.mxu0 %v1633
        %1663 = vmatprep.subr.mxu0 0.0
        %1664 = vmatpush1.msra.mxu0 %v1634
        %1665 = vmatprep.subr.mxu0 0.0
        %1666 = vmatpush1.msra.mxu0 %v1635
        %1667 = vmatprep.subr.mxu0 0.0
        %1668 = vmatpush1.msra.mxu0 %v1636
        %1669 = vmatprep.subr.mxu0 0.0
        %1670 = vmatpush1.msra.mxu0 0.0
        %1671 = vmatprep.subr.mxu0 0.0
        %1672 = vmatpush1.msra.mxu0 0.0
        %1673 = vmatprep.subr.mxu0 0.0
        %1674 = vmatpush1.msra.mxu0 0.0
        %1675 = vmatprep.subr.mxu0 0.0
        %1676 = vmatpush1.msra.mxu0 0.0
        %1677 = vmatprep.subr.mxu0 0.0
        %1678 = vmatpush1.msra.mxu0 0.0
        %1679 = vmatprep.subr.mxu0 0.0
        %1680 = vmatpush1.msra.mxu0 0.0
        %1681 = vmatprep.subr.mxu0 0.0
        %1682 = vmatpush1.msra.mxu0 0.0
        %1683 = vmatprep.subr.mxu0 0.0
        %1684 = vmatpush1.msra.mxu0 0.0
        %1685 = vmatprep.subr.mxu0 0.0
        %1686 = vmatpush1.msra.mxu0 0.0
        %1687 = vmatprep.subr.mxu0 0.0
        %1688 = vmatpush1.msra.mxu0 0.0
        %1689 = vmatprep.subr.mxu0 0.0
        %1690 = vmatpush1.msra.mxu0 0.0
        %1691 = vmatprep.subr.mxu0 0.0
        %1692 = vmatpush1.msra.mxu0 0.0
        %1693 = vmatprep.subr.mxu0 0.0
        %1694 = vmatpush1.msra.mxu0 0.0
        %1695 = vmatprep.subr.mxu0 0.0
        %1696 = vmatpush1.msra.mxu0 0.0
        %1697 = vmatprep.subr.mxu0 0.0
        %1698 = vmatpush1.msra.mxu0 0.0
        %1699 = vmatprep.subr.mxu0 0.0
        %1700 = vmatpush1.msra.mxu0 0.0
        %1701 = vmatprep.mubr.f32.mxu0 0.0
        %1702 = vmatmul.mubr.f32.gmra.mrb[0].mxu0 %v237
        %v1703 = vpop.f32.mrb[0].mxu0
        %v1704 = vadd.f32 %v308, %v1703
        %v1705 = vpop.f32.mrb[0].mxu0
        %1706 = vmatprep.mubr.f32.mxu0 0.0
        %1707 = vmatmul.mubr.f32.gmra.mrb[0].mxu0 %v238
        %v1708 = vpop.f32.mrb[0].mxu0
        %v1709 = vadd.f32 %v308, %v1708
        %v1710 = vpop.f32.mrb[0].mxu0
        %1711 = vmatprep.mubr.f32.mxu0 0.0
        %1712 = vmatmul.mubr.f32.gmra.mrb[0].mxu0 %v239
        %v1713 = vpop.f32.mrb[0].mxu0
        %v1714 = vadd.f32 %v308, %v1713
        %v1715 = vpop.f32.mrb[0].mxu0
        %1716 = vmatprep.mubr.f32.mxu0 0.0
        %1717 = vmatmul.mubr.f32.gmra.mrb[0].mxu0 %v240
        %v1718 = vpop.f32.mrb[0].mxu0
        %v1719 = vadd.f32 %v308, %v1718
        %v1720 = vpop.f32.mrb[0].mxu0
        %1721 = vmatprep.mubr.f32.mxu0 0.0
        %1722 = vmatmul.mubr.f32.gmra.mrb[0].mxu0 %v241
        %v1723 = vpop.f32.mrb[0].mxu0
        %v1724 = vadd.f32 %v308, %v1723
        %v1725 = vpop.f32.mrb[0].mxu0
        %1726 = vmatprep.mubr.f32.mxu0 0.0
        %1727 = vmatmul.mubr.f32.gmra.mrb[0].mxu0 %v242
        %v1728 = vpop.f32.mrb[0].mxu0
        %v1729 = vadd.f32 %v308, %v1728
        %v1730 = vpop.f32.mrb[0].mxu0
        %1731 = vmatprep.mubr.f32.mxu0 0.0
        %1732 = vmatmul.mubr.f32.gmra.mrb[0].mxu0 %v243
        %v1733 = vpop.f32.mrb[0].mxu0
        %v1734 = vadd.f32 %v308, %v1733
        %v1735 = vpop.f32.mrb[0].mxu0
        %1736 = vmatprep.mubr.f32.mxu0 0.0
        %1737 = vmatmul.mubr.f32.gmra.mrb[0].mxu0 %v244
        %v1738 = vpop.f32.mrb[0].mxu0
        %v1739 = vadd.f32 %v308, %v1738
        %v1740 = vpop.f32.mrb[0].mxu0
        %1741 = vmatprep.mubr.f32.mxu0 0.0
        %1742 = vmatmul.mubr.f32.gmra.mrb[0].mxu0 %v245
        %v1743 = vpop.f32.mrb[0].mxu0
        %v1744 = vadd.f32 %v308, %v1743
        %v1745 = vpop.f32.mrb[0].mxu0
        %1746 = vmatprep.mubr.f32.mxu0 0.0
        %1747 = vmatmul.mubr.f32.gmra.mrb[0].mxu0 %v246
        %v1748 = vpop.f32.mrb[0].mxu0
        %v1749 = vadd.f32 %v308, %v1748
        %v1750 = vpop.f32.mrb[0].mxu0
        %1751 = vmatprep.mubr.f32.mxu0 0.0
        %1752 = vmatmul.mubr.f32.gmra.mrb[0].mxu0 %v247
        %v1753 = vpop.f32.mrb[0].mxu0
        %v1754 = vadd.f32 %v308, %v1753
        %v1755 = vpop.f32.mrb[0].mxu0
        %1756 = vmatprep.mubr.f32.mxu0 0.0
        %1757 = vmatmul.mubr.f32.gmra.mrb[0].mxu0 %v248
        %v1758 = vpop.f32.mrb[0].mxu0
        %v1759 = vadd.f32 %v308, %v1758
        %v1760 = vpop.f32.mrb[0].mxu0
        %1761 = vmatprep.mubr.f32.mxu0 0.0
        %1762 = vmatmul.mubr.f32.gmra.mrb[0].mxu0 %v249
        %v1763 = vpop.f32.mrb[0].mxu0
        %v1764 = vadd.f32 %v308, %v1763
        %v1765 = vpop.f32.mrb[0].mxu0
        %1766 = vmatprep.mubr.f32.mxu0 0.0
        %1767 = vmatmul.mubr.f32.gmra.mrb[0].mxu0 %v250
        %v1768 = vpop.f32.mrb[0].mxu0
        %v1769 = vadd.f32 %v308, %v1768
        %v1770 = vpop.f32.mrb[0].mxu0
        %1771 = vmatprep.mubr.f32.mxu0 0.0
        %1772 = vmatmul.mubr.f32.gmra.mrb[0].mxu0 %v251
        %v1773 = vpop.f32.mrb[0].mxu0
        %v1774 = vadd.f32 %v308, %v1773
        %v1775 = vpop.f32.mrb[0].mxu0
        %1776 = vmatprep.mubr.f32.mxu0 0.0
        %1777 = vmatmul.mubr.f32.gmra.mrb[0].mxu0 %v252
        %v1778 = vpop.f32.mrb[0].mxu0
        %v1779 = vadd.f32 %v308, %v1778
        %v1780 = vpop.f32.mrb[0].mxu0
        %1781 = vmatprep.mubr.f32.mxu0 0.0
        %1782 = vmatmul.mubr.f32.gmra.mrb[0].mxu0 %v253
        %v1783 = vpop.f32.mrb[0].mxu0
        %v1784 = vadd.f32 %v308, %v1783
        %v1785 = vpop.f32.mrb[0].mxu0
        %1786 = vmatprep.mubr.f32.mxu0 0.0
        %1787 = vmatmul.mubr.f32.gmra.mrb[0].mxu0 %v254
        %v1788 = vpop.f32.mrb[0].mxu0
        %v1789 = vadd.f32 %v308, %v1788
        %v1790 = vpop.f32.mrb[0].mxu0
        %1791 = vmatprep.mubr.f32.mxu0 0.0
        %1792 = vmatmul.mubr.f32.gmra.mrb[0].mxu0 %v255
        %v1793 = vpop.f32.mrb[0].mxu0
        %v1794 = vadd.f32 %v308, %v1793
        %v1795 = vpop.f32.mrb[0].mxu0
        %1796 = vmatprep.mubr.f32.mxu0 0.0
        %1797 = vmatmul.mubr.f32.gmra.mrb[0].mxu0 %v256
        %v1798 = vpop.f32.mrb[0].mxu0
        %v1799 = vadd.f32 %v308, %v1798
        %v1800 = vpop.f32.mrb[0].mxu0
        %1801 = vmatprep.mubr.f32.mxu0 0.0
        %1802 = vmatmul.mubr.f32.gmra.mrb[0].mxu0 %v257
        %v1803 = vpop.f32.mrb[0].mxu0
        %v1804 = vadd.f32 %v308, %v1803
        %v1805 = vpop.f32.mrb[0].mxu0
        %1806 = vmatprep.mubr.f32.mxu0 0.0
        %1807 = vmatmul.mubr.f32.gmra.mrb[0].mxu0 %v258
        %v1808 = vpop.f32.mrb[0].mxu0
        %v1809 = vadd.f32 %v308, %v1808
        %v1810 = vpop.f32.mrb[0].mxu0
        %1811 = vmatprep.mubr.f32.mxu0 0.0
        %1812 = vmatmul.mubr.f32.gmra.mrb[0].mxu0 %v259
        %v1813 = vpop.f32.mrb[0].mxu0
        %v1814 = vadd.f32 %v308, %v1813
        %v1815 = vpop.f32.mrb[0].mxu0
        %1816 = vmatprep.mubr.f32.mxu0 0.0
        %1817 = vmatmul.mubr.f32.gmra.mrb[0].mxu0 %v260
        %v1818 = vpop.f32.mrb[0].mxu0
        %v1819 = vadd.f32 %v308, %v1818
        %v1820 = vpop.f32.mrb[0].mxu0
        %1821 = vmatprep.mubr.f32.mxu0 0.0
        %1822 = vmatmul.mubr.f32.gmra.mrb[0].mxu0 %v261
        %v1823 = vpop.f32.mrb[0].mxu0
        %v1824 = vadd.f32 %v308, %v1823
        %v1825 = vpop.f32.mrb[0].mxu0
        %1826 = vmatprep.mubr.f32.mxu0 0.0
        %1827 = vmatmul.mubr.f32.gmra.mrb[0].mxu0 %v262
        %v1828 = vpop.f32.mrb[0].mxu0
        %v1829 = vadd.f32 %v308, %v1828
        %v1830 = vpop.f32.mrb[0].mxu0
        %1831 = vmatprep.mubr.f32.mxu0 0.0
        %1832 = vmatmul.mubr.f32.gmra.mrb[0].mxu0 %v263
        %v1833 = vpop.f32.mrb[0].mxu0
        %v1834 = vadd.f32 %v308, %v1833
        %v1835 = vpop.f32.mrb[0].mxu0
        %1836 = vmatprep.mubr.f32.mxu0 0.0
        %1837 = vmatmul.mubr.f32.gmra.mrb[0].mxu0 %v264
        %v1838 = vpop.f32.mrb[0].mxu0
        %v1839 = vadd.f32 %v308, %v1838
        %v1840 = vpop.f32.mrb[0].mxu0
        %1841 = vmatprep.mubr.f32.mxu0 0.0
        %1842 = vmatmul.mubr.f32.gmra.mrb[0].mxu0 %v265
        %v1843 = vpop.f32.mrb[0].mxu0
        %v1844 = vadd.f32 %v308, %v1843
        %v1845 = vpop.f32.mrb[0].mxu0
        %1846 = vmatprep.mubr.f32.mxu0 0.0
        %1847 = vmatmul.mubr.f32.gmra.mrb[0].mxu0 %v266
        %v1848 = vpop.f32.mrb[0].mxu0
        %v1849 = vadd.f32 %v308, %v1848
        %v1850 = vpop.f32.mrb[0].mxu0
        %1851 = vmatprep.mubr.f32.mxu0 0.0
        %1852 = vmatmul.mubr.f32.gmra.mrb[0].mxu0 %v267
        %v1853 = vpop.f32.mrb[0].mxu0
        %v1854 = vadd.f32 %v308, %v1853
        %v1855 = vpop.f32.mrb[0].mxu0
        %1856 = vmatprep.mubr.f32.mxu0 0.0
        %1857 = vmatmul.mubr.f32.gmra.mrb[0].mxu0 %v268
        %v1858 = vpop.f32.mrb[0].mxu0
        %v1859 = vadd.f32 %v308, %v1858
        %v1860 = vpop.f32.mrb[0].mxu0
        %1861 = vmatprep.mubr.f32.mxu0 0.0
        %1862 = vmatmul.mubr.f32.gmra.mrb[0].mxu0 %v269
        %v1863 = vpop.f32.mrb[0].mxu0
        %v1864 = vadd.f32 %v308, %v1863
        %v1865 = vpop.f32.mrb[0].mxu0
        %1866 = vmatprep.mubr.f32.mxu0 0.0
        %1867 = vmatmul.mubr.f32.gmra.mrb[0].mxu0 %v270
        %v1868 = vpop.f32.mrb[0].mxu0
        %v1869 = vadd.f32 %v308, %v1868
        %v1870 = vpop.f32.mrb[0].mxu0
        %1871 = vmatprep.mubr.f32.mxu0 0.0
        %1872 = vmatmul.mubr.f32.gmra.mrb[0].mxu0 %v271
        %v1873 = vpop.f32.mrb[0].mxu0
        %v1874 = vadd.f32 %v308, %v1873
        %v1875 = vpop.f32.mrb[0].mxu0
        %1876 = vmatprep.mubr.f32.mxu0 0.0
        %1877 = vmatmul.mubr.f32.gmra.mrb[0].mxu0 %v272
        %v1878 = vpop.f32.mrb[0].mxu0
        %v1879 = vadd.f32 %v308, %v1878
        %v1880 = vpop.f32.mrb[0].mxu0
        %1881 = vmatprep.mubr.f32.mxu0 0.0
        %1882 = vmatmul.mubr.f32.gmra.mrb[0].mxu0 %v273
        %v1883 = vpop.f32.mrb[0].mxu0
        %v1884 = vadd.f32 %v308, %v1883
        %v1885 = vpop.f32.mrb[0].mxu0
        %1886 = vmatprep.mubr.f32.mxu0 0.0
        %1887 = vmatmul.mubr.f32.gmra.mrb[0].mxu0 %v274
        %v1888 = vpop.f32.mrb[0].mxu0
        %v1889 = vadd.f32 %v308, %v1888
        %v1890 = vpop.f32.mrb[0].mxu0
        %1891 = vmatprep.mubr.f32.mxu0 0.0
        %1892 = vmatmul.mubr.f32.gmra.mrb[0].mxu0 %v275
        %v1893 = vpop.f32.mrb[0].mxu0
        %v1894 = vadd.f32 %v308, %v1893
        %v1895 = vpop.f32.mrb[0].mxu0
        %1896 = vmatprep.mubr.f32.mxu0 0.0
        %1897 = vmatmul.mubr.f32.gmra.mrb[0].mxu0 %v276
        %v1898 = vpop.f32.mrb[0].mxu0
        %v1899 = vadd.f32 %v308, %v1898
        %v1900 = vpop.f32.mrb[0].mxu0
        %1901 = vmatprep.mubr.f32.mxu0 0.0
        %1902 = vmatmul.mubr.f32.gmra.mrb[0].mxu0 %v277
        %v1903 = vpop.f32.mrb[0].mxu0
        %v1904 = vadd.f32 %v308, %v1903
        %v1905 = vpop.f32.mrb[0].mxu0
        %1906 = vmatprep.mubr.f32.mxu0 0.0
        %1907 = vmatmul.mubr.f32.gmra.mrb[0].mxu0 %v278
        %v1908 = vpop.f32.mrb[0].mxu0
        %v1909 = vadd.f32 %v308, %v1908
        %v1910 = vpop.f32.mrb[0].mxu0
        %1911 = vmatprep.mubr.f32.mxu0 0.0
        %1912 = vmatmul.mubr.f32.gmra.mrb[0].mxu0 %v279
        %v1913 = vpop.f32.mrb[0].mxu0
        %v1914 = vadd.f32 %v308, %v1913
        %v1915 = vpop.f32.mrb[0].mxu0
        %1916 = vmatprep.mubr.f32.mxu0 0.0
        %1917 = vmatmul.mubr.f32.gmra.mrb[0].mxu0 %v280
        %v1918 = vpop.f32.mrb[0].mxu0
        %v1919 = vadd.f32 %v308, %v1918
        %v1920 = vpop.f32.mrb[0].mxu0
        %1921 = vmatprep.mubr.f32.mxu0 0.0
        %1922 = vmatmul.mubr.f32.gmra.mrb[0].mxu0 %v281
        %v1923 = vpop.f32.mrb[0].mxu0
        %v1924 = vadd.f32 %v308, %v1923
        %v1925 = vpop.f32.mrb[0].mxu0
        %1926 = vmatprep.mubr.f32.mxu0 0.0
        %1927 = vmatmul.mubr.f32.gmra.mrb[0].mxu0 %v282
        %v1928 = vpop.f32.mrb[0].mxu0
        %v1929 = vadd.f32 %v308, %v1928
        %v1930 = vpop.f32.mrb[0].mxu0
        %1931 = vmatprep.mubr.f32.mxu0 0.0
        %1932 = vmatmul.mubr.f32.gmra.mrb[0].mxu0 %v283
        %v1933 = vpop.f32.mrb[0].mxu0
        %v1934 = vadd.f32 %v308, %v1933
        %v1935 = vpop.f32.mrb[0].mxu0
        %1936 = vmatprep.mubr.f32.mxu0 0.0
        %1937 = vmatmul.mubr.f32.gmra.mrb[0].mxu0 %v284
        %v1938 = vpop.f32.mrb[0].mxu0
        %v1939 = vadd.f32 %v308, %v1938
        %v1940 = vpop.f32.mrb[0].mxu0
        %1941 = vmatprep.mubr.f32.mxu0 0.0
        %1942 = vmatmul.mubr.f32.gmra.mrb[0].mxu0 %v285
        %v1943 = vpop.f32.mrb[0].mxu0
        %v1944 = vadd.f32 %v308, %v1943
        %v1945 = vpop.f32.mrb[0].mxu0
        %1946 = vmatprep.mubr.f32.mxu0 0.0
        %1947 = vmatmul.mubr.f32.gmra.mrb[0].mxu0 %v286
        %v1948 = vpop.f32.mrb[0].mxu0
        %v1949 = vadd.f32 %v308, %v1948
        %v1950 = vpop.f32.mrb[0].mxu0
        %1951 = vdwg.mxu0
        %s1952 = scalar_lea.vmem [#allocation2], 256
        %v1953 = vld [vmem:[%s1952] sm:$0xff]
        %v1954 = vld [vmem:[%s1952 + $0x8] sm:$0xff]
        %v1955 = vld [vmem:[%s1952 + $0x10] sm:$0xff]
        %v1956 = vld [vmem:[%s1952 + $0x18] sm:$0xff]
        %v1957 = vld [vmem:[%s1952 + $0x20] sm:$0xff]
        %v1958 = vld [vmem:[%s1952 + $0x28] sm:$0xff]
        %v1959 = vld [vmem:[%s1952 + $0x30] sm:$0xff]
        %v1960 = vld [vmem:[%s1952 + $0x38] sm:$0xff]
        %v1961 = vld [vmem:[%s1952 + $0x40] sm:$0xff]
        %v1962 = vld [vmem:[%s1952 + $0x48] sm:$0xff]
        %v1963 = vld [vmem:[%s1952 + $0x50] sm:$0xff]
        %v1964 = vld [vmem:[%s1952 + $0x58] sm:$0xff]
        %v1965 = vld [vmem:[%s1952 + $0x60] sm:$0xff]
        %v1966 = vld [vmem:[%s1952 + $0x68] sm:$0xff]
        %v1967 = vld [vmem:[%s1952 + $0x70] sm:$0xff]
        %v1968 = vld [vmem:[%s1952 + $0x78] sm:$0xff]
        %1969 = vmatprep.subr.mxu0 0.0
        %1970 = vmatpush1.msra.mxu0 %v1953
        %1971 = vmatprep.subr.mxu0 0.0
        %1972 = vmatpush1.msra.mxu0 %v1954
        %1973 = vmatprep.subr.mxu0 0.0
        %1974 = vmatpush1.msra.mxu0 %v1955
        %1975 = vmatprep.subr.mxu0 0.0
        %1976 = vmatpush1.msra.mxu0 %v1956
        %1977 = vmatprep.subr.mxu0 0.0
        %1978 = vmatpush1.msra.mxu0 %v1957
        %1979 = vmatprep.subr.mxu0 0.0
        %1980 = vmatpush1.msra.mxu0 %v1958
        %1981 = vmatprep.subr.mxu0 0.0
        %1982 = vmatpush1.msra.mxu0 %v1959
        %1983 = vmatprep.subr.mxu0 0.0
        %1984 = vmatpush1.msra.mxu0 %v1960
        %1985 = vmatprep.subr.mxu0 0.0
        %1986 = vmatpush1.msra.mxu0 %v1961
        %1987 = vmatprep.subr.mxu0 0.0
        %1988 = vmatpush1.msra.mxu0 %v1962
        %1989 = vmatprep.subr.mxu0 0.0
        %1990 = vmatpush1.msra.mxu0 %v1963
        %1991 = vmatprep.subr.mxu0 0.0
        %1992 = vmatpush1.msra.mxu0 %v1964
        %1993 = vmatprep.subr.mxu0 0.0
        %1994 = vmatpush1.msra.mxu0 %v1965
        %1995 = vmatprep.subr.mxu0 0.0
        %1996 = vmatpush1.msra.mxu0 %v1966
        %1997 = vmatprep.subr.mxu0 0.0
        %1998 = vmatpush1.msra.mxu0 %v1967
        %1999 = vmatprep.subr.mxu0 0.0
        %2000 = vmatpush1.msra.mxu0 %v1968
        %2001 = vmatprep.subr.mxu0 0.0
        %2002 = vmatpush1.msra.mxu0 0.0
        %2003 = vmatprep.subr.mxu0 0.0
        %2004 = vmatpush1.msra.mxu0 0.0
        %2005 = vmatprep.subr.mxu0 0.0
        %2006 = vmatpush1.msra.mxu0 0.0
        %2007 = vmatprep.subr.mxu0 0.0
        %2008 = vmatpush1.msra.mxu0 0.0
        %2009 = vmatprep.subr.mxu0 0.0
        %2010 = vmatpush1.msra.mxu0 0.0
        %2011 = vmatprep.subr.mxu0 0.0
        %2012 = vmatpush1.msra.mxu0 0.0
        %2013 = vmatprep.subr.mxu0 0.0
        %2014 = vmatpush1.msra.mxu0 0.0
        %2015 = vmatprep.subr.mxu0 0.0
        %2016 = vmatpush1.msra.mxu0 0.0
        %2017 = vmatprep.subr.mxu0 0.0
        %2018 = vmatpush1.msra.mxu0 0.0
        %2019 = vmatprep.subr.mxu0 0.0
        %2020 = vmatpush1.msra.mxu0 0.0
        %2021 = vmatprep.subr.mxu0 0.0
        %2022 = vmatpush1.msra.mxu0 0.0
        %2023 = vmatprep.subr.mxu0 0.0
        %2024 = vmatpush1.msra.mxu0 0.0
        %2025 = vmatprep.subr.mxu0 0.0
        %2026 = vmatpush1.msra.mxu0 0.0
        %2027 = vmatprep.subr.mxu0 0.0
        %2028 = vmatpush1.msra.mxu0 0.0
        %2029 = vmatprep.subr.mxu0 0.0
        %2030 = vmatpush1.msra.mxu0 0.0
        %2031 = vmatprep.subr.mxu0 0.0
        %2032 = vmatpush1.msra.mxu0 0.0
        %2033 = vmatprep.mubr.f32.mxu0 0.0
        %2034 = vmatmul.mubr.f32.gmra.mrb[0].mxu0 %v1704
        %v2035 = vpop.f32.mrb[0].mxu0
        %v2036 = vadd.f32 0.0, %v2035
        %v2037 = vpop.f32.mrb[0].mxu0
        %2038 = vmatprep.mubr.f32.mxu0 0.0
        %2039 = vmatmul.mubr.f32.gmra.mrb[0].mxu0 %v1709
        %v2040 = vpop.f32.mrb[0].mxu0
        %v2041 = vadd.f32 0.0, %v2040
        %v2042 = vpop.f32.mrb[0].mxu0
        %2043 = vmatprep.mubr.f32.mxu0 0.0
        %2044 = vmatmul.mubr.f32.gmra.mrb[0].mxu0 %v1714
        %v2045 = vpop.f32.mrb[0].mxu0
        %v2046 = vadd.f32 0.0, %v2045
        %v2047 = vpop.f32.mrb[0].mxu0
        %2048 = vmatprep.mubr.f32.mxu0 0.0
        %2049 = vmatmul.mubr.f32.gmra.mrb[0].mxu0 %v1719
        %v2050 = vpop.f32.mrb[0].mxu0
        %v2051 = vadd.f32 0.0, %v2050
        %v2052 = vpop.f32.mrb[0].mxu0
        %2053 = vmatprep.mubr.f32.mxu0 0.0
        %2054 = vmatmul.mubr.f32.gmra.mrb[0].mxu0 %v1724
        %v2055 = vpop.f32.mrb[0].mxu0
        %v2056 = vadd.f32 0.0, %v2055
        %v2057 = vpop.f32.mrb[0].mxu0
        %2058 = vmatprep.mubr.f32.mxu0 0.0
        %2059 = vmatmul.mubr.f32.gmra.mrb[0].mxu0 %v1729
        %v2060 = vpop.f32.mrb[0].mxu0
        %v2061 = vadd.f32 0.0, %v2060
        %v2062 = vpop.f32.mrb[0].mxu0
        %2063 = vmatprep.mubr.f32.mxu0 0.0
        %2064 = vmatmul.mubr.f32.gmra.mrb[0].mxu0 %v1734
        %v2065 = vpop.f32.mrb[0].mxu0
        %v2066 = vadd.f32 0.0, %v2065
        %v2067 = vpop.f32.mrb[0].mxu0
        %2068 = vmatprep.mubr.f32.mxu0 0.0
        %2069 = vmatmul.mubr.f32.gmra.mrb[0].mxu0 %v1739
        %v2070 = vpop.f32.mrb[0].mxu0
        %v2071 = vadd.f32 0.0, %v2070
        %v2072 = vpop.f32.mrb[0].mxu0
        %2073 = vmatprep.mubr.f32.mxu0 0.0
        %2074 = vmatmul.mubr.f32.gmra.mrb[0].mxu0 %v1744
        %v2075 = vpop.f32.mrb[0].mxu0
        %v2076 = vadd.f32 0.0, %v2075
        %v2077 = vpop.f32.mrb[0].mxu0
        %2078 = vmatprep.mubr.f32.mxu0 0.0
        %2079 = vmatmul.mubr.f32.gmra.mrb[0].mxu0 %v1749
        %v2080 = vpop.f32.mrb[0].mxu0
        %v2081 = vadd.f32 0.0, %v2080
        %v2082 = vpop.f32.mrb[0].mxu0
        %2083 = vmatprep.mubr.f32.mxu0 0.0
        %2084 = vmatmul.mubr.f32.gmra.mrb[0].mxu0 %v1754
        %v2085 = vpop.f32.mrb[0].mxu0
        %v2086 = vadd.f32 0.0, %v2085
        %v2087 = vpop.f32.mrb[0].mxu0
        %2088 = vmatprep.mubr.f32.mxu0 0.0
        %2089 = vmatmul.mubr.f32.gmra.mrb[0].mxu0 %v1759
        %v2090 = vpop.f32.mrb[0].mxu0
        %v2091 = vadd.f32 0.0, %v2090
        %v2092 = vpop.f32.mrb[0].mxu0
        %2093 = vmatprep.mubr.f32.mxu0 0.0
        %2094 = vmatmul.mubr.f32.gmra.mrb[0].mxu0 %v1764
        %v2095 = vpop.f32.mrb[0].mxu0
        %v2096 = vadd.f32 0.0, %v2095
        %v2097 = vpop.f32.mrb[0].mxu0
        %2098 = vmatprep.mubr.f32.mxu0 0.0
        %2099 = vmatmul.mubr.f32.gmra.mrb[0].mxu0 %v1769
        %v2100 = vpop.f32.mrb[0].mxu0
        %v2101 = vadd.f32 0.0, %v2100
        %v2102 = vpop.f32.mrb[0].mxu0
        %2103 = vmatprep.mubr.f32.mxu0 0.0
        %2104 = vmatmul.mubr.f32.gmra.mrb[0].mxu0 %v1774
        %v2105 = vpop.f32.mrb[0].mxu0
        %v2106 = vadd.f32 0.0, %v2105
        %v2107 = vpop.f32.mrb[0].mxu0
        %2108 = vmatprep.mubr.f32.mxu0 0.0
        %2109 = vmatmul.mubr.f32.gmra.mrb[0].mxu0 %v1779
        %v2110 = vpop.f32.mrb[0].mxu0
        %v2111 = vadd.f32 0.0, %v2110
        %v2112 = vpop.f32.mrb[0].mxu0
        %2113 = vmatprep.mubr.f32.mxu0 0.0
        %2114 = vmatmul.mubr.f32.gmra.mrb[0].mxu0 %v1784
        %v2115 = vpop.f32.mrb[0].mxu0
        %v2116 = vadd.f32 0.0, %v2115
        %v2117 = vpop.f32.mrb[0].mxu0
        %2118 = vmatprep.mubr.f32.mxu0 0.0
        %2119 = vmatmul.mubr.f32.gmra.mrb[0].mxu0 %v1789
        %v2120 = vpop.f32.mrb[0].mxu0
        %v2121 = vadd.f32 0.0, %v2120
        %v2122 = vpop.f32.mrb[0].mxu0
        %2123 = vmatprep.mubr.f32.mxu0 0.0
        %2124 = vmatmul.mubr.f32.gmra.mrb[0].mxu0 %v1794
        %v2125 = vpop.f32.mrb[0].mxu0
        %v2126 = vadd.f32 0.0, %v2125
        %v2127 = vpop.f32.mrb[0].mxu0
        %2128 = vmatprep.mubr.f32.mxu0 0.0
        %2129 = vmatmul.mubr.f32.gmra.mrb[0].mxu0 %v1799
        %v2130 = vpop.f32.mrb[0].mxu0
        %v2131 = vadd.f32 0.0, %v2130
        %v2132 = vpop.f32.mrb[0].mxu0
        %2133 = vmatprep.mubr.f32.mxu0 0.0
        %2134 = vmatmul.mubr.f32.gmra.mrb[0].mxu0 %v1804
        %v2135 = vpop.f32.mrb[0].mxu0
        %v2136 = vadd.f32 0.0, %v2135
        %v2137 = vpop.f32.mrb[0].mxu0
        %2138 = vmatprep.mubr.f32.mxu0 0.0
        %2139 = vmatmul.mubr.f32.gmra.mrb[0].mxu0 %v1809
        %v2140 = vpop.f32.mrb[0].mxu0
        %v2141 = vadd.f32 0.0, %v2140
        %v2142 = vpop.f32.mrb[0].mxu0
        %2143 = vmatprep.mubr.f32.mxu0 0.0
        %2144 = vmatmul.mubr.f32.gmra.mrb[0].mxu0 %v1814
        %v2145 = vpop.f32.mrb[0].mxu0
        %v2146 = vadd.f32 0.0, %v2145
        %v2147 = vpop.f32.mrb[0].mxu0
        %2148 = vmatprep.mubr.f32.mxu0 0.0
        %2149 = vmatmul.mubr.f32.gmra.mrb[0].mxu0 %v1819
        %v2150 = vpop.f32.mrb[0].mxu0
        %v2151 = vadd.f32 0.0, %v2150
        %v2152 = vpop.f32.mrb[0].mxu0
        %2153 = vmatprep.mubr.f32.mxu0 0.0
        %2154 = vmatmul.mubr.f32.gmra.mrb[0].mxu0 %v1824
        %v2155 = vpop.f32.mrb[0].mxu0
        %v2156 = vadd.f32 0.0, %v2155
        %v2157 = vpop.f32.mrb[0].mxu0
        %2158 = vmatprep.mubr.f32.mxu0 0.0
        %2159 = vmatmul.mubr.f32.gmra.mrb[0].mxu0 %v1829
        %v2160 = vpop.f32.mrb[0].mxu0
        %v2161 = vadd.f32 0.0, %v2160
        %v2162 = vpop.f32.mrb[0].mxu0
        %2163 = vmatprep.mubr.f32.mxu0 0.0
        %2164 = vmatmul.mubr.f32.gmra.mrb[0].mxu0 %v1834
        %v2165 = vpop.f32.mrb[0].mxu0
        %v2166 = vadd.f32 0.0, %v2165
        %v2167 = vpop.f32.mrb[0].mxu0
        %2168 = vmatprep.mubr.f32.mxu0 0.0
        %2169 = vmatmul.mubr.f32.gmra.mrb[0].mxu0 %v1839
        %v2170 = vpop.f32.mrb[0].mxu0
        %v2171 = vadd.f32 0.0, %v2170
        %v2172 = vpop.f32.mrb[0].mxu0
        %2173 = vmatprep.mubr.f32.mxu0 0.0
        %2174 = vmatmul.mubr.f32.gmra.mrb[0].mxu0 %v1844
        %v2175 = vpop.f32.mrb[0].mxu0
        %v2176 = vadd.f32 0.0, %v2175
        %v2177 = vpop.f32.mrb[0].mxu0
        %2178 = vmatprep.mubr.f32.mxu0 0.0
        %2179 = vmatmul.mubr.f32.gmra.mrb[0].mxu0 %v1849
        %v2180 = vpop.f32.mrb[0].mxu0
        %v2181 = vadd.f32 0.0, %v2180
        %v2182 = vpop.f32.mrb[0].mxu0
        %2183 = vmatprep.mubr.f32.mxu0 0.0
        %2184 = vmatmul.mubr.f32.gmra.mrb[0].mxu0 %v1854
        %v2185 = vpop.f32.mrb[0].mxu0
        %v2186 = vadd.f32 0.0, %v2185
        %v2187 = vpop.f32.mrb[0].mxu0
        %2188 = vmatprep.mubr.f32.mxu0 0.0
        %2189 = vmatmul.mubr.f32.gmra.mrb[0].mxu0 %v1859
        %v2190 = vpop.f32.mrb[0].mxu0
        %v2191 = vadd.f32 0.0, %v2190
        %v2192 = vpop.f32.mrb[0].mxu0
        %2193 = vmatprep.mubr.f32.mxu0 0.0
        %2194 = vmatmul.mubr.f32.gmra.mrb[0].mxu0 %v1864
        %v2195 = vpop.f32.mrb[0].mxu0
        %v2196 = vadd.f32 0.0, %v2195
        %v2197 = vpop.f32.mrb[0].mxu0
        %2198 = vmatprep.mubr.f32.mxu0 0.0
        %2199 = vmatmul.mubr.f32.gmra.mrb[0].mxu0 %v1869
        %v2200 = vpop.f32.mrb[0].mxu0
        %v2201 = vadd.f32 0.0, %v2200
        %v2202 = vpop.f32.mrb[0].mxu0
        %2203 = vmatprep.mubr.f32.mxu0 0.0
        %2204 = vmatmul.mubr.f32.gmra.mrb[0].mxu0 %v1874
        %v2205 = vpop.f32.mrb[0].mxu0
        %v2206 = vadd.f32 0.0, %v2205
        %v2207 = vpop.f32.mrb[0].mxu0
        %2208 = vmatprep.mubr.f32.mxu0 0.0
        %2209 = vmatmul.mubr.f32.gmra.mrb[0].mxu0 %v1879
        %v2210 = vpop.f32.mrb[0].mxu0
        %v2211 = vadd.f32 0.0, %v2210
        %v2212 = vpop.f32.mrb[0].mxu0
        %2213 = vmatprep.mubr.f32.mxu0 0.0
        %2214 = vmatmul.mubr.f32.gmra.mrb[0].mxu0 %v1884
        %v2215 = vpop.f32.mrb[0].mxu0
        %v2216 = vadd.f32 0.0, %v2215
        %v2217 = vpop.f32.mrb[0].mxu0
        %2218 = vmatprep.mubr.f32.mxu0 0.0
        %2219 = vmatmul.mubr.f32.gmra.mrb[0].mxu0 %v1889
        %v2220 = vpop.f32.mrb[0].mxu0
        %v2221 = vadd.f32 0.0, %v2220
        %v2222 = vpop.f32.mrb[0].mxu0
        %2223 = vmatprep.mubr.f32.mxu0 0.0
        %2224 = vmatmul.mubr.f32.gmra.mrb[0].mxu0 %v1894
        %v2225 = vpop.f32.mrb[0].mxu0
        %v2226 = vadd.f32 0.0, %v2225
        %v2227 = vpop.f32.mrb[0].mxu0
        %2228 = vmatprep.mubr.f32.mxu0 0.0
        %2229 = vmatmul.mubr.f32.gmra.mrb[0].mxu0 %v1899
        %v2230 = vpop.f32.mrb[0].mxu0
        %v2231 = vadd.f32 0.0, %v2230
        %v2232 = vpop.f32.mrb[0].mxu0
        %2233 = vmatprep.mubr.f32.mxu0 0.0
        %2234 = vmatmul.mubr.f32.gmra.mrb[0].mxu0 %v1904
        %v2235 = vpop.f32.mrb[0].mxu0
        %v2236 = vadd.f32 0.0, %v2235
        %v2237 = vpop.f32.mrb[0].mxu0
        %2238 = vmatprep.mubr.f32.mxu0 0.0
        %2239 = vmatmul.mubr.f32.gmra.mrb[0].mxu0 %v1909
        %v2240 = vpop.f32.mrb[0].mxu0
        %v2241 = vadd.f32 0.0, %v2240
        %v2242 = vpop.f32.mrb[0].mxu0
        %2243 = vmatprep.mubr.f32.mxu0 0.0
        %2244 = vmatmul.mubr.f32.gmra.mrb[0].mxu0 %v1914
        %v2245 = vpop.f32.mrb[0].mxu0
        %v2246 = vadd.f32 0.0, %v2245
        %v2247 = vpop.f32.mrb[0].mxu0
        %2248 = vmatprep.mubr.f32.mxu0 0.0
        %2249 = vmatmul.mubr.f32.gmra.mrb[0].mxu0 %v1919
        %v2250 = vpop.f32.mrb[0].mxu0
        %v2251 = vadd.f32 0.0, %v2250
        %v2252 = vpop.f32.mrb[0].mxu0
        %2253 = vmatprep.mubr.f32.mxu0 0.0
        %2254 = vmatmul.mubr.f32.gmra.mrb[0].mxu0 %v1924
        %v2255 = vpop.f32.mrb[0].mxu0
        %v2256 = vadd.f32 0.0, %v2255
        %v2257 = vpop.f32.mrb[0].mxu0
        %2258 = vmatprep.mubr.f32.mxu0 0.0
        %2259 = vmatmul.mubr.f32.gmra.mrb[0].mxu0 %v1929
        %v2260 = vpop.f32.mrb[0].mxu0
        %v2261 = vadd.f32 0.0, %v2260
        %v2262 = vpop.f32.mrb[0].mxu0
        %2263 = vmatprep.mubr.f32.mxu0 0.0
        %2264 = vmatmul.mubr.f32.gmra.mrb[0].mxu0 %v1934
        %v2265 = vpop.f32.mrb[0].mxu0
        %v2266 = vadd.f32 0.0, %v2265
        %v2267 = vpop.f32.mrb[0].mxu0
        %2268 = vmatprep.mubr.f32.mxu0 0.0
        %2269 = vmatmul.mubr.f32.gmra.mrb[0].mxu0 %v1939
        %v2270 = vpop.f32.mrb[0].mxu0
        %v2271 = vadd.f32 0.0, %v2270
        %v2272 = vpop.f32.mrb[0].mxu0
        %2273 = vmatprep.mubr.f32.mxu0 0.0
        %2274 = vmatmul.mubr.f32.gmra.mrb[0].mxu0 %v1944
        %v2275 = vpop.f32.mrb[0].mxu0
        %v2276 = vadd.f32 0.0, %v2275
        %v2277 = vpop.f32.mrb[0].mxu0
        %2278 = vmatprep.mubr.f32.mxu0 0.0
        %2279 = vmatmul.mubr.f32.gmra.mrb[0].mxu0 %v1949
        %v2280 = vpop.f32.mrb[0].mxu0
        %v2281 = vadd.f32 0.0, %v2280
        %v2282 = vpop.f32.mrb[0].mxu0
        %2283 = vdwg.mxu0
        %v2284 = vadd.f32 %v1372, %v2036
        %v2285 = vadd.f32 %v1377, %v2041
        %v2286 = vadd.f32 %v1382, %v2046
        %v2287 = vadd.f32 %v1387, %v2051
        %v2288 = vadd.f32 %v1392, %v2056
        %v2289 = vadd.f32 %v1397, %v2061
        %v2290 = vadd.f32 %v1402, %v2066
        %v2291 = vadd.f32 %v1407, %v2071
        %v2292 = vadd.f32 %v1412, %v2076
        %v2293 = vadd.f32 %v1417, %v2081
        %v2294 = vadd.f32 %v1422, %v2086
        %v2295 = vadd.f32 %v1427, %v2091
        %v2296 = vadd.f32 %v1432, %v2096
        %v2297 = vadd.f32 %v1437, %v2101
        %v2298 = vadd.f32 %v1442, %v2106
        %v2299 = vadd.f32 %v1447, %v2111
        %v2300 = vadd.f32 %v1452, %v2116
        %v2301 = vadd.f32 %v1457, %v2121
        %v2302 = vadd.f32 %v1462, %v2126
        %v2303 = vadd.f32 %v1467, %v2131
        %v2304 = vadd.f32 %v1472, %v2136
        %v2305 = vadd.f32 %v1477, %v2141
        %v2306 = vadd.f32 %v1482, %v2146
        %v2307 = vadd.f32 %v1487, %v2151
        %v2308 = vadd.f32 %v1492, %v2156
        %v2309 = vadd.f32 %v1497, %v2161
        %v2310 = vadd.f32 %v1502, %v2166
        %v2311 = vadd.f32 %v1507, %v2171
        %v2312 = vadd.f32 %v1512, %v2176
        %v2313 = vadd.f32 %v1517, %v2181
        %v2314 = vadd.f32 %v1522, %v2186
        %v2315 = vadd.f32 %v1527, %v2191
        %v2316 = vadd.f32 %v1532, %v2196
        %v2317 = vadd.f32 %v1537, %v2201
        %v2318 = vadd.f32 %v1542, %v2206
        %v2319 = vadd.f32 %v1547, %v2211
        %v2320 = vadd.f32 %v1552, %v2216
        %v2321 = vadd.f32 %v1557, %v2221
        %v2322 = vadd.f32 %v1562, %v2226
        %v2323 = vadd.f32 %v1567, %v2231
        %v2324 = vadd.f32 %v1572, %v2236
        %v2325 = vadd.f32 %v1577, %v2241
        %v2326 = vadd.f32 %v1582, %v2246
        %v2327 = vadd.f32 %v1587, %v2251
        %v2328 = vadd.f32 %v1592, %v2256
        %v2329 = vadd.f32 %v1597, %v2261
        %v2330 = vadd.f32 %v1602, %v2266
        %v2331 = vadd.f32 %v1607, %v2271
        %v2332 = vadd.f32 %v1612, %v2276
        %v2333 = vadd.f32 %v1617, %v2281
        %s2334 = scalar_lea.vmem %s1, 384
        %v2335 = vld [vmem:[%s2334] sm:$0xff]
        %v2336 = vld [vmem:[%s2334 + $0x8] sm:$0xff]
        %v2337 = vld [vmem:[%s2334 + $0x10] sm:$0xff]
        %v2338 = vld [vmem:[%s2334 + $0x18] sm:$0xff]
        %v2339 = vld [vmem:[%s2334 + $0x20] sm:$0xff]
        %v2340 = vld [vmem:[%s2334 + $0x28] sm:$0xff]
        %v2341 = vld [vmem:[%s2334 + $0x30] sm:$0xff]
        %v2342 = vld [vmem:[%s2334 + $0x38] sm:$0xff]
        %v2343 = vld [vmem:[%s2334 + $0x40] sm:$0xff]
        %v2344 = vld [vmem:[%s2334 + $0x48] sm:$0xff]
        %v2345 = vld [vmem:[%s2334 + $0x50] sm:$0xff]
        %v2346 = vld [vmem:[%s2334 + $0x58] sm:$0xff]
        %v2347 = vld [vmem:[%s2334 + $0x60] sm:$0xff]
        %v2348 = vld [vmem:[%s2334 + $0x68] sm:$0xff]
        %v2349 = vld [vmem:[%s2334 + $0x70] sm:$0xff]
        %v2350 = vld [vmem:[%s2334 + $0x78] sm:$0xff]
        %2351 = vmatprep.subr.mxu0 0.0
        %2352 = vmatpush1.msra.mxu0 %v2335
        %2353 = vmatprep.subr.mxu0 0.0
        %2354 = vmatpush1.msra.mxu0 %v2336
        %2355 = vmatprep.subr.mxu0 0.0
        %2356 = vmatpush1.msra.mxu0 %v2337
        %2357 = vmatprep.subr.mxu0 0.0
        %2358 = vmatpush1.msra.mxu0 %v2338
        %2359 = vmatprep.subr.mxu0 0.0
        %2360 = vmatpush1.msra.mxu0 %v2339
        %2361 = vmatprep.subr.mxu0 0.0
        %2362 = vmatpush1.msra.mxu0 %v2340
        %2363 = vmatprep.subr.mxu0 0.0
        %2364 = vmatpush1.msra.mxu0 %v2341
        %2365 = vmatprep.subr.mxu0 0.0
        %2366 = vmatpush1.msra.mxu0 %v2342
        %2367 = vmatprep.subr.mxu0 0.0
        %2368 = vmatpush1.msra.mxu0 %v2343
        %2369 = vmatprep.subr.mxu0 0.0
        %2370 = vmatpush1.msra.mxu0 %v2344
        %2371 = vmatprep.subr.mxu0 0.0
        %2372 = vmatpush1.msra.mxu0 %v2345
        %2373 = vmatprep.subr.mxu0 0.0
        %2374 = vmatpush1.msra.mxu0 %v2346
        %2375 = vmatprep.subr.mxu0 0.0
        %2376 = vmatpush1.msra.mxu0 %v2347
        %2377 = vmatprep.subr.mxu0 0.0
        %2378 = vmatpush1.msra.mxu0 %v2348
        %2379 = vmatprep.subr.mxu0 0.0
        %2380 = vmatpush1.msra.mxu0 %v2349
        %2381 = vmatprep.subr.mxu0 0.0
        %2382 = vmatpush1.msra.mxu0 %v2350
        %2383 = vmatprep.subr.mxu0 0.0
        %2384 = vmatpush1.msra.mxu0 0.0
        %2385 = vmatprep.subr.mxu0 0.0
        %2386 = vmatpush1.msra.mxu0 0.0
        %2387 = vmatprep.subr.mxu0 0.0
        %2388 = vmatpush1.msra.mxu0 0.0
        %2389 = vmatprep.subr.mxu0 0.0
        %2390 = vmatpush1.msra.mxu0 0.0
        %2391 = vmatprep.subr.mxu0 0.0
        %2392 = vmatpush1.msra.mxu0 0.0
        %2393 = vmatprep.subr.mxu0 0.0
        %2394 = vmatpush1.msra.mxu0 0.0
        %2395 = vmatprep.subr.mxu0 0.0
        %2396 = vmatpush1.msra.mxu0 0.0
        %2397 = vmatprep.subr.mxu0 0.0
        %2398 = vmatpush1.msra.mxu0 0.0
        %2399 = vmatprep.subr.mxu0 0.0
        %2400 = vmatpush1.msra.mxu0 0.0
        %2401 = vmatprep.subr.mxu0 0.0
        %2402 = vmatpush1.msra.mxu0 0.0
        %2403 = vmatprep.subr.mxu0 0.0
        %2404 = vmatpush1.msra.mxu0 0.0
        %2405 = vmatprep.subr.mxu0 0.0
        %2406 = vmatpush1.msra.mxu0 0.0
        %2407 = vmatprep.subr.mxu0 0.0
        %2408 = vmatpush1.msra.mxu0 0.0
        %2409 = vmatprep.subr.mxu0 0.0
        %2410 = vmatpush1.msra.mxu0 0.0
        %2411 = vmatprep.subr.mxu0 0.0
        %2412 = vmatpush1.msra.mxu0 0.0
        %2413 = vmatprep.subr.mxu0 0.0
        %2414 = vmatpush1.msra.mxu0 0.0
        %2415 = vmatprep.mubr.f32.mxu0 0.0
        %2416 = vmatmul.mubr.f32.gmra.mrb[0].mxu0 %v237
        %v2417 = vpop.f32.mrb[0].mxu0
        %v2418 = vadd.f32 %v308, %v2417
        %v2419 = vpop.f32.mrb[0].mxu0
        %2420 = vmatprep.mubr.f32.mxu0 0.0
        %2421 = vmatmul.mubr.f32.gmra.mrb[0].mxu0 %v238
        %v2422 = vpop.f32.mrb[0].mxu0
        %v2423 = vadd.f32 %v308, %v2422
        %v2424 = vpop.f32.mrb[0].mxu0
        %2425 = vmatprep.mubr.f32.mxu0 0.0
        %2426 = vmatmul.mubr.f32.gmra.mrb[0].mxu0 %v239
        %v2427 = vpop.f32.mrb[0].mxu0
        %v2428 = vadd.f32 %v308, %v2427
        %v2429 = vpop.f32.mrb[0].mxu0
        %2430 = vmatprep.mubr.f32.mxu0 0.0
        %2431 = vmatmul.mubr.f32.gmra.mrb[0].mxu0 %v240
        %v2432 = vpop.f32.mrb[0].mxu0
        %v2433 = vadd.f32 %v308, %v2432
        %v2434 = vpop.f32.mrb[0].mxu0
        %2435 = vmatprep.mubr.f32.mxu0 0.0
        %2436 = vmatmul.mubr.f32.gmra.mrb[0].mxu0 %v241
        %v2437 = vpop.f32.mrb[0].mxu0
        %v2438 = vadd.f32 %v308, %v2437
        %v2439 = vpop.f32.mrb[0].mxu0
        %2440 = vmatprep.mubr.f32.mxu0 0.0
        %2441 = vmatmul.mubr.f32.gmra.mrb[0].mxu0 %v242
        %v2442 = vpop.f32.mrb[0].mxu0
        %v2443 = vadd.f32 %v308, %v2442
        %v2444 = vpop.f32.mrb[0].mxu0
        %2445 = vmatprep.mubr.f32.mxu0 0.0
        %2446 = vmatmul.mubr.f32.gmra.mrb[0].mxu0 %v243
        %v2447 = vpop.f32.mrb[0].mxu0
        %v2448 = vadd.f32 %v308, %v2447
        %v2449 = vpop.f32.mrb[0].mxu0
        %2450 = vmatprep.mubr.f32.mxu0 0.0
        %2451 = vmatmul.mubr.f32.gmra.mrb[0].mxu0 %v244
        %v2452 = vpop.f32.mrb[0].mxu0
        %v2453 = vadd.f32 %v308, %v2452
        %v2454 = vpop.f32.mrb[0].mxu0
        %2455 = vmatprep.mubr.f32.mxu0 0.0
        %2456 = vmatmul.mubr.f32.gmra.mrb[0].mxu0 %v245
        %v2457 = vpop.f32.mrb[0].mxu0
        %v2458 = vadd.f32 %v308, %v2457
        %v2459 = vpop.f32.mrb[0].mxu0
        %2460 = vmatprep.mubr.f32.mxu0 0.0
        %2461 = vmatmul.mubr.f32.gmra.mrb[0].mxu0 %v246
        %v2462 = vpop.f32.mrb[0].mxu0
        %v2463 = vadd.f32 %v308, %v2462
        %v2464 = vpop.f32.mrb[0].mxu0
        %2465 = vmatprep.mubr.f32.mxu0 0.0
        %2466 = vmatmul.mubr.f32.gmra.mrb[0].mxu0 %v247
        %v2467 = vpop.f32.mrb[0].mxu0
        %v2468 = vadd.f32 %v308, %v2467
        %v2469 = vpop.f32.mrb[0].mxu0
        %2470 = vmatprep.mubr.f32.mxu0 0.0
        %2471 = vmatmul.mubr.f32.gmra.mrb[0].mxu0 %v248
        %v2472 = vpop.f32.mrb[0].mxu0
        %v2473 = vadd.f32 %v308, %v2472
        %v2474 = vpop.f32.mrb[0].mxu0
        %2475 = vmatprep.mubr.f32.mxu0 0.0
        %2476 = vmatmul.mubr.f32.gmra.mrb[0].mxu0 %v249
        %v2477 = vpop.f32.mrb[0].mxu0
        %v2478 = vadd.f32 %v308, %v2477
        %v2479 = vpop.f32.mrb[0].mxu0
        %2480 = vmatprep.mubr.f32.mxu0 0.0
        %2481 = vmatmul.mubr.f32.gmra.mrb[0].mxu0 %v250
        %v2482 = vpop.f32.mrb[0].mxu0
        %v2483 = vadd.f32 %v308, %v2482
        %v2484 = vpop.f32.mrb[0].mxu0
        %2485 = vmatprep.mubr.f32.mxu0 0.0
        %2486 = vmatmul.mubr.f32.gmra.mrb[0].mxu0 %v251
        %v2487 = vpop.f32.mrb[0].mxu0
        %v2488 = vadd.f32 %v308, %v2487
        %v2489 = vpop.f32.mrb[0].mxu0
        %2490 = vmatprep.mubr.f32.mxu0 0.0
        %2491 = vmatmul.mubr.f32.gmra.mrb[0].mxu0 %v252
        %v2492 = vpop.f32.mrb[0].mxu0
        %v2493 = vadd.f32 %v308, %v2492
        %v2494 = vpop.f32.mrb[0].mxu0
        %2495 = vmatprep.mubr.f32.mxu0 0.0
        %2496 = vmatmul.mubr.f32.gmra.mrb[0].mxu0 %v253
        %v2497 = vpop.f32.mrb[0].mxu0
        %v2498 = vadd.f32 %v308, %v2497
        %v2499 = vpop.f32.mrb[0].mxu0
        %2500 = vmatprep.mubr.f32.mxu0 0.0
        %2501 = vmatmul.mubr.f32.gmra.mrb[0].mxu0 %v254
        %v2502 = vpop.f32.mrb[0].mxu0
        %v2503 = vadd.f32 %v308, %v2502
        %v2504 = vpop.f32.mrb[0].mxu0
        %2505 = vmatprep.mubr.f32.mxu0 0.0
        %2506 = vmatmul.mubr.f32.gmra.mrb[0].mxu0 %v255
        %v2507 = vpop.f32.mrb[0].mxu0
        %v2508 = vadd.f32 %v308, %v2507
        %v2509 = vpop.f32.mrb[0].mxu0
        %2510 = vmatprep.mubr.f32.mxu0 0.0
        %2511 = vmatmul.mubr.f32.gmra.mrb[0].mxu0 %v256
        %v2512 = vpop.f32.mrb[0].mxu0
        %v2513 = vadd.f32 %v308, %v2512
        %v2514 = vpop.f32.mrb[0].mxu0
        %2515 = vmatprep.mubr.f32.mxu0 0.0
        %2516 = vmatmul.mubr.f32.gmra.mrb[0].mxu0 %v257
        %v2517 = vpop.f32.mrb[0].mxu0
        %v2518 = vadd.f32 %v308, %v2517
        %v2519 = vpop.f32.mrb[0].mxu0
        %2520 = vmatprep.mubr.f32.mxu0 0.0
        %2521 = vmatmul.mubr.f32.gmra.mrb[0].mxu0 %v258
        %v2522 = vpop.f32.mrb[0].mxu0
        %v2523 = vadd.f32 %v308, %v2522
        %v2524 = vpop.f32.mrb[0].mxu0
        %2525 = vmatprep.mubr.f32.mxu0 0.0
        %2526 = vmatmul.mubr.f32.gmra.mrb[0].mxu0 %v259
        %v2527 = vpop.f32.mrb[0].mxu0
        %v2528 = vadd.f32 %v308, %v2527
        %v2529 = vpop.f32.mrb[0].mxu0
        %2530 = vmatprep.mubr.f32.mxu0 0.0
        %2531 = vmatmul.mubr.f32.gmra.mrb[0].mxu0 %v260
        %v2532 = vpop.f32.mrb[0].mxu0
        %v2533 = vadd.f32 %v308, %v2532
        %v2534 = vpop.f32.mrb[0].mxu0
        %2535 = vmatprep.mubr.f32.mxu0 0.0
        %2536 = vmatmul.mubr.f32.gmra.mrb[0].mxu0 %v261
        %v2537 = vpop.f32.mrb[0].mxu0
        %v2538 = vadd.f32 %v308, %v2537
        %v2539 = vpop.f32.mrb[0].mxu0
        %2540 = vmatprep.mubr.f32.mxu0 0.0
        %2541 = vmatmul.mubr.f32.gmra.mrb[0].mxu0 %v262
        %v2542 = vpop.f32.mrb[0].mxu0
        %v2543 = vadd.f32 %v308, %v2542
        %v2544 = vpop.f32.mrb[0].mxu0
        %2545 = vmatprep.mubr.f32.mxu0 0.0
        %2546 = vmatmul.mubr.f32.gmra.mrb[0].mxu0 %v263
        %v2547 = vpop.f32.mrb[0].mxu0
        %v2548 = vadd.f32 %v308, %v2547
        %v2549 = vpop.f32.mrb[0].mxu0
        %2550 = vmatprep.mubr.f32.mxu0 0.0
        %2551 = vmatmul.mubr.f32.gmra.mrb[0].mxu0 %v264
        %v2552 = vpop.f32.mrb[0].mxu0
        %v2553 = vadd.f32 %v308, %v2552
        %v2554 = vpop.f32.mrb[0].mxu0
        %2555 = vmatprep.mubr.f32.mxu0 0.0
        %2556 = vmatmul.mubr.f32.gmra.mrb[0].mxu0 %v265
        %v2557 = vpop.f32.mrb[0].mxu0
        %v2558 = vadd.f32 %v308, %v2557
        %v2559 = vpop.f32.mrb[0].mxu0
        %2560 = vmatprep.mubr.f32.mxu0 0.0
        %2561 = vmatmul.mubr.f32.gmra.mrb[0].mxu0 %v266
        %v2562 = vpop.f32.mrb[0].mxu0
        %v2563 = vadd.f32 %v308, %v2562
        %v2564 = vpop.f32.mrb[0].mxu0
        %2565 = vmatprep.mubr.f32.mxu0 0.0
        %2566 = vmatmul.mubr.f32.gmra.mrb[0].mxu0 %v267
        %v2567 = vpop.f32.mrb[0].mxu0
        %v2568 = vadd.f32 %v308, %v2567
        %v2569 = vpop.f32.mrb[0].mxu0
        %2570 = vmatprep.mubr.f32.mxu0 0.0
        %2571 = vmatmul.mubr.f32.gmra.mrb[0].mxu0 %v268
        %v2572 = vpop.f32.mrb[0].mxu0
        %v2573 = vadd.f32 %v308, %v2572
        %v2574 = vpop.f32.mrb[0].mxu0
        %2575 = vmatprep.mubr.f32.mxu0 0.0
        %2576 = vmatmul.mubr.f32.gmra.mrb[0].mxu0 %v269
        %v2577 = vpop.f32.mrb[0].mxu0
        %v2578 = vadd.f32 %v308, %v2577
        %v2579 = vpop.f32.mrb[0].mxu0
        %2580 = vmatprep.mubr.f32.mxu0 0.0
        %2581 = vmatmul.mubr.f32.gmra.mrb[0].mxu0 %v270
        %v2582 = vpop.f32.mrb[0].mxu0
        %v2583 = vadd.f32 %v308, %v2582
        %v2584 = vpop.f32.mrb[0].mxu0
        %2585 = vmatprep.mubr.f32.mxu0 0.0
        %2586 = vmatmul.mubr.f32.gmra.mrb[0].mxu0 %v271
        %v2587 = vpop.f32.mrb[0].mxu0
        %v2588 = vadd.f32 %v308, %v2587
        %v2589 = vpop.f32.mrb[0].mxu0
        %2590 = vmatprep.mubr.f32.mxu0 0.0
        %2591 = vmatmul.mubr.f32.gmra.mrb[0].mxu0 %v272
        %v2592 = vpop.f32.mrb[0].mxu0
        %v2593 = vadd.f32 %v308, %v2592
        %v2594 = vpop.f32.mrb[0].mxu0
        %2595 = vmatprep.mubr.f32.mxu0 0.0
        %2596 = vmatmul.mubr.f32.gmra.mrb[0].mxu0 %v273
        %v2597 = vpop.f32.mrb[0].mxu0
        %v2598 = vadd.f32 %v308, %v2597
        %v2599 = vpop.f32.mrb[0].mxu0
        %2600 = vmatprep.mubr.f32.mxu0 0.0
        %2601 = vmatmul.mubr.f32.gmra.mrb[0].mxu0 %v274
        %v2602 = vpop.f32.mrb[0].mxu0
        %v2603 = vadd.f32 %v308, %v2602
        %v2604 = vpop.f32.mrb[0].mxu0
        %2605 = vmatprep.mubr.f32.mxu0 0.0
        %2606 = vmatmul.mubr.f32.gmra.mrb[0].mxu0 %v275
        %v2607 = vpop.f32.mrb[0].mxu0
        %v2608 = vadd.f32 %v308, %v2607
        %v2609 = vpop.f32.mrb[0].mxu0
        %2610 = vmatprep.mubr.f32.mxu0 0.0
        %2611 = vmatmul.mubr.f32.gmra.mrb[0].mxu0 %v276
        %v2612 = vpop.f32.mrb[0].mxu0
        %v2613 = vadd.f32 %v308, %v2612
        %v2614 = vpop.f32.mrb[0].mxu0
        %2615 = vmatprep.mubr.f32.mxu0 0.0
        %2616 = vmatmul.mubr.f32.gmra.mrb[0].mxu0 %v277
        %v2617 = vpop.f32.mrb[0].mxu0
        %v2618 = vadd.f32 %v308, %v2617
        %v2619 = vpop.f32.mrb[0].mxu0
        %2620 = vmatprep.mubr.f32.mxu0 0.0
        %2621 = vmatmul.mubr.f32.gmra.mrb[0].mxu0 %v278
        %v2622 = vpop.f32.mrb[0].mxu0
        %v2623 = vadd.f32 %v308, %v2622
        %v2624 = vpop.f32.mrb[0].mxu0
        %2625 = vmatprep.mubr.f32.mxu0 0.0
        %2626 = vmatmul.mubr.f32.gmra.mrb[0].mxu0 %v279
        %v2627 = vpop.f32.mrb[0].mxu0
        %v2628 = vadd.f32 %v308, %v2627
        %v2629 = vpop.f32.mrb[0].mxu0
        %2630 = vmatprep.mubr.f32.mxu0 0.0
        %2631 = vmatmul.mubr.f32.gmra.mrb[0].mxu0 %v280
        %v2632 = vpop.f32.mrb[0].mxu0
        %v2633 = vadd.f32 %v308, %v2632
        %v2634 = vpop.f32.mrb[0].mxu0
        %2635 = vmatprep.mubr.f32.mxu0 0.0
        %2636 = vmatmul.mubr.f32.gmra.mrb[0].mxu0 %v281
        %v2637 = vpop.f32.mrb[0].mxu0
        %v2638 = vadd.f32 %v308, %v2637
        %v2639 = vpop.f32.mrb[0].mxu0
        %2640 = vmatprep.mubr.f32.mxu0 0.0
        %2641 = vmatmul.mubr.f32.gmra.mrb[0].mxu0 %v282
        %v2642 = vpop.f32.mrb[0].mxu0
        %v2643 = vadd.f32 %v308, %v2642
        %v2644 = vpop.f32.mrb[0].mxu0
        %2645 = vmatprep.mubr.f32.mxu0 0.0
        %2646 = vmatmul.mubr.f32.gmra.mrb[0].mxu0 %v283
        %v2647 = vpop.f32.mrb[0].mxu0
        %v2648 = vadd.f32 %v308, %v2647
        %v2649 = vpop.f32.mrb[0].mxu0
        %2650 = vmatprep.mubr.f32.mxu0 0.0
        %2651 = vmatmul.mubr.f32.gmra.mrb[0].mxu0 %v284
        %v2652 = vpop.f32.mrb[0].mxu0
        %v2653 = vadd.f32 %v308, %v2652
        %v2654 = vpop.f32.mrb[0].mxu0
        %2655 = vmatprep.mubr.f32.mxu0 0.0
        %2656 = vmatmul.mubr.f32.gmra.mrb[0].mxu0 %v285
        %v2657 = vpop.f32.mrb[0].mxu0
        %v2658 = vadd.f32 %v308, %v2657
        %v2659 = vpop.f32.mrb[0].mxu0
        %2660 = vmatprep.mubr.f32.mxu0 0.0
        %2661 = vmatmul.mubr.f32.gmra.mrb[0].mxu0 %v286
        %v2662 = vpop.f32.mrb[0].mxu0
        %v2663 = vadd.f32 %v308, %v2662
        %v2664 = vpop.f32.mrb[0].mxu0
        %2665 = vdwg.mxu0
        %s2666 = scalar_lea.vmem [#allocation2], 384
        %v2667 = vld [vmem:[%s2666] sm:$0xff]
        %v2668 = vld [vmem:[%s2666 + $0x8] sm:$0xff]
        %v2669 = vld [vmem:[%s2666 + $0x10] sm:$0xff]
        %v2670 = vld [vmem:[%s2666 + $0x18] sm:$0xff]
        %v2671 = vld [vmem:[%s2666 + $0x20] sm:$0xff]
        %v2672 = vld [vmem:[%s2666 + $0x28] sm:$0xff]
        %v2673 = vld [vmem:[%s2666 + $0x30] sm:$0xff]
        %v2674 = vld [vmem:[%s2666 + $0x38] sm:$0xff]
        %v2675 = vld [vmem:[%s2666 + $0x40] sm:$0xff]
        %v2676 = vld [vmem:[%s2666 + $0x48] sm:$0xff]
        %v2677 = vld [vmem:[%s2666 + $0x50] sm:$0xff]
        %v2678 = vld [vmem:[%s2666 + $0x58] sm:$0xff]
        %v2679 = vld [vmem:[%s2666 + $0x60] sm:$0xff]
        %v2680 = vld [vmem:[%s2666 + $0x68] sm:$0xff]
        %v2681 = vld [vmem:[%s2666 + $0x70] sm:$0xff]
        %v2682 = vld [vmem:[%s2666 + $0x78] sm:$0xff]
        %2683 = vmatprep.subr.mxu0 0.0
        %2684 = vmatpush1.msra.mxu0 %v2667
        %2685 = vmatprep.subr.mxu0 0.0
        %2686 = vmatpush1.msra.mxu0 %v2668
        %2687 = vmatprep.subr.mxu0 0.0
        %2688 = vmatpush1.msra.mxu0 %v2669
        %2689 = vmatprep.subr.mxu0 0.0
        %2690 = vmatpush1.msra.mxu0 %v2670
        %2691 = vmatprep.subr.mxu0 0.0
        %2692 = vmatpush1.msra.mxu0 %v2671
        %2693 = vmatprep.subr.mxu0 0.0
        %2694 = vmatpush1.msra.mxu0 %v2672
        %2695 = vmatprep.subr.mxu0 0.0
        %2696 = vmatpush1.msra.mxu0 %v2673
        %2697 = vmatprep.subr.mxu0 0.0
        %2698 = vmatpush1.msra.mxu0 %v2674
        %2699 = vmatprep.subr.mxu0 0.0
        %2700 = vmatpush1.msra.mxu0 %v2675
        %2701 = vmatprep.subr.mxu0 0.0
        %2702 = vmatpush1.msra.mxu0 %v2676
        %2703 = vmatprep.subr.mxu0 0.0
        %2704 = vmatpush1.msra.mxu0 %v2677
        %2705 = vmatprep.subr.mxu0 0.0
        %2706 = vmatpush1.msra.mxu0 %v2678
        %2707 = vmatprep.subr.mxu0 0.0
        %2708 = vmatpush1.msra.mxu0 %v2679
        %2709 = vmatprep.subr.mxu0 0.0
        %2710 = vmatpush1.msra.mxu0 %v2680
        %2711 = vmatprep.subr.mxu0 0.0
        %2712 = vmatpush1.msra.mxu0 %v2681
        %2713 = vmatprep.subr.mxu0 0.0
        %2714 = vmatpush1.msra.mxu0 %v2682
        %2715 = vmatprep.subr.mxu0 0.0
        %2716 = vmatpush1.msra.mxu0 0.0
        %2717 = vmatprep.subr.mxu0 0.0
        %2718 = vmatpush1.msra.mxu0 0.0
        %2719 = vmatprep.subr.mxu0 0.0
        %2720 = vmatpush1.msra.mxu0 0.0
        %2721 = vmatprep.subr.mxu0 0.0
        %2722 = vmatpush1.msra.mxu0 0.0
        %2723 = vmatprep.subr.mxu0 0.0
        %2724 = vmatpush1.msra.mxu0 0.0
        %2725 = vmatprep.subr.mxu0 0.0
        %2726 = vmatpush1.msra.mxu0 0.0
        %2727 = vmatprep.subr.mxu0 0.0
        %2728 = vmatpush1.msra.mxu0 0.0
        %2729 = vmatprep.subr.mxu0 0.0
        %2730 = vmatpush1.msra.mxu0 0.0
        %2731 = vmatprep.subr.mxu0 0.0
        %2732 = vmatpush1.msra.mxu0 0.0
        %2733 = vmatprep.subr.mxu0 0.0
        %2734 = vmatpush1.msra.mxu0 0.0
        %2735 = vmatprep.subr.mxu0 0.0
        %2736 = vmatpush1.msra.mxu0 0.0
        %2737 = vmatprep.subr.mxu0 0.0
        %2738 = vmatpush1.msra.mxu0 0.0
        %2739 = vmatprep.subr.mxu0 0.0
        %2740 = vmatpush1.msra.mxu0 0.0
        %2741 = vmatprep.subr.mxu0 0.0
        %2742 = vmatpush1.msra.mxu0 0.0
        %2743 = vmatprep.subr.mxu0 0.0
        %2744 = vmatpush1.msra.mxu0 0.0
        %2745 = vmatprep.subr.mxu0 0.0
        %2746 = vmatpush1.msra.mxu0 0.0
        %2747 = vmatprep.mubr.f32.mxu0 0.0
        %2748 = vmatmul.mubr.f32.gmra.mrb[0].mxu0 %v2418
        %v2749 = vpop.f32.mrb[0].mxu0
        %v2750 = vadd.f32 0.0, %v2749
        %v2751 = vpop.f32.mrb[0].mxu0
        %2752 = vmatprep.mubr.f32.mxu0 0.0
        %2753 = vmatmul.mubr.f32.gmra.mrb[0].mxu0 %v2423
        %v2754 = vpop.f32.mrb[0].mxu0
        %v2755 = vadd.f32 0.0, %v2754
        %v2756 = vpop.f32.mrb[0].mxu0
        %2757 = vmatprep.mubr.f32.mxu0 0.0
        %2758 = vmatmul.mubr.f32.gmra.mrb[0].mxu0 %v2428
        %v2759 = vpop.f32.mrb[0].mxu0
        %v2760 = vadd.f32 0.0, %v2759
        %v2761 = vpop.f32.mrb[0].mxu0
        %2762 = vmatprep.mubr.f32.mxu0 0.0
        %2763 = vmatmul.mubr.f32.gmra.mrb[0].mxu0 %v2433
        %v2764 = vpop.f32.mrb[0].mxu0
        %v2765 = vadd.f32 0.0, %v2764
        %v2766 = vpop.f32.mrb[0].mxu0
        %2767 = vmatprep.mubr.f32.mxu0 0.0
        %2768 = vmatmul.mubr.f32.gmra.mrb[0].mxu0 %v2438
        %v2769 = vpop.f32.mrb[0].mxu0
        %v2770 = vadd.f32 0.0, %v2769
        %v2771 = vpop.f32.mrb[0].mxu0
        %2772 = vmatprep.mubr.f32.mxu0 0.0
        %2773 = vmatmul.mubr.f32.gmra.mrb[0].mxu0 %v2443
        %v2774 = vpop.f32.mrb[0].mxu0
        %v2775 = vadd.f32 0.0, %v2774
        %v2776 = vpop.f32.mrb[0].mxu0
        %2777 = vmatprep.mubr.f32.mxu0 0.0
        %2778 = vmatmul.mubr.f32.gmra.mrb[0].mxu0 %v2448
        %v2779 = vpop.f32.mrb[0].mxu0
        %v2780 = vadd.f32 0.0, %v2779
        %v2781 = vpop.f32.mrb[0].mxu0
        %2782 = vmatprep.mubr.f32.mxu0 0.0
        %2783 = vmatmul.mubr.f32.gmra.mrb[0].mxu0 %v2453
        %v2784 = vpop.f32.mrb[0].mxu0
        %v2785 = vadd.f32 0.0, %v2784
        %v2786 = vpop.f32.mrb[0].mxu0
        %2787 = vmatprep.mubr.f32.mxu0 0.0
        %2788 = vmatmul.mubr.f32.gmra.mrb[0].mxu0 %v2458
        %v2789 = vpop.f32.mrb[0].mxu0
        %v2790 = vadd.f32 0.0, %v2789
        %v2791 = vpop.f32.mrb[0].mxu0
        %2792 = vmatprep.mubr.f32.mxu0 0.0
        %2793 = vmatmul.mubr.f32.gmra.mrb[0].mxu0 %v2463
        %v2794 = vpop.f32.mrb[0].mxu0
        %v2795 = vadd.f32 0.0, %v2794
        %v2796 = vpop.f32.mrb[0].mxu0
        %2797 = vmatprep.mubr.f32.mxu0 0.0
        %2798 = vmatmul.mubr.f32.gmra.mrb[0].mxu0 %v2468
        %v2799 = vpop.f32.mrb[0].mxu0
        %v2800 = vadd.f32 0.0, %v2799
        %v2801 = vpop.f32.mrb[0].mxu0
        %2802 = vmatprep.mubr.f32.mxu0 0.0
        %2803 = vmatmul.mubr.f32.gmra.mrb[0].mxu0 %v2473
        %v2804 = vpop.f32.mrb[0].mxu0
        %v2805 = vadd.f32 0.0, %v2804
        %v2806 = vpop.f32.mrb[0].mxu0
        %2807 = vmatprep.mubr.f32.mxu0 0.0
        %2808 = vmatmul.mubr.f32.gmra.mrb[0].mxu0 %v2478
        %v2809 = vpop.f32.mrb[0].mxu0
        %v2810 = vadd.f32 0.0, %v2809
        %v2811 = vpop.f32.mrb[0].mxu0
        %2812 = vmatprep.mubr.f32.mxu0 0.0
        %2813 = vmatmul.mubr.f32.gmra.mrb[0].mxu0 %v2483
        %v2814 = vpop.f32.mrb[0].mxu0
        %v2815 = vadd.f32 0.0, %v2814
        %v2816 = vpop.f32.mrb[0].mxu0
        %2817 = vmatprep.mubr.f32.mxu0 0.0
        %2818 = vmatmul.mubr.f32.gmra.mrb[0].mxu0 %v2488
        %v2819 = vpop.f32.mrb[0].mxu0
        %v2820 = vadd.f32 0.0, %v2819
        %v2821 = vpop.f32.mrb[0].mxu0
        %2822 = vmatprep.mubr.f32.mxu0 0.0
        %2823 = vmatmul.mubr.f32.gmra.mrb[0].mxu0 %v2493
        %v2824 = vpop.f32.mrb[0].mxu0
        %v2825 = vadd.f32 0.0, %v2824
        %v2826 = vpop.f32.mrb[0].mxu0
        %2827 = vmatprep.mubr.f32.mxu0 0.0
        %2828 = vmatmul.mubr.f32.gmra.mrb[0].mxu0 %v2498
        %v2829 = vpop.f32.mrb[0].mxu0
        %v2830 = vadd.f32 0.0, %v2829
        %v2831 = vpop.f32.mrb[0].mxu0
        %2832 = vmatprep.mubr.f32.mxu0 0.0
        %2833 = vmatmul.mubr.f32.gmra.mrb[0].mxu0 %v2503
        %v2834 = vpop.f32.mrb[0].mxu0
        %v2835 = vadd.f32 0.0, %v2834
        %v2836 = vpop.f32.mrb[0].mxu0
        %2837 = vmatprep.mubr.f32.mxu0 0.0
        %2838 = vmatmul.mubr.f32.gmra.mrb[0].mxu0 %v2508
        %v2839 = vpop.f32.mrb[0].mxu0
        %v2840 = vadd.f32 0.0, %v2839
        %v2841 = vpop.f32.mrb[0].mxu0
        %2842 = vmatprep.mubr.f32.mxu0 0.0
        %2843 = vmatmul.mubr.f32.gmra.mrb[0].mxu0 %v2513
        %v2844 = vpop.f32.mrb[0].mxu0
        %v2845 = vadd.f32 0.0, %v2844
        %v2846 = vpop.f32.mrb[0].mxu0
        %2847 = vmatprep.mubr.f32.mxu0 0.0
        %2848 = vmatmul.mubr.f32.gmra.mrb[0].mxu0 %v2518
        %v2849 = vpop.f32.mrb[0].mxu0
        %v2850 = vadd.f32 0.0, %v2849
        %v2851 = vpop.f32.mrb[0].mxu0
        %2852 = vmatprep.mubr.f32.mxu0 0.0
        %2853 = vmatmul.mubr.f32.gmra.mrb[0].mxu0 %v2523
        %v2854 = vpop.f32.mrb[0].mxu0
        %v2855 = vadd.f32 0.0, %v2854
        %v2856 = vpop.f32.mrb[0].mxu0
        %2857 = vmatprep.mubr.f32.mxu0 0.0
        %2858 = vmatmul.mubr.f32.gmra.mrb[0].mxu0 %v2528
        %v2859 = vpop.f32.mrb[0].mxu0
        %v2860 = vadd.f32 0.0, %v2859
        %v2861 = vpop.f32.mrb[0].mxu0
        %2862 = vmatprep.mubr.f32.mxu0 0.0
        %2863 = vmatmul.mubr.f32.gmra.mrb[0].mxu0 %v2533
        %v2864 = vpop.f32.mrb[0].mxu0
        %v2865 = vadd.f32 0.0, %v2864
        %v2866 = vpop.f32.mrb[0].mxu0
        %2867 = vmatprep.mubr.f32.mxu0 0.0
        %2868 = vmatmul.mubr.f32.gmra.mrb[0].mxu0 %v2538
        %v2869 = vpop.f32.mrb[0].mxu0
        %v2870 = vadd.f32 0.0, %v2869
        %v2871 = vpop.f32.mrb[0].mxu0
        %2872 = vmatprep.mubr.f32.mxu0 0.0
        %2873 = vmatmul.mubr.f32.gmra.mrb[0].mxu0 %v2543
        %v2874 = vpop.f32.mrb[0].mxu0
        %v2875 = vadd.f32 0.0, %v2874
        %v2876 = vpop.f32.mrb[0].mxu0
        %2877 = vmatprep.mubr.f32.mxu0 0.0
        %2878 = vmatmul.mubr.f32.gmra.mrb[0].mxu0 %v2548
        %v2879 = vpop.f32.mrb[0].mxu0
        %v2880 = vadd.f32 0.0, %v2879
        %v2881 = vpop.f32.mrb[0].mxu0
        %2882 = vmatprep.mubr.f32.mxu0 0.0
        %2883 = vmatmul.mubr.f32.gmra.mrb[0].mxu0 %v2553
        %v2884 = vpop.f32.mrb[0].mxu0
        %v2885 = vadd.f32 0.0, %v2884
        %v2886 = vpop.f32.mrb[0].mxu0
        %2887 = vmatprep.mubr.f32.mxu0 0.0
        %2888 = vmatmul.mubr.f32.gmra.mrb[0].mxu0 %v2558
        %v2889 = vpop.f32.mrb[0].mxu0
        %v2890 = vadd.f32 0.0, %v2889
        %v2891 = vpop.f32.mrb[0].mxu0
        %2892 = vmatprep.mubr.f32.mxu0 0.0
        %2893 = vmatmul.mubr.f32.gmra.mrb[0].mxu0 %v2563
        %v2894 = vpop.f32.mrb[0].mxu0
        %v2895 = vadd.f32 0.0, %v2894
        %v2896 = vpop.f32.mrb[0].mxu0
        %2897 = vmatprep.mubr.f32.mxu0 0.0
        %2898 = vmatmul.mubr.f32.gmra.mrb[0].mxu0 %v2568
        %v2899 = vpop.f32.mrb[0].mxu0
        %v2900 = vadd.f32 0.0, %v2899
        %v2901 = vpop.f32.mrb[0].mxu0
        %2902 = vmatprep.mubr.f32.mxu0 0.0
        %2903 = vmatmul.mubr.f32.gmra.mrb[0].mxu0 %v2573
        %v2904 = vpop.f32.mrb[0].mxu0
        %v2905 = vadd.f32 0.0, %v2904
        %v2906 = vpop.f32.mrb[0].mxu0
        %2907 = vmatprep.mubr.f32.mxu0 0.0
        %2908 = vmatmul.mubr.f32.gmra.mrb[0].mxu0 %v2578
        %v2909 = vpop.f32.mrb[0].mxu0
        %v2910 = vadd.f32 0.0, %v2909
        %v2911 = vpop.f32.mrb[0].mxu0
        %2912 = vmatprep.mubr.f32.mxu0 0.0
        %2913 = vmatmul.mubr.f32.gmra.mrb[0].mxu0 %v2583
        %v2914 = vpop.f32.mrb[0].mxu0
        %v2915 = vadd.f32 0.0, %v2914
        %v2916 = vpop.f32.mrb[0].mxu0
        %2917 = vmatprep.mubr.f32.mxu0 0.0
        %2918 = vmatmul.mubr.f32.gmra.mrb[0].mxu0 %v2588
        %v2919 = vpop.f32.mrb[0].mxu0
        %v2920 = vadd.f32 0.0, %v2919
        %v2921 = vpop.f32.mrb[0].mxu0
        %2922 = vmatprep.mubr.f32.mxu0 0.0
        %2923 = vmatmul.mubr.f32.gmra.mrb[0].mxu0 %v2593
        %v2924 = vpop.f32.mrb[0].mxu0
        %v2925 = vadd.f32 0.0, %v2924
        %v2926 = vpop.f32.mrb[0].mxu0
        %2927 = vmatprep.mubr.f32.mxu0 0.0
        %2928 = vmatmul.mubr.f32.gmra.mrb[0].mxu0 %v2598
        %v2929 = vpop.f32.mrb[0].mxu0
        %v2930 = vadd.f32 0.0, %v2929
        %v2931 = vpop.f32.mrb[0].mxu0
        %2932 = vmatprep.mubr.f32.mxu0 0.0
        %2933 = vmatmul.mubr.f32.gmra.mrb[0].mxu0 %v2603
        %v2934 = vpop.f32.mrb[0].mxu0
        %v2935 = vadd.f32 0.0, %v2934
        %v2936 = vpop.f32.mrb[0].mxu0
        %2937 = vmatprep.mubr.f32.mxu0 0.0
        %2938 = vmatmul.mubr.f32.gmra.mrb[0].mxu0 %v2608
        %v2939 = vpop.f32.mrb[0].mxu0
        %v2940 = vadd.f32 0.0, %v2939
        %v2941 = vpop.f32.mrb[0].mxu0
        %2942 = vmatprep.mubr.f32.mxu0 0.0
        %2943 = vmatmul.mubr.f32.gmra.mrb[0].mxu0 %v2613
        %v2944 = vpop.f32.mrb[0].mxu0
        %v2945 = vadd.f32 0.0, %v2944
        %v2946 = vpop.f32.mrb[0].mxu0
        %2947 = vmatprep.mubr.f32.mxu0 0.0
        %2948 = vmatmul.mubr.f32.gmra.mrb[0].mxu0 %v2618
        %v2949 = vpop.f32.mrb[0].mxu0
        %v2950 = vadd.f32 0.0, %v2949
        %v2951 = vpop.f32.mrb[0].mxu0
        %2952 = vmatprep.mubr.f32.mxu0 0.0
        %2953 = vmatmul.mubr.f32.gmra.mrb[0].mxu0 %v2623
        %v2954 = vpop.f32.mrb[0].mxu0
        %v2955 = vadd.f32 0.0, %v2954
        %v2956 = vpop.f32.mrb[0].mxu0
        %2957 = vmatprep.mubr.f32.mxu0 0.0
        %2958 = vmatmul.mubr.f32.gmra.mrb[0].mxu0 %v2628
        %v2959 = vpop.f32.mrb[0].mxu0
        %v2960 = vadd.f32 0.0, %v2959
        %v2961 = vpop.f32.mrb[0].mxu0
        %2962 = vmatprep.mubr.f32.mxu0 0.0
        %2963 = vmatmul.mubr.f32.gmra.mrb[0].mxu0 %v2633
        %v2964 = vpop.f32.mrb[0].mxu0
        %v2965 = vadd.f32 0.0, %v2964
        %v2966 = vpop.f32.mrb[0].mxu0
        %2967 = vmatprep.mubr.f32.mxu0 0.0
        %2968 = vmatmul.mubr.f32.gmra.mrb[0].mxu0 %v2638
        %v2969 = vpop.f32.mrb[0].mxu0
        %v2970 = vadd.f32 0.0, %v2969
        %v2971 = vpop.f32.mrb[0].mxu0
        %2972 = vmatprep.mubr.f32.mxu0 0.0
        %2973 = vmatmul.mubr.f32.gmra.mrb[0].mxu0 %v2643
        %v2974 = vpop.f32.mrb[0].mxu0
        %v2975 = vadd.f32 0.0, %v2974
        %v2976 = vpop.f32.mrb[0].mxu0
        %2977 = vmatprep.mubr.f32.mxu0 0.0
        %2978 = vmatmul.mubr.f32.gmra.mrb[0].mxu0 %v2648
        %v2979 = vpop.f32.mrb[0].mxu0
        %v2980 = vadd.f32 0.0, %v2979
        %v2981 = vpop.f32.mrb[0].mxu0
        %2982 = vmatprep.mubr.f32.mxu0 0.0
        %2983 = vmatmul.mubr.f32.gmra.mrb[0].mxu0 %v2653
        %v2984 = vpop.f32.mrb[0].mxu0
        %v2985 = vadd.f32 0.0, %v2984
        %v2986 = vpop.f32.mrb[0].mxu0
        %2987 = vmatprep.mubr.f32.mxu0 0.0
        %2988 = vmatmul.mubr.f32.gmra.mrb[0].mxu0 %v2658
        %v2989 = vpop.f32.mrb[0].mxu0
        %v2990 = vadd.f32 0.0, %v2989
        %v2991 = vpop.f32.mrb[0].mxu0
        %2992 = vmatprep.mubr.f32.mxu0 0.0
        %2993 = vmatmul.mubr.f32.gmra.mrb[0].mxu0 %v2663
        %v2994 = vpop.f32.mrb[0].mxu0
        %v2995 = vadd.f32 0.0, %v2994
        %v2996 = vpop.f32.mrb[0].mxu0
        %2997 = vdwg.mxu0
        %v2998 = vadd.f32 %v2284, %v2750
        %v2999 = vadd.f32 %v2285, %v2755
        %v3000 = vadd.f32 %v2286, %v2760
        %v3001 = vadd.f32 %v2287, %v2765
        %v3002 = vadd.f32 %v2288, %v2770
        %v3003 = vadd.f32 %v2289, %v2775
        %v3004 = vadd.f32 %v2290, %v2780
        %v3005 = vadd.f32 %v2291, %v2785
        %v3006 = vadd.f32 %v2292, %v2790
        %v3007 = vadd.f32 %v2293, %v2795
        %v3008 = vadd.f32 %v2294, %v2800
        %v3009 = vadd.f32 %v2295, %v2805
        %v3010 = vadd.f32 %v2296, %v2810
        %v3011 = vadd.f32 %v2297, %v2815
        %v3012 = vadd.f32 %v2298, %v2820
        %v3013 = vadd.f32 %v2299, %v2825
        %v3014 = vadd.f32 %v2300, %v2830
        %v3015 = vadd.f32 %v2301, %v2835
        %v3016 = vadd.f32 %v2302, %v2840
        %v3017 = vadd.f32 %v2303, %v2845
        %v3018 = vadd.f32 %v2304, %v2850
        %v3019 = vadd.f32 %v2305, %v2855
        %v3020 = vadd.f32 %v2306, %v2860
        %v3021 = vadd.f32 %v2307, %v2865
        %v3022 = vadd.f32 %v2308, %v2870
        %v3023 = vadd.f32 %v2309, %v2875
        %v3024 = vadd.f32 %v2310, %v2880
        %v3025 = vadd.f32 %v2311, %v2885
        %v3026 = vadd.f32 %v2312, %v2890
        %v3027 = vadd.f32 %v2313, %v2895
        %v3028 = vadd.f32 %v2314, %v2900
        %v3029 = vadd.f32 %v2315, %v2905
        %v3030 = vadd.f32 %v2316, %v2910
        %v3031 = vadd.f32 %v2317, %v2915
        %v3032 = vadd.f32 %v2318, %v2920
        %v3033 = vadd.f32 %v2319, %v2925
        %v3034 = vadd.f32 %v2320, %v2930
        %v3035 = vadd.f32 %v2321, %v2935
        %v3036 = vadd.f32 %v2322, %v2940
        %v3037 = vadd.f32 %v2323, %v2945
        %v3038 = vadd.f32 %v2324, %v2950
        %v3039 = vadd.f32 %v2325, %v2955
        %v3040 = vadd.f32 %v2326, %v2960
        %v3041 = vadd.f32 %v2327, %v2965
        %v3042 = vadd.f32 %v2328, %v2970
        %v3043 = vadd.f32 %v2329, %v2975
        %v3044 = vadd.f32 %v2330, %v2980
        %v3045 = vadd.f32 %v2331, %v2985
        %v3046 = vadd.f32 %v2332, %v2990
        %v3047 = vadd.f32 %v2333, %v2995
        %v3048 = vlaneseq
        %v3049 = vand.u32 %v3048, 127
        %v3050 = vld [vmem:[%s4] sm:$0xff]
        %v3051 = vld [vmem:[%s4 + $0x8] sm:$0xff]
        %v3052 = vld [vmem:[%s4 + $0x10] sm:$0xff]
        %v3053 = vld [vmem:[%s4 + $0x18] sm:$0xff]
        %v3054 = vld [vmem:[%s4 + $0x20] sm:$0xff]
        %v3055 = vld [vmem:[%s4 + $0x28] sm:$0xff]
        %v3056 = vld [vmem:[%s4 + $0x30] sm:$0xff]
        %v3057 = vld [vmem:[%s4 + $0x38] sm:$0xff]
        %v3058 = vld [vmem:[%s4 + $0x40] sm:$0xff]
        %v3059 = vld [vmem:[%s4 + $0x48] sm:$0xff]
        %v3060 = vld [vmem:[%s4 + $0x50] sm:$0xff]
        %v3061 = vld [vmem:[%s4 + $0x58] sm:$0xff]
        %v3062 = vld [vmem:[%s4 + $0x60] sm:$0xff]
        %v3063 = vld [vmem:[%s4 + $0x68] sm:$0xff]
        %v3064 = vld [vmem:[%s4 + $0x70] sm:$0xff]
        %v3065 = vld [vmem:[%s4 + $0x78] sm:$0xff]
        %v3066 = vld [vmem:[%s4 + $0x80] sm:$0xff]
        %v3067 = vld [vmem:[%s4 + $0x88] sm:$0xff]
        %v3068 = vld [vmem:[%s4 + $0x90] sm:$0xff]
        %v3069 = vld [vmem:[%s4 + $0x98] sm:$0xff]
        %v3070 = vld [vmem:[%s4 + $0xa0] sm:$0xff]
        %v3071 = vld [vmem:[%s4 + $0xa8] sm:$0xff]
        %v3072 = vld [vmem:[%s4 + $0xb0] sm:$0xff]
        %v3073 = vld [vmem:[%s4 + $0xb8] sm:$0xff]
        %v3074 = vld [vmem:[%s4 + $0xc0] sm:$0xff]
        %v3075 = vld [vmem:[%s4 + $0xc8] sm:$0xff]
        %v3076 = vld [vmem:[%s4 + $0xd0] sm:$0xff]
        %v3077 = vld [vmem:[%s4 + $0xd8] sm:$0xff]
        %v3078 = vld [vmem:[%s4 + $0xe0] sm:$0xff]
        %v3079 = vld [vmem:[%s4 + $0xe8] sm:$0xff]
        %v3080 = vld [vmem:[%s4 + $0xf0] sm:$0xff]
        %v3081 = vld [vmem:[%s4 + $0xf8] sm:$0xff]
        %v3082 = vld [vmem:[%s4 + $0x100] sm:$0xff]
        %v3083 = vld [vmem:[%s4 + $0x108] sm:$0xff]
        %v3084 = vld [vmem:[%s4 + $0x110] sm:$0xff]
        %v3085 = vld [vmem:[%s4 + $0x118] sm:$0xff]
        %v3086 = vld [vmem:[%s4 + $0x120] sm:$0xff]
        %v3087 = vld [vmem:[%s4 + $0x128] sm:$0xff]
        %v3088 = vld [vmem:[%s4 + $0x130] sm:$0xff]
        %v3089 = vld [vmem:[%s4 + $0x138] sm:$0xff]
        %v3090 = vld [vmem:[%s4 + $0x140] sm:$0xff]
        %v3091 = vld [vmem:[%s4 + $0x148] sm:$0xff]
        %v3092 = vld [vmem:[%s4 + $0x150] sm:$0xff]
        %v3093 = vld [vmem:[%s4 + $0x158] sm:$0xff]
        %v3094 = vld [vmem:[%s4 + $0x160] sm:$0xff]
        %v3095 = vld [vmem:[%s4 + $0x168] sm:$0xff]
        %v3096 = vld [vmem:[%s4 + $0x170] sm:$0xff]
        %v3097 = vld [vmem:[%s4 + $0x178] sm:$0xff]
        %v3098 = vld [vmem:[%s4 + $0x180] sm:$0xff]
        %v3099 = vld [vmem:[%s4 + $0x188] sm:$0xff]
        %v3100 = vmul.f32 %v2998, %v3050
        %v3101 = vmul.f32 %v2999, %v3051
        %v3102 = vmul.f32 %v3000, %v3052
        %v3103 = vmul.f32 %v3001, %v3053
        %v3104 = vmul.f32 %v3002, %v3054
        %v3105 = vmul.f32 %v3003, %v3055
        %v3106 = vmul.f32 %v3004, %v3056
        %v3107 = vmul.f32 %v3005, %v3057
        %v3108 = vmul.f32 %v3006, %v3058
        %v3109 = vmul.f32 %v3007, %v3059
        %v3110 = vmul.f32 %v3008, %v3060
        %v3111 = vmul.f32 %v3009, %v3061
        %v3112 = vmul.f32 %v3010, %v3062
        %v3113 = vmul.f32 %v3011, %v3063
        %v3114 = vmul.f32 %v3012, %v3064
        %v3115 = vmul.f32 %v3013, %v3065
        %v3116 = vmul.f32 %v3014, %v3066
        %v3117 = vmul.f32 %v3015, %v3067
        %v3118 = vmul.f32 %v3016, %v3068
        %v3119 = vmul.f32 %v3017, %v3069
        %v3120 = vmul.f32 %v3018, %v3070
        %v3121 = vmul.f32 %v3019, %v3071
        %v3122 = vmul.f32 %v3020, %v3072
        %v3123 = vmul.f32 %v3021, %v3073
        %v3124 = vmul.f32 %v3022, %v3074
        %v3125 = vmul.f32 %v3023, %v3075
        %v3126 = vmul.f32 %v3024, %v3076
        %v3127 = vmul.f32 %v3025, %v3077
        %v3128 = vmul.f32 %v3026, %v3078
        %v3129 = vmul.f32 %v3027, %v3079
        %v3130 = vmul.f32 %v3028, %v3080
        %v3131 = vmul.f32 %v3029, %v3081
        %v3132 = vmul.f32 %v3030, %v3082
        %v3133 = vmul.f32 %v3031, %v3083
        %v3134 = vmul.f32 %v3032, %v3084
        %v3135 = vmul.f32 %v3033, %v3085
        %v3136 = vmul.f32 %v3034, %v3086
        %v3137 = vmul.f32 %v3035, %v3087
        %v3138 = vmul.f32 %v3036, %v3088
        %v3139 = vmul.f32 %v3037, %v3089
        %v3140 = vmul.f32 %v3038, %v3090
        %v3141 = vmul.f32 %v3039, %v3091
        %v3142 = vmul.f32 %v3040, %v3092
        %v3143 = vmul.f32 %v3041, %v3093
        %v3144 = vmul.f32 %v3042, %v3094
        %v3145 = vmul.f32 %v3043, %v3095
        %v3146 = vmul.f32 %v3044, %v3096
        %v3147 = vmul.f32 %v3045, %v3097
        %v3148 = vmul.f32 %v3046, %v3098
        %v3149 = vmul.f32 %v3047, %v3099
        %v3150 = vadd.f32 %v3100, %v3101
        %v3151 = vadd.f32 %v3150, %v3102
        %v3152 = vadd.f32 %v3151, %v3103
        %v3153 = vadd.f32 %v3152, %v3104
        %v3154 = vadd.f32 %v3153, %v3105
        %v3155 = vadd.f32 %v3154, %v3106
        %v3156 = vadd.f32 %v3155, %v3107
        %v3157 = vadd.f32 %v3156, %v3108
        %v3158 = vadd.f32 %v3157, %v3109
        %v3159 = vadd.f32 %v3158, %v3110
        %v3160 = vadd.f32 %v3159, %v3111
        %v3161 = vadd.f32 %v3160, %v3112
        %v3162 = vadd.f32 %v3161, %v3113
        %v3163 = vadd.f32 %v3162, %v3114
        %v3164 = vadd.f32 %v3163, %v3115
        %v3165 = vadd.f32 %v3164, %v3116
        %v3166 = vadd.f32 %v3165, %v3117
        %v3167 = vadd.f32 %v3166, %v3118
        %v3168 = vadd.f32 %v3167, %v3119
        %v3169 = vadd.f32 %v3168, %v3120
        %v3170 = vadd.f32 %v3169, %v3121
        %v3171 = vadd.f32 %v3170, %v3122
        %v3172 = vadd.f32 %v3171, %v3123
        %v3173 = vadd.f32 %v3172, %v3124
        %v3174 = vadd.f32 %v3173, %v3125
        %v3175 = vadd.f32 %v3174, %v3126
        %v3176 = vadd.f32 %v3175, %v3127
        %v3177 = vadd.f32 %v3176, %v3128
        %v3178 = vadd.f32 %v3177, %v3129
        %v3179 = vadd.f32 %v3178, %v3130
        %v3180 = vadd.f32 %v3179, %v3131
        %v3181 = vadd.f32 %v3180, %v3132
        %v3182 = vadd.f32 %v3181, %v3133
        %v3183 = vadd.f32 %v3182, %v3134
        %v3184 = vadd.f32 %v3183, %v3135
        %v3185 = vadd.f32 %v3184, %v3136
        %v3186 = vadd.f32 %v3185, %v3137
        %v3187 = vadd.f32 %v3186, %v3138
        %v3188 = vadd.f32 %v3187, %v3139
        %v3189 = vadd.f32 %v3188, %v3140
        %v3190 = vadd.f32 %v3189, %v3141
        %v3191 = vadd.f32 %v3190, %v3142
        %v3192 = vadd.f32 %v3191, %v3143
        %v3193 = vadd.f32 %v3192, %v3144
        %v3194 = vadd.f32 %v3193, %v3145
        %v3195 = vadd.f32 %v3194, %v3146
        %v3196 = vadd.f32 %v3195, %v3147
        %v3197 = vadd.f32 %v3196, %v3148
        %v3198 = vadd.f32 %v3197, %v3149
        %v3199 = vrot.slane %v3198, 4
        %v3200 = vadd.f32 %v3198, %v3199
        %v3201 = vrot.slane %v3200, 2
        %v3202 = vadd.f32 %v3200, %v3201
        %v3203 = vrot.slane %v3202, 1
        %v3204 = vadd.f32 %v3202, %v3203
        %3205 = vadd.xlane.f32.xlu0 %v3204
        %v3206 = vpop.xlane.xlu0 %3205
        %vm3207 = vcmp.eq.s32.totalorder %v3049, 0
        %v3208 = vsel %vm3207, %v3206, 0.0
        %v3209 = vadd.f32 %v3208, 0.0
        %s3210 = scalar_lea.vmem %s4, 400
        %v3211 = vld [vmem:[%s3210] sm:$0xff]
        %v3212 = vld [vmem:[%s3210 + $0x8] sm:$0xff]
        %v3213 = vld [vmem:[%s3210 + $0x10] sm:$0xff]
        %v3214 = vld [vmem:[%s3210 + $0x18] sm:$0xff]
        %v3215 = vld [vmem:[%s3210 + $0x20] sm:$0xff]
        %v3216 = vld [vmem:[%s3210 + $0x28] sm:$0xff]
        %v3217 = vld [vmem:[%s3210 + $0x30] sm:$0xff]
        %v3218 = vld [vmem:[%s3210 + $0x38] sm:$0xff]
        %v3219 = vld [vmem:[%s3210 + $0x40] sm:$0xff]
        %v3220 = vld [vmem:[%s3210 + $0x48] sm:$0xff]
        %v3221 = vld [vmem:[%s3210 + $0x50] sm:$0xff]
        %v3222 = vld [vmem:[%s3210 + $0x58] sm:$0xff]
        %v3223 = vld [vmem:[%s3210 + $0x60] sm:$0xff]
        %v3224 = vld [vmem:[%s3210 + $0x68] sm:$0xff]
        %v3225 = vld [vmem:[%s3210 + $0x70] sm:$0xff]
        %v3226 = vld [vmem:[%s3210 + $0x78] sm:$0xff]
        %v3227 = vld [vmem:[%s3210 + $0x80] sm:$0xff]
        %v3228 = vld [vmem:[%s3210 + $0x88] sm:$0xff]
        %v3229 = vld [vmem:[%s3210 + $0x90] sm:$0xff]
        %v3230 = vld [vmem:[%s3210 + $0x98] sm:$0xff]
        %v3231 = vld [vmem:[%s3210 + $0xa0] sm:$0xff]
        %v3232 = vld [vmem:[%s3210 + $0xa8] sm:$0xff]
        %v3233 = vld [vmem:[%s3210 + $0xb0] sm:$0xff]
        %v3234 = vld [vmem:[%s3210 + $0xb8] sm:$0xff]
        %v3235 = vld [vmem:[%s3210 + $0xc0] sm:$0xff]
        %v3236 = vld [vmem:[%s3210 + $0xc8] sm:$0xff]
        %v3237 = vld [vmem:[%s3210 + $0xd0] sm:$0xff]
        %v3238 = vld [vmem:[%s3210 + $0xd8] sm:$0xff]
        %v3239 = vld [vmem:[%s3210 + $0xe0] sm:$0xff]
        %v3240 = vld [vmem:[%s3210 + $0xe8] sm:$0xff]
        %v3241 = vld [vmem:[%s3210 + $0xf0] sm:$0xff]
        %v3242 = vld [vmem:[%s3210 + $0xf8] sm:$0xff]
        %v3243 = vld [vmem:[%s3210 + $0x100] sm:$0xff]
        %v3244 = vld [vmem:[%s3210 + $0x108] sm:$0xff]
        %v3245 = vld [vmem:[%s3210 + $0x110] sm:$0xff]
        %v3246 = vld [vmem:[%s3210 + $0x118] sm:$0xff]
        %v3247 = vld [vmem:[%s3210 + $0x120] sm:$0xff]
        %v3248 = vld [vmem:[%s3210 + $0x128] sm:$0xff]
        %v3249 = vld [vmem:[%s3210 + $0x130] sm:$0xff]
        %v3250 = vld [vmem:[%s3210 + $0x138] sm:$0xff]
        %v3251 = vld [vmem:[%s3210 + $0x140] sm:$0xff]
        %v3252 = vld [vmem:[%s3210 + $0x148] sm:$0xff]
        %v3253 = vld [vmem:[%s3210 + $0x150] sm:$0xff]
        %v3254 = vld [vmem:[%s3210 + $0x158] sm:$0xff]
        %v3255 = vld [vmem:[%s3210 + $0x160] sm:$0xff]
        %v3256 = vld [vmem:[%s3210 + $0x168] sm:$0xff]
        %v3257 = vld [vmem:[%s3210 + $0x170] sm:$0xff]
        %v3258 = vld [vmem:[%s3210 + $0x178] sm:$0xff]
        %v3259 = vld [vmem:[%s3210 + $0x180] sm:$0xff]
        %v3260 = vld [vmem:[%s3210 + $0x188] sm:$0xff]
        %v3261 = vmul.f32 %v2998, %v3211
        %v3262 = vmul.f32 %v2999, %v3212
        %v3263 = vmul.f32 %v3000, %v3213
        %v3264 = vmul.f32 %v3001, %v3214
        %v3265 = vmul.f32 %v3002, %v3215
        %v3266 = vmul.f32 %v3003, %v3216
        %v3267 = vmul.f32 %v3004, %v3217
        %v3268 = vmul.f32 %v3005, %v3218
        %v3269 = vmul.f32 %v3006, %v3219
        %v3270 = vmul.f32 %v3007, %v3220
        %v3271 = vmul.f32 %v3008, %v3221
        %v3272 = vmul.f32 %v3009, %v3222
        %v3273 = vmul.f32 %v3010, %v3223
        %v3274 = vmul.f32 %v3011, %v3224
        %v3275 = vmul.f32 %v3012, %v3225
        %v3276 = vmul.f32 %v3013, %v3226
        %v3277 = vmul.f32 %v3014, %v3227
        %v3278 = vmul.f32 %v3015, %v3228
        %v3279 = vmul.f32 %v3016, %v3229
        %v3280 = vmul.f32 %v3017, %v3230
        %v3281 = vmul.f32 %v3018, %v3231
        %v3282 = vmul.f32 %v3019, %v3232
        %v3283 = vmul.f32 %v3020, %v3233
        %v3284 = vmul.f32 %v3021, %v3234
        %v3285 = vmul.f32 %v3022, %v3235
        %v3286 = vmul.f32 %v3023, %v3236
        %v3287 = vmul.f32 %v3024, %v3237
        %v3288 = vmul.f32 %v3025, %v3238
        %v3289 = vmul.f32 %v3026, %v3239
        %v3290 = vmul.f32 %v3027, %v3240
        %v3291 = vmul.f32 %v3028, %v3241
        %v3292 = vmul.f32 %v3029, %v3242
        %v3293 = vmul.f32 %v3030, %v3243
        %v3294 = vmul.f32 %v3031, %v3244
        %v3295 = vmul.f32 %v3032, %v3245
        %v3296 = vmul.f32 %v3033, %v3246
        %v3297 = vmul.f32 %v3034, %v3247
        %v3298 = vmul.f32 %v3035, %v3248
        %v3299 = vmul.f32 %v3036, %v3249
        %v3300 = vmul.f32 %v3037, %v3250
        %v3301 = vmul.f32 %v3038, %v3251
        %v3302 = vmul.f32 %v3039, %v3252
        %v3303 = vmul.f32 %v3040, %v3253
        %v3304 = vmul.f32 %v3041, %v3254
        %v3305 = vmul.f32 %v3042, %v3255
        %v3306 = vmul.f32 %v3043, %v3256
        %v3307 = vmul.f32 %v3044, %v3257
        %v3308 = vmul.f32 %v3045, %v3258
        %v3309 = vmul.f32 %v3046, %v3259
        %v3310 = vmul.f32 %v3047, %v3260
        %v3311 = vadd.f32 %v3261, %v3262
        %v3312 = vadd.f32 %v3311, %v3263
        %v3313 = vadd.f32 %v3312, %v3264
        %v3314 = vadd.f32 %v3313, %v3265
        %v3315 = vadd.f32 %v3314, %v3266
        %v3316 = vadd.f32 %v3315, %v3267
        %v3317 = vadd.f32 %v3316, %v3268
        %v3318 = vadd.f32 %v3317, %v3269
        %v3319 = vadd.f32 %v3318, %v3270
        %v3320 = vadd.f32 %v3319, %v3271
        %v3321 = vadd.f32 %v3320, %v3272
        %v3322 = vadd.f32 %v3321, %v3273
        %v3323 = vadd.f32 %v3322, %v3274
        %v3324 = vadd.f32 %v3323, %v3275
        %v3325 = vadd.f32 %v3324, %v3276
        %v3326 = vadd.f32 %v3325, %v3277
        %v3327 = vadd.f32 %v3326, %v3278
        %v3328 = vadd.f32 %v3327, %v3279
        %v3329 = vadd.f32 %v3328, %v3280
        %v3330 = vadd.f32 %v3329, %v3281
        %v3331 = vadd.f32 %v3330, %v3282
        %v3332 = vadd.f32 %v3331, %v3283
        %v3333 = vadd.f32 %v3332, %v3284
        %v3334 = vadd.f32 %v3333, %v3285
        %v3335 = vadd.f32 %v3334, %v3286
        %v3336 = vadd.f32 %v3335, %v3287
        %v3337 = vadd.f32 %v3336, %v3288
        %v3338 = vadd.f32 %v3337, %v3289
        %v3339 = vadd.f32 %v3338, %v3290
        %v3340 = vadd.f32 %v3339, %v3291
        %v3341 = vadd.f32 %v3340, %v3292
        %v3342 = vadd.f32 %v3341, %v3293
        %v3343 = vadd.f32 %v3342, %v3294
        %v3344 = vadd.f32 %v3343, %v3295
        %v3345 = vadd.f32 %v3344, %v3296
        %v3346 = vadd.f32 %v3345, %v3297
        %v3347 = vadd.f32 %v3346, %v3298
        %v3348 = vadd.f32 %v3347, %v3299
        %v3349 = vadd.f32 %v3348, %v3300
        %v3350 = vadd.f32 %v3349, %v3301
        %v3351 = vadd.f32 %v3350, %v3302
        %v3352 = vadd.f32 %v3351, %v3303
        %v3353 = vadd.f32 %v3352, %v3304
        %v3354 = vadd.f32 %v3353, %v3305
        %v3355 = vadd.f32 %v3354, %v3306
        %v3356 = vadd.f32 %v3355, %v3307
        %v3357 = vadd.f32 %v3356, %v3308
        %v3358 = vadd.f32 %v3357, %v3309
        %v3359 = vadd.f32 %v3358, %v3310
        %v3360 = vrot.slane %v3359, 4
        %v3361 = vadd.f32 %v3359, %v3360
        %v3362 = vrot.slane %v3361, 2
        %v3363 = vadd.f32 %v3361, %v3362
        %v3364 = vrot.slane %v3363, 1
        %v3365 = vadd.f32 %v3363, %v3364
        %3366 = vadd.xlane.f32.xlu0 %v3365
        %v3367 = vpop.xlane.xlu0 %3366
        %vm3368 = vcmp.eq.s32.totalorder %v3049, 1
        %v3369 = vsel %vm3368, %v3367, 0.0
        %v3370 = vadd.f32 %v3209, %v3369
        %s3371 = scalar_lea.vmem %s4, 800
        %v3372 = vld [vmem:[%s3371] sm:$0xff]
        %v3373 = vld [vmem:[%s3371 + $0x8] sm:$0xff]
        %v3374 = vld [vmem:[%s3371 + $0x10] sm:$0xff]
        %v3375 = vld [vmem:[%s3371 + $0x18] sm:$0xff]
        %v3376 = vld [vmem:[%s3371 + $0x20] sm:$0xff]
        %v3377 = vld [vmem:[%s3371 + $0x28] sm:$0xff]
        %v3378 = vld [vmem:[%s3371 + $0x30] sm:$0xff]
        %v3379 = vld [vmem:[%s3371 + $0x38] sm:$0xff]
        %v3380 = vld [vmem:[%s3371 + $0x40] sm:$0xff]
        %v3381 = vld [vmem:[%s3371 + $0x48] sm:$0xff]
        %v3382 = vld [vmem:[%s3371 + $0x50] sm:$0xff]
        %v3383 = vld [vmem:[%s3371 + $0x58] sm:$0xff]
        %v3384 = vld [vmem:[%s3371 + $0x60] sm:$0xff]
        %v3385 = vld [vmem:[%s3371 + $0x68] sm:$0xff]
        %v3386 = vld [vmem:[%s3371 + $0x70] sm:$0xff]
        %v3387 = vld [vmem:[%s3371 + $0x78] sm:$0xff]
        %v3388 = vld [vmem:[%s3371 + $0x80] sm:$0xff]
        %v3389 = vld [vmem:[%s3371 + $0x88] sm:$0xff]
        %v3390 = vld [vmem:[%s3371 + $0x90] sm:$0xff]
        %v3391 = vld [vmem:[%s3371 + $0x98] sm:$0xff]
        %v3392 = vld [vmem:[%s3371 + $0xa0] sm:$0xff]
        %v3393 = vld [vmem:[%s3371 + $0xa8] sm:$0xff]
        %v3394 = vld [vmem:[%s3371 + $0xb0] sm:$0xff]
        %v3395 = vld [vmem:[%s3371 + $0xb8] sm:$0xff]
        %v3396 = vld [vmem:[%s3371 + $0xc0] sm:$0xff]
        %v3397 = vld [vmem:[%s3371 + $0xc8] sm:$0xff]
        %v3398 = vld [vmem:[%s3371 + $0xd0] sm:$0xff]
        %v3399 = vld [vmem:[%s3371 + $0xd8] sm:$0xff]
        %v3400 = vld [vmem:[%s3371 + $0xe0] sm:$0xff]
        %v3401 = vld [vmem:[%s3371 + $0xe8] sm:$0xff]
        %v3402 = vld [vmem:[%s3371 + $0xf0] sm:$0xff]
        %v3403 = vld [vmem:[%s3371 + $0xf8] sm:$0xff]
        %v3404 = vld [vmem:[%s3371 + $0x100] sm:$0xff]
        %v3405 = vld [vmem:[%s3371 + $0x108] sm:$0xff]
        %v3406 = vld [vmem:[%s3371 + $0x110] sm:$0xff]
        %v3407 = vld [vmem:[%s3371 + $0x118] sm:$0xff]
        %v3408 = vld [vmem:[%s3371 + $0x120] sm:$0xff]
        %v3409 = vld [vmem:[%s3371 + $0x128] sm:$0xff]
        %v3410 = vld [vmem:[%s3371 + $0x130] sm:$0xff]
        %v3411 = vld [vmem:[%s3371 + $0x138] sm:$0xff]
        %v3412 = vld [vmem:[%s3371 + $0x140] sm:$0xff]
        %v3413 = vld [vmem:[%s3371 + $0x148] sm:$0xff]
        %v3414 = vld [vmem:[%s3371 + $0x150] sm:$0xff]
        %v3415 = vld [vmem:[%s3371 + $0x158] sm:$0xff]
        %v3416 = vld [vmem:[%s3371 + $0x160] sm:$0xff]
        %v3417 = vld [vmem:[%s3371 + $0x168] sm:$0xff]
        %v3418 = vld [vmem:[%s3371 + $0x170] sm:$0xff]
        %v3419 = vld [vmem:[%s3371 + $0x178] sm:$0xff]
        %v3420 = vld [vmem:[%s3371 + $0x180] sm:$0xff]
        %v3421 = vld [vmem:[%s3371 + $0x188] sm:$0xff]
        %v3422 = vmul.f32 %v2998, %v3372
        %v3423 = vmul.f32 %v2999, %v3373
        %v3424 = vmul.f32 %v3000, %v3374
        %v3425 = vmul.f32 %v3001, %v3375
        %v3426 = vmul.f32 %v3002, %v3376
        %v3427 = vmul.f32 %v3003, %v3377
        %v3428 = vmul.f32 %v3004, %v3378
        %v3429 = vmul.f32 %v3005, %v3379
        %v3430 = vmul.f32 %v3006, %v3380
        %v3431 = vmul.f32 %v3007, %v3381
        %v3432 = vmul.f32 %v3008, %v3382
        %v3433 = vmul.f32 %v3009, %v3383
        %v3434 = vmul.f32 %v3010, %v3384
        %v3435 = vmul.f32 %v3011, %v3385
        %v3436 = vmul.f32 %v3012, %v3386
        %v3437 = vmul.f32 %v3013, %v3387
        %v3438 = vmul.f32 %v3014, %v3388
        %v3439 = vmul.f32 %v3015, %v3389
        %v3440 = vmul.f32 %v3016, %v3390
        %v3441 = vmul.f32 %v3017, %v3391
        %v3442 = vmul.f32 %v3018, %v3392
        %v3443 = vmul.f32 %v3019, %v3393
        %v3444 = vmul.f32 %v3020, %v3394
        %v3445 = vmul.f32 %v3021, %v3395
        %v3446 = vmul.f32 %v3022, %v3396
        %v3447 = vmul.f32 %v3023, %v3397
        %v3448 = vmul.f32 %v3024, %v3398
        %v3449 = vmul.f32 %v3025, %v3399
        %v3450 = vmul.f32 %v3026, %v3400
        %v3451 = vmul.f32 %v3027, %v3401
        %v3452 = vmul.f32 %v3028, %v3402
        %v3453 = vmul.f32 %v3029, %v3403
        %v3454 = vmul.f32 %v3030, %v3404
        %v3455 = vmul.f32 %v3031, %v3405
        %v3456 = vmul.f32 %v3032, %v3406
        %v3457 = vmul.f32 %v3033, %v3407
        %v3458 = vmul.f32 %v3034, %v3408
        %v3459 = vmul.f32 %v3035, %v3409
        %v3460 = vmul.f32 %v3036, %v3410
        %v3461 = vmul.f32 %v3037, %v3411
        %v3462 = vmul.f32 %v3038, %v3412
        %v3463 = vmul.f32 %v3039, %v3413
        %v3464 = vmul.f32 %v3040, %v3414
        %v3465 = vmul.f32 %v3041, %v3415
        %v3466 = vmul.f32 %v3042, %v3416
        %v3467 = vmul.f32 %v3043, %v3417
        %v3468 = vmul.f32 %v3044, %v3418
        %v3469 = vmul.f32 %v3045, %v3419
        %v3470 = vmul.f32 %v3046, %v3420
        %v3471 = vmul.f32 %v3047, %v3421
        %v3472 = vadd.f32 %v3422, %v3423
        %v3473 = vadd.f32 %v3472, %v3424
        %v3474 = vadd.f32 %v3473, %v3425
        %v3475 = vadd.f32 %v3474, %v3426
        %v3476 = vadd.f32 %v3475, %v3427
        %v3477 = vadd.f32 %v3476, %v3428
        %v3478 = vadd.f32 %v3477, %v3429
        %v3479 = vadd.f32 %v3478, %v3430
        %v3480 = vadd.f32 %v3479, %v3431
        %v3481 = vadd.f32 %v3480, %v3432
        %v3482 = vadd.f32 %v3481, %v3433
        %v3483 = vadd.f32 %v3482, %v3434
        %v3484 = vadd.f32 %v3483, %v3435
        %v3485 = vadd.f32 %v3484, %v3436
        %v3486 = vadd.f32 %v3485, %v3437
        %v3487 = vadd.f32 %v3486, %v3438
        %v3488 = vadd.f32 %v3487, %v3439
        %v3489 = vadd.f32 %v3488, %v3440
        %v3490 = vadd.f32 %v3489, %v3441
        %v3491 = vadd.f32 %v3490, %v3442
        %v3492 = vadd.f32 %v3491, %v3443
        %v3493 = vadd.f32 %v3492, %v3444
        %v3494 = vadd.f32 %v3493, %v3445
        %v3495 = vadd.f32 %v3494, %v3446
        %v3496 = vadd.f32 %v3495, %v3447
        %v3497 = vadd.f32 %v3496, %v3448
        %v3498 = vadd.f32 %v3497, %v3449
        %v3499 = vadd.f32 %v3498, %v3450
        %v3500 = vadd.f32 %v3499, %v3451
        %v3501 = vadd.f32 %v3500, %v3452
        %v3502 = vadd.f32 %v3501, %v3453
        %v3503 = vadd.f32 %v3502, %v3454
        %v3504 = vadd.f32 %v3503, %v3455
        %v3505 = vadd.f32 %v3504, %v3456
        %v3506 = vadd.f32 %v3505, %v3457
        %v3507 = vadd.f32 %v3506, %v3458
        %v3508 = vadd.f32 %v3507, %v3459
        %v3509 = vadd.f32 %v3508, %v3460
        %v3510 = vadd.f32 %v3509, %v3461
        %v3511 = vadd.f32 %v3510, %v3462
        %v3512 = vadd.f32 %v3511, %v3463
        %v3513 = vadd.f32 %v3512, %v3464
        %v3514 = vadd.f32 %v3513, %v3465
        %v3515 = vadd.f32 %v3514, %v3466
        %v3516 = vadd.f32 %v3515, %v3467
        %v3517 = vadd.f32 %v3516, %v3468
        %v3518 = vadd.f32 %v3517, %v3469
        %v3519 = vadd.f32 %v3518, %v3470
        %v3520 = vadd.f32 %v3519, %v3471
        %v3521 = vrot.slane %v3520, 4
        %v3522 = vadd.f32 %v3520, %v3521
        %v3523 = vrot.slane %v3522, 2
        %v3524 = vadd.f32 %v3522, %v3523
        %v3525 = vrot.slane %v3524, 1
        %v3526 = vadd.f32 %v3524, %v3525
        %3527 = vadd.xlane.f32.xlu0 %v3526
        %v3528 = vpop.xlane.xlu0 %3527
        %vm3529 = vcmp.eq.s32.totalorder %v3049, 2
        %v3530 = vsel %vm3529, %v3528, 0.0
        %v3531 = vadd.f32 %v3370, %v3530
        %s3532 = scalar_lea.vmem %s4, 1200
        %v3533 = vld [vmem:[%s3532] sm:$0xff]
        %v3534 = vld [vmem:[%s3532 + $0x8] sm:$0xff]
        %v3535 = vld [vmem:[%s3532 + $0x10] sm:$0xff]
        %v3536 = vld [vmem:[%s3532 + $0x18] sm:$0xff]
        %v3537 = vld [vmem:[%s3532 + $0x20] sm:$0xff]
        %v3538 = vld [vmem:[%s3532 + $0x28] sm:$0xff]
        %v3539 = vld [vmem:[%s3532 + $0x30] sm:$0xff]
        %v3540 = vld [vmem:[%s3532 + $0x38] sm:$0xff]
        %v3541 = vld [vmem:[%s3532 + $0x40] sm:$0xff]
        %v3542 = vld [vmem:[%s3532 + $0x48] sm:$0xff]
        %v3543 = vld [vmem:[%s3532 + $0x50] sm:$0xff]
        %v3544 = vld [vmem:[%s3532 + $0x58] sm:$0xff]
        %v3545 = vld [vmem:[%s3532 + $0x60] sm:$0xff]
        %v3546 = vld [vmem:[%s3532 + $0x68] sm:$0xff]
        %v3547 = vld [vmem:[%s3532 + $0x70] sm:$0xff]
        %v3548 = vld [vmem:[%s3532 + $0x78] sm:$0xff]
        %v3549 = vld [vmem:[%s3532 + $0x80] sm:$0xff]
        %v3550 = vld [vmem:[%s3532 + $0x88] sm:$0xff]
        %v3551 = vld [vmem:[%s3532 + $0x90] sm:$0xff]
        %v3552 = vld [vmem:[%s3532 + $0x98] sm:$0xff]
        %v3553 = vld [vmem:[%s3532 + $0xa0] sm:$0xff]
        %v3554 = vld [vmem:[%s3532 + $0xa8] sm:$0xff]
        %v3555 = vld [vmem:[%s3532 + $0xb0] sm:$0xff]
        %v3556 = vld [vmem:[%s3532 + $0xb8] sm:$0xff]
        %v3557 = vld [vmem:[%s3532 + $0xc0] sm:$0xff]
        %v3558 = vld [vmem:[%s3532 + $0xc8] sm:$0xff]
        %v3559 = vld [vmem:[%s3532 + $0xd0] sm:$0xff]
        %v3560 = vld [vmem:[%s3532 + $0xd8] sm:$0xff]
        %v3561 = vld [vmem:[%s3532 + $0xe0] sm:$0xff]
        %v3562 = vld [vmem:[%s3532 + $0xe8] sm:$0xff]
        %v3563 = vld [vmem:[%s3532 + $0xf0] sm:$0xff]
        %v3564 = vld [vmem:[%s3532 + $0xf8] sm:$0xff]
        %v3565 = vld [vmem:[%s3532 + $0x100] sm:$0xff]
        %v3566 = vld [vmem:[%s3532 + $0x108] sm:$0xff]
        %v3567 = vld [vmem:[%s3532 + $0x110] sm:$0xff]
        %v3568 = vld [vmem:[%s3532 + $0x118] sm:$0xff]
        %v3569 = vld [vmem:[%s3532 + $0x120] sm:$0xff]
        %v3570 = vld [vmem:[%s3532 + $0x128] sm:$0xff]
        %v3571 = vld [vmem:[%s3532 + $0x130] sm:$0xff]
        %v3572 = vld [vmem:[%s3532 + $0x138] sm:$0xff]
        %v3573 = vld [vmem:[%s3532 + $0x140] sm:$0xff]
        %v3574 = vld [vmem:[%s3532 + $0x148] sm:$0xff]
        %v3575 = vld [vmem:[%s3532 + $0x150] sm:$0xff]
        %v3576 = vld [vmem:[%s3532 + $0x158] sm:$0xff]
        %v3577 = vld [vmem:[%s3532 + $0x160] sm:$0xff]
        %v3578 = vld [vmem:[%s3532 + $0x168] sm:$0xff]
        %v3579 = vld [vmem:[%s3532 + $0x170] sm:$0xff]
        %v3580 = vld [vmem:[%s3532 + $0x178] sm:$0xff]
        %v3581 = vld [vmem:[%s3532 + $0x180] sm:$0xff]
        %v3582 = vld [vmem:[%s3532 + $0x188] sm:$0xff]
        %v3583 = vmul.f32 %v2998, %v3533
        %v3584 = vmul.f32 %v2999, %v3534
        %v3585 = vmul.f32 %v3000, %v3535
        %v3586 = vmul.f32 %v3001, %v3536
        %v3587 = vmul.f32 %v3002, %v3537
        %v3588 = vmul.f32 %v3003, %v3538
        %v3589 = vmul.f32 %v3004, %v3539
        %v3590 = vmul.f32 %v3005, %v3540
        %v3591 = vmul.f32 %v3006, %v3541
        %v3592 = vmul.f32 %v3007, %v3542
        %v3593 = vmul.f32 %v3008, %v3543
        %v3594 = vmul.f32 %v3009, %v3544
        %v3595 = vmul.f32 %v3010, %v3545
        %v3596 = vmul.f32 %v3011, %v3546
        %v3597 = vmul.f32 %v3012, %v3547
        %v3598 = vmul.f32 %v3013, %v3548
        %v3599 = vmul.f32 %v3014, %v3549
        %v3600 = vmul.f32 %v3015, %v3550
        %v3601 = vmul.f32 %v3016, %v3551
        %v3602 = vmul.f32 %v3017, %v3552
        %v3603 = vmul.f32 %v3018, %v3553
        %v3604 = vmul.f32 %v3019, %v3554
        %v3605 = vmul.f32 %v3020, %v3555
        %v3606 = vmul.f32 %v3021, %v3556
        %v3607 = vmul.f32 %v3022, %v3557
        %v3608 = vmul.f32 %v3023, %v3558
        %v3609 = vmul.f32 %v3024, %v3559
        %v3610 = vmul.f32 %v3025, %v3560
        %v3611 = vmul.f32 %v3026, %v3561
        %v3612 = vmul.f32 %v3027, %v3562
        %v3613 = vmul.f32 %v3028, %v3563
        %v3614 = vmul.f32 %v3029, %v3564
        %v3615 = vmul.f32 %v3030, %v3565
        %v3616 = vmul.f32 %v3031, %v3566
        %v3617 = vmul.f32 %v3032, %v3567
        %v3618 = vmul.f32 %v3033, %v3568
        %v3619 = vmul.f32 %v3034, %v3569
        %v3620 = vmul.f32 %v3035, %v3570
        %v3621 = vmul.f32 %v3036, %v3571
        %v3622 = vmul.f32 %v3037, %v3572
        %v3623 = vmul.f32 %v3038, %v3573
        %v3624 = vmul.f32 %v3039, %v3574
        %v3625 = vmul.f32 %v3040, %v3575
        %v3626 = vmul.f32 %v3041, %v3576
        %v3627 = vmul.f32 %v3042, %v3577
        %v3628 = vmul.f32 %v3043, %v3578
        %v3629 = vmul.f32 %v3044, %v3579
        %v3630 = vmul.f32 %v3045, %v3580
        %v3631 = vmul.f32 %v3046, %v3581
        %v3632 = vmul.f32 %v3047, %v3582
        %v3633 = vadd.f32 %v3583, %v3584
        %v3634 = vadd.f32 %v3633, %v3585
        %v3635 = vadd.f32 %v3634, %v3586
        %v3636 = vadd.f32 %v3635, %v3587
        %v3637 = vadd.f32 %v3636, %v3588
        %v3638 = vadd.f32 %v3637, %v3589
        %v3639 = vadd.f32 %v3638, %v3590
        %v3640 = vadd.f32 %v3639, %v3591
        %v3641 = vadd.f32 %v3640, %v3592
        %v3642 = vadd.f32 %v3641, %v3593
        %v3643 = vadd.f32 %v3642, %v3594
        %v3644 = vadd.f32 %v3643, %v3595
        %v3645 = vadd.f32 %v3644, %v3596
        %v3646 = vadd.f32 %v3645, %v3597
        %v3647 = vadd.f32 %v3646, %v3598
        %v3648 = vadd.f32 %v3647, %v3599
        %v3649 = vadd.f32 %v3648, %v3600
        %v3650 = vadd.f32 %v3649, %v3601
        %v3651 = vadd.f32 %v3650, %v3602
        %v3652 = vadd.f32 %v3651, %v3603
        %v3653 = vadd.f32 %v3652, %v3604
        %v3654 = vadd.f32 %v3653, %v3605
        %v3655 = vadd.f32 %v3654, %v3606
        %v3656 = vadd.f32 %v3655, %v3607
        %v3657 = vadd.f32 %v3656, %v3608
        %v3658 = vadd.f32 %v3657, %v3609
        %v3659 = vadd.f32 %v3658, %v3610
        %v3660 = vadd.f32 %v3659, %v3611
        %v3661 = vadd.f32 %v3660, %v3612
        %v3662 = vadd.f32 %v3661, %v3613
        %v3663 = vadd.f32 %v3662, %v3614
        %v3664 = vadd.f32 %v3663, %v3615
        %v3665 = vadd.f32 %v3664, %v3616
        %v3666 = vadd.f32 %v3665, %v3617
        %v3667 = vadd.f32 %v3666, %v3618
        %v3668 = vadd.f32 %v3667, %v3619
        %v3669 = vadd.f32 %v3668, %v3620
        %v3670 = vadd.f32 %v3669, %v3621
        %v3671 = vadd.f32 %v3670, %v3622
        %v3672 = vadd.f32 %v3671, %v3623
        %v3673 = vadd.f32 %v3672, %v3624
        %v3674 = vadd.f32 %v3673, %v3625
        %v3675 = vadd.f32 %v3674, %v3626
        %v3676 = vadd.f32 %v3675, %v3627
        %v3677 = vadd.f32 %v3676, %v3628
        %v3678 = vadd.f32 %v3677, %v3629
        %v3679 = vadd.f32 %v3678, %v3630
        %v3680 = vadd.f32 %v3679, %v3631
        %v3681 = vadd.f32 %v3680, %v3632
        %v3682 = vrot.slane %v3681, 4
        %v3683 = vadd.f32 %v3681, %v3682
        %v3684 = vrot.slane %v3683, 2
        %v3685 = vadd.f32 %v3683, %v3684
        %v3686 = vrot.slane %v3685, 1
        %v3687 = vadd.f32 %v3685, %v3686
        %3688 = vadd.xlane.f32.xlu0 %v3687
        %v3689 = vpop.xlane.xlu0 %3688
        %vm3690 = vcmp.eq.s32.totalorder %v3049, 3
        %v3691 = vsel %vm3690, %v3689, 0.0
        %v3692 = vadd.f32 %v3531, %v3691
        %s3693 = scalar_lea.vmem %s4, 1600
        %v3694 = vld [vmem:[%s3693] sm:$0xff]
        %v3695 = vld [vmem:[%s3693 + $0x8] sm:$0xff]
        %v3696 = vld [vmem:[%s3693 + $0x10] sm:$0xff]
        %v3697 = vld [vmem:[%s3693 + $0x18] sm:$0xff]
        %v3698 = vld [vmem:[%s3693 + $0x20] sm:$0xff]
        %v3699 = vld [vmem:[%s3693 + $0x28] sm:$0xff]
        %v3700 = vld [vmem:[%s3693 + $0x30] sm:$0xff]
        %v3701 = vld [vmem:[%s3693 + $0x38] sm:$0xff]
        %v3702 = vld [vmem:[%s3693 + $0x40] sm:$0xff]
        %v3703 = vld [vmem:[%s3693 + $0x48] sm:$0xff]
        %v3704 = vld [vmem:[%s3693 + $0x50] sm:$0xff]
        %v3705 = vld [vmem:[%s3693 + $0x58] sm:$0xff]
        %v3706 = vld [vmem:[%s3693 + $0x60] sm:$0xff]
        %v3707 = vld [vmem:[%s3693 + $0x68] sm:$0xff]
        %v3708 = vld [vmem:[%s3693 + $0x70] sm:$0xff]
        %v3709 = vld [vmem:[%s3693 + $0x78] sm:$0xff]
        %v3710 = vld [vmem:[%s3693 + $0x80] sm:$0xff]
        %v3711 = vld [vmem:[%s3693 + $0x88] sm:$0xff]
        %v3712 = vld [vmem:[%s3693 + $0x90] sm:$0xff]
        %v3713 = vld [vmem:[%s3693 + $0x98] sm:$0xff]
        %v3714 = vld [vmem:[%s3693 + $0xa0] sm:$0xff]
        %v3715 = vld [vmem:[%s3693 + $0xa8] sm:$0xff]
        %v3716 = vld [vmem:[%s3693 + $0xb0] sm:$0xff]
        %v3717 = vld [vmem:[%s3693 + $0xb8] sm:$0xff]
        %v3718 = vld [vmem:[%s3693 + $0xc0] sm:$0xff]
        %v3719 = vld [vmem:[%s3693 + $0xc8] sm:$0xff]
        %v3720 = vld [vmem:[%s3693 + $0xd0] sm:$0xff]
        %v3721 = vld [vmem:[%s3693 + $0xd8] sm:$0xff]
        %v3722 = vld [vmem:[%s3693 + $0xe0] sm:$0xff]
        %v3723 = vld [vmem:[%s3693 + $0xe8] sm:$0xff]
        %v3724 = vld [vmem:[%s3693 + $0xf0] sm:$0xff]
        %v3725 = vld [vmem:[%s3693 + $0xf8] sm:$0xff]
        %v3726 = vld [vmem:[%s3693 + $0x100] sm:$0xff]
        %v3727 = vld [vmem:[%s3693 + $0x108] sm:$0xff]
        %v3728 = vld [vmem:[%s3693 + $0x110] sm:$0xff]
        %v3729 = vld [vmem:[%s3693 + $0x118] sm:$0xff]
        %v3730 = vld [vmem:[%s3693 + $0x120] sm:$0xff]
        %v3731 = vld [vmem:[%s3693 + $0x128] sm:$0xff]
        %v3732 = vld [vmem:[%s3693 + $0x130] sm:$0xff]
        %v3733 = vld [vmem:[%s3693 + $0x138] sm:$0xff]
        %v3734 = vld [vmem:[%s3693 + $0x140] sm:$0xff]
        %v3735 = vld [vmem:[%s3693 + $0x148] sm:$0xff]
        %v3736 = vld [vmem:[%s3693 + $0x150] sm:$0xff]
        %v3737 = vld [vmem:[%s3693 + $0x158] sm:$0xff]
        %v3738 = vld [vmem:[%s3693 + $0x160] sm:$0xff]
        %v3739 = vld [vmem:[%s3693 + $0x168] sm:$0xff]
        %v3740 = vld [vmem:[%s3693 + $0x170] sm:$0xff]
        %v3741 = vld [vmem:[%s3693 + $0x178] sm:$0xff]
        %v3742 = vld [vmem:[%s3693 + $0x180] sm:$0xff]
        %v3743 = vld [vmem:[%s3693 + $0x188] sm:$0xff]
        %v3744 = vmul.f32 %v2998, %v3694
        %v3745 = vmul.f32 %v2999, %v3695
        %v3746 = vmul.f32 %v3000, %v3696
        %v3747 = vmul.f32 %v3001, %v3697
        %v3748 = vmul.f32 %v3002, %v3698
        %v3749 = vmul.f32 %v3003, %v3699
        %v3750 = vmul.f32 %v3004, %v3700
        %v3751 = vmul.f32 %v3005, %v3701
        %v3752 = vmul.f32 %v3006, %v3702
        %v3753 = vmul.f32 %v3007, %v3703
        %v3754 = vmul.f32 %v3008, %v3704
        %v3755 = vmul.f32 %v3009, %v3705
        %v3756 = vmul.f32 %v3010, %v3706
        %v3757 = vmul.f32 %v3011, %v3707
        %v3758 = vmul.f32 %v3012, %v3708
        %v3759 = vmul.f32 %v3013, %v3709
        %v3760 = vmul.f32 %v3014, %v3710
        %v3761 = vmul.f32 %v3015, %v3711
        %v3762 = vmul.f32 %v3016, %v3712
        %v3763 = vmul.f32 %v3017, %v3713
        %v3764 = vmul.f32 %v3018, %v3714
        %v3765 = vmul.f32 %v3019, %v3715
        %v3766 = vmul.f32 %v3020, %v3716
        %v3767 = vmul.f32 %v3021, %v3717
        %v3768 = vmul.f32 %v3022, %v3718
        %v3769 = vmul.f32 %v3023, %v3719
        %v3770 = vmul.f32 %v3024, %v3720
        %v3771 = vmul.f32 %v3025, %v3721
        %v3772 = vmul.f32 %v3026, %v3722
        %v3773 = vmul.f32 %v3027, %v3723
        %v3774 = vmul.f32 %v3028, %v3724
        %v3775 = vmul.f32 %v3029, %v3725
        %v3776 = vmul.f32 %v3030, %v3726
        %v3777 = vmul.f32 %v3031, %v3727
        %v3778 = vmul.f32 %v3032, %v3728
        %v3779 = vmul.f32 %v3033, %v3729
        %v3780 = vmul.f32 %v3034, %v3730
        %v3781 = vmul.f32 %v3035, %v3731
        %v3782 = vmul.f32 %v3036, %v3732
        %v3783 = vmul.f32 %v3037, %v3733
        %v3784 = vmul.f32 %v3038, %v3734
        %v3785 = vmul.f32 %v3039, %v3735
        %v3786 = vmul.f32 %v3040, %v3736
        %v3787 = vmul.f32 %v3041, %v3737
        %v3788 = vmul.f32 %v3042, %v3738
        %v3789 = vmul.f32 %v3043, %v3739
        %v3790 = vmul.f32 %v3044, %v3740
        %v3791 = vmul.f32 %v3045, %v3741
        %v3792 = vmul.f32 %v3046, %v3742
        %v3793 = vmul.f32 %v3047, %v3743
        %v3794 = vadd.f32 %v3744, %v3745
        %v3795 = vadd.f32 %v3794, %v3746
        %v3796 = vadd.f32 %v3795, %v3747
        %v3797 = vadd.f32 %v3796, %v3748
        %v3798 = vadd.f32 %v3797, %v3749
        %v3799 = vadd.f32 %v3798, %v3750
        %v3800 = vadd.f32 %v3799, %v3751
        %v3801 = vadd.f32 %v3800, %v3752
        %v3802 = vadd.f32 %v3801, %v3753
        %v3803 = vadd.f32 %v3802, %v3754
        %v3804 = vadd.f32 %v3803, %v3755
        %v3805 = vadd.f32 %v3804, %v3756
        %v3806 = vadd.f32 %v3805, %v3757
        %v3807 = vadd.f32 %v3806, %v3758
        %v3808 = vadd.f32 %v3807, %v3759
        %v3809 = vadd.f32 %v3808, %v3760
        %v3810 = vadd.f32 %v3809, %v3761
        %v3811 = vadd.f32 %v3810, %v3762
        %v3812 = vadd.f32 %v3811, %v3763
        %v3813 = vadd.f32 %v3812, %v3764
        %v3814 = vadd.f32 %v3813, %v3765
        %v3815 = vadd.f32 %v3814, %v3766
        %v3816 = vadd.f32 %v3815, %v3767
        %v3817 = vadd.f32 %v3816, %v3768
        %v3818 = vadd.f32 %v3817, %v3769
        %v3819 = vadd.f32 %v3818, %v3770
        %v3820 = vadd.f32 %v3819, %v3771
        %v3821 = vadd.f32 %v3820, %v3772
        %v3822 = vadd.f32 %v3821, %v3773
        %v3823 = vadd.f32 %v3822, %v3774
        %v3824 = vadd.f32 %v3823, %v3775
        %v3825 = vadd.f32 %v3824, %v3776
        %v3826 = vadd.f32 %v3825, %v3777
        %v3827 = vadd.f32 %v3826, %v3778
        %v3828 = vadd.f32 %v3827, %v3779
        %v3829 = vadd.f32 %v3828, %v3780
        %v3830 = vadd.f32 %v3829, %v3781
        %v3831 = vadd.f32 %v3830, %v3782
        %v3832 = vadd.f32 %v3831, %v3783
        %v3833 = vadd.f32 %v3832, %v3784
        %v3834 = vadd.f32 %v3833, %v3785
        %v3835 = vadd.f32 %v3834, %v3786
        %v3836 = vadd.f32 %v3835, %v3787
        %v3837 = vadd.f32 %v3836, %v3788
        %v3838 = vadd.f32 %v3837, %v3789
        %v3839 = vadd.f32 %v3838, %v3790
        %v3840 = vadd.f32 %v3839, %v3791
        %v3841 = vadd.f32 %v3840, %v3792
        %v3842 = vadd.f32 %v3841, %v3793
        %v3843 = vrot.slane %v3842, 4
        %v3844 = vadd.f32 %v3842, %v3843
        %v3845 = vrot.slane %v3844, 2
        %v3846 = vadd.f32 %v3844, %v3845
        %v3847 = vrot.slane %v3846, 1
        %v3848 = vadd.f32 %v3846, %v3847
        %3849 = vadd.xlane.f32.xlu0 %v3848
        %v3850 = vpop.xlane.xlu0 %3849
        %vm3851 = vcmp.eq.s32.totalorder %v3049, 4
        %v3852 = vsel %vm3851, %v3850, 0.0
        %v3853 = vadd.f32 %v3692, %v3852
        %s3854 = scalar_lea.vmem %s4, 2000
        %v3855 = vld [vmem:[%s3854] sm:$0xff]
        %v3856 = vld [vmem:[%s3854 + $0x8] sm:$0xff]
        %v3857 = vld [vmem:[%s3854 + $0x10] sm:$0xff]
        %v3858 = vld [vmem:[%s3854 + $0x18] sm:$0xff]
        %v3859 = vld [vmem:[%s3854 + $0x20] sm:$0xff]
        %v3860 = vld [vmem:[%s3854 + $0x28] sm:$0xff]
        %v3861 = vld [vmem:[%s3854 + $0x30] sm:$0xff]
        %v3862 = vld [vmem:[%s3854 + $0x38] sm:$0xff]
        %v3863 = vld [vmem:[%s3854 + $0x40] sm:$0xff]
        %v3864 = vld [vmem:[%s3854 + $0x48] sm:$0xff]
        %v3865 = vld [vmem:[%s3854 + $0x50] sm:$0xff]
        %v3866 = vld [vmem:[%s3854 + $0x58] sm:$0xff]
        %v3867 = vld [vmem:[%s3854 + $0x60] sm:$0xff]
        %v3868 = vld [vmem:[%s3854 + $0x68] sm:$0xff]
        %v3869 = vld [vmem:[%s3854 + $0x70] sm:$0xff]
        %v3870 = vld [vmem:[%s3854 + $0x78] sm:$0xff]
        %v3871 = vld [vmem:[%s3854 + $0x80] sm:$0xff]
        %v3872 = vld [vmem:[%s3854 + $0x88] sm:$0xff]
        %v3873 = vld [vmem:[%s3854 + $0x90] sm:$0xff]
        %v3874 = vld [vmem:[%s3854 + $0x98] sm:$0xff]
        %v3875 = vld [vmem:[%s3854 + $0xa0] sm:$0xff]
        %v3876 = vld [vmem:[%s3854 + $0xa8] sm:$0xff]
        %v3877 = vld [vmem:[%s3854 + $0xb0] sm:$0xff]
        %v3878 = vld [vmem:[%s3854 + $0xb8] sm:$0xff]
        %v3879 = vld [vmem:[%s3854 + $0xc0] sm:$0xff]
        %v3880 = vld [vmem:[%s3854 + $0xc8] sm:$0xff]
        %v3881 = vld [vmem:[%s3854 + $0xd0] sm:$0xff]
        %v3882 = vld [vmem:[%s3854 + $0xd8] sm:$0xff]
        %v3883 = vld [vmem:[%s3854 + $0xe0] sm:$0xff]
        %v3884 = vld [vmem:[%s3854 + $0xe8] sm:$0xff]
        %v3885 = vld [vmem:[%s3854 + $0xf0] sm:$0xff]
        %v3886 = vld [vmem:[%s3854 + $0xf8] sm:$0xff]
        %v3887 = vld [vmem:[%s3854 + $0x100] sm:$0xff]
        %v3888 = vld [vmem:[%s3854 + $0x108] sm:$0xff]
        %v3889 = vld [vmem:[%s3854 + $0x110] sm:$0xff]
        %v3890 = vld [vmem:[%s3854 + $0x118] sm:$0xff]
        %v3891 = vld [vmem:[%s3854 + $0x120] sm:$0xff]
        %v3892 = vld [vmem:[%s3854 + $0x128] sm:$0xff]
        %v3893 = vld [vmem:[%s3854 + $0x130] sm:$0xff]
        %v3894 = vld [vmem:[%s3854 + $0x138] sm:$0xff]
        %v3895 = vld [vmem:[%s3854 + $0x140] sm:$0xff]
        %v3896 = vld [vmem:[%s3854 + $0x148] sm:$0xff]
        %v3897 = vld [vmem:[%s3854 + $0x150] sm:$0xff]
        %v3898 = vld [vmem:[%s3854 + $0x158] sm:$0xff]
        %v3899 = vld [vmem:[%s3854 + $0x160] sm:$0xff]
        %v3900 = vld [vmem:[%s3854 + $0x168] sm:$0xff]
        %v3901 = vld [vmem:[%s3854 + $0x170] sm:$0xff]
        %v3902 = vld [vmem:[%s3854 + $0x178] sm:$0xff]
        %v3903 = vld [vmem:[%s3854 + $0x180] sm:$0xff]
        %v3904 = vld [vmem:[%s3854 + $0x188] sm:$0xff]
        %v3905 = vmul.f32 %v2998, %v3855
        %v3906 = vmul.f32 %v2999, %v3856
        %v3907 = vmul.f32 %v3000, %v3857
        %v3908 = vmul.f32 %v3001, %v3858
        %v3909 = vmul.f32 %v3002, %v3859
        %v3910 = vmul.f32 %v3003, %v3860
        %v3911 = vmul.f32 %v3004, %v3861
        %v3912 = vmul.f32 %v3005, %v3862
        %v3913 = vmul.f32 %v3006, %v3863
        %v3914 = vmul.f32 %v3007, %v3864
        %v3915 = vmul.f32 %v3008, %v3865
        %v3916 = vmul.f32 %v3009, %v3866
        %v3917 = vmul.f32 %v3010, %v3867
        %v3918 = vmul.f32 %v3011, %v3868
        %v3919 = vmul.f32 %v3012, %v3869
        %v3920 = vmul.f32 %v3013, %v3870
        %v3921 = vmul.f32 %v3014, %v3871
        %v3922 = vmul.f32 %v3015, %v3872
        %v3923 = vmul.f32 %v3016, %v3873
        %v3924 = vmul.f32 %v3017, %v3874
        %v3925 = vmul.f32 %v3018, %v3875
        %v3926 = vmul.f32 %v3019, %v3876
        %v3927 = vmul.f32 %v3020, %v3877
        %v3928 = vmul.f32 %v3021, %v3878
        %v3929 = vmul.f32 %v3022, %v3879
        %v3930 = vmul.f32 %v3023, %v3880
        %v3931 = vmul.f32 %v3024, %v3881
        %v3932 = vmul.f32 %v3025, %v3882
        %v3933 = vmul.f32 %v3026, %v3883
        %v3934 = vmul.f32 %v3027, %v3884
        %v3935 = vmul.f32 %v3028, %v3885
        %v3936 = vmul.f32 %v3029, %v3886
        %v3937 = vmul.f32 %v3030, %v3887
        %v3938 = vmul.f32 %v3031, %v3888
        %v3939 = vmul.f32 %v3032, %v3889
        %v3940 = vmul.f32 %v3033, %v3890
        %v3941 = vmul.f32 %v3034, %v3891
        %v3942 = vmul.f32 %v3035, %v3892
        %v3943 = vmul.f32 %v3036, %v3893
        %v3944 = vmul.f32 %v3037, %v3894
        %v3945 = vmul.f32 %v3038, %v3895
        %v3946 = vmul.f32 %v3039, %v3896
        %v3947 = vmul.f32 %v3040, %v3897
        %v3948 = vmul.f32 %v3041, %v3898
        %v3949 = vmul.f32 %v3042, %v3899
        %v3950 = vmul.f32 %v3043, %v3900
        %v3951 = vmul.f32 %v3044, %v3901
        %v3952 = vmul.f32 %v3045, %v3902
        %v3953 = vmul.f32 %v3046, %v3903
        %v3954 = vmul.f32 %v3047, %v3904
        %v3955 = vadd.f32 %v3905, %v3906
        %v3956 = vadd.f32 %v3955, %v3907
        %v3957 = vadd.f32 %v3956, %v3908
        %v3958 = vadd.f32 %v3957, %v3909
        %v3959 = vadd.f32 %v3958, %v3910
        %v3960 = vadd.f32 %v3959, %v3911
        %v3961 = vadd.f32 %v3960, %v3912
        %v3962 = vadd.f32 %v3961, %v3913
        %v3963 = vadd.f32 %v3962, %v3914
        %v3964 = vadd.f32 %v3963, %v3915
        %v3965 = vadd.f32 %v3964, %v3916
        %v3966 = vadd.f32 %v3965, %v3917
        %v3967 = vadd.f32 %v3966, %v3918
        %v3968 = vadd.f32 %v3967, %v3919
        %v3969 = vadd.f32 %v3968, %v3920
        %v3970 = vadd.f32 %v3969, %v3921
        %v3971 = vadd.f32 %v3970, %v3922
        %v3972 = vadd.f32 %v3971, %v3923
        %v3973 = vadd.f32 %v3972, %v3924
        %v3974 = vadd.f32 %v3973, %v3925
        %v3975 = vadd.f32 %v3974, %v3926
        %v3976 = vadd.f32 %v3975, %v3927
        %v3977 = vadd.f32 %v3976, %v3928
        %v3978 = vadd.f32 %v3977, %v3929
        %v3979 = vadd.f32 %v3978, %v3930
        %v3980 = vadd.f32 %v3979, %v3931
        %v3981 = vadd.f32 %v3980, %v3932
        %v3982 = vadd.f32 %v3981, %v3933
        %v3983 = vadd.f32 %v3982, %v3934
        %v3984 = vadd.f32 %v3983, %v3935
        %v3985 = vadd.f32 %v3984, %v3936
        %v3986 = vadd.f32 %v3985, %v3937
        %v3987 = vadd.f32 %v3986, %v3938
        %v3988 = vadd.f32 %v3987, %v3939
        %v3989 = vadd.f32 %v3988, %v3940
        %v3990 = vadd.f32 %v3989, %v3941
        %v3991 = vadd.f32 %v3990, %v3942
        %v3992 = vadd.f32 %v3991, %v3943
        %v3993 = vadd.f32 %v3992, %v3944
        %v3994 = vadd.f32 %v3993, %v3945
        %v3995 = vadd.f32 %v3994, %v3946
        %v3996 = vadd.f32 %v3995, %v3947
        %v3997 = vadd.f32 %v3996, %v3948
        %v3998 = vadd.f32 %v3997, %v3949
        %v3999 = vadd.f32 %v3998, %v3950
        %v4000 = vadd.f32 %v3999, %v3951
        %v4001 = vadd.f32 %v4000, %v3952
        %v4002 = vadd.f32 %v4001, %v3953
        %v4003 = vadd.f32 %v4002, %v3954
        %v4004 = vrot.slane %v4003, 4
        %v4005 = vadd.f32 %v4003, %v4004
        %v4006 = vrot.slane %v4005, 2
        %v4007 = vadd.f32 %v4005, %v4006
        %v4008 = vrot.slane %v4007, 1
        %v4009 = vadd.f32 %v4007, %v4008
        %4010 = vadd.xlane.f32.xlu0 %v4009
        %v4011 = vpop.xlane.xlu0 %4010
        %vm4012 = vcmp.eq.s32.totalorder %v3049, 5
        %v4013 = vsel %vm4012, %v4011, 0.0
        %v4014 = vadd.f32 %v3853, %v4013
        %s4015 = scalar_lea.vmem %s4, 2400
        %v4016 = vld [vmem:[%s4015] sm:$0xff]
        %v4017 = vld [vmem:[%s4015 + $0x8] sm:$0xff]
        %v4018 = vld [vmem:[%s4015 + $0x10] sm:$0xff]
        %v4019 = vld [vmem:[%s4015 + $0x18] sm:$0xff]
        %v4020 = vld [vmem:[%s4015 + $0x20] sm:$0xff]
        %v4021 = vld [vmem:[%s4015 + $0x28] sm:$0xff]
        %v4022 = vld [vmem:[%s4015 + $0x30] sm:$0xff]
        %v4023 = vld [vmem:[%s4015 + $0x38] sm:$0xff]
        %v4024 = vld [vmem:[%s4015 + $0x40] sm:$0xff]
        %v4025 = vld [vmem:[%s4015 + $0x48] sm:$0xff]
        %v4026 = vld [vmem:[%s4015 + $0x50] sm:$0xff]
        %v4027 = vld [vmem:[%s4015 + $0x58] sm:$0xff]
        %v4028 = vld [vmem:[%s4015 + $0x60] sm:$0xff]
        %v4029 = vld [vmem:[%s4015 + $0x68] sm:$0xff]
        %v4030 = vld [vmem:[%s4015 + $0x70] sm:$0xff]
        %v4031 = vld [vmem:[%s4015 + $0x78] sm:$0xff]
        %v4032 = vld [vmem:[%s4015 + $0x80] sm:$0xff]
        %v4033 = vld [vmem:[%s4015 + $0x88] sm:$0xff]
        %v4034 = vld [vmem:[%s4015 + $0x90] sm:$0xff]
        %v4035 = vld [vmem:[%s4015 + $0x98] sm:$0xff]
        %v4036 = vld [vmem:[%s4015 + $0xa0] sm:$0xff]
        %v4037 = vld [vmem:[%s4015 + $0xa8] sm:$0xff]
        %v4038 = vld [vmem:[%s4015 + $0xb0] sm:$0xff]
        %v4039 = vld [vmem:[%s4015 + $0xb8] sm:$0xff]
        %v4040 = vld [vmem:[%s4015 + $0xc0] sm:$0xff]
        %v4041 = vld [vmem:[%s4015 + $0xc8] sm:$0xff]
        %v4042 = vld [vmem:[%s4015 + $0xd0] sm:$0xff]
        %v4043 = vld [vmem:[%s4015 + $0xd8] sm:$0xff]
        %v4044 = vld [vmem:[%s4015 + $0xe0] sm:$0xff]
        %v4045 = vld [vmem:[%s4015 + $0xe8] sm:$0xff]
        %v4046 = vld [vmem:[%s4015 + $0xf0] sm:$0xff]
        %v4047 = vld [vmem:[%s4015 + $0xf8] sm:$0xff]
        %v4048 = vld [vmem:[%s4015 + $0x100] sm:$0xff]
        %v4049 = vld [vmem:[%s4015 + $0x108] sm:$0xff]
        %v4050 = vld [vmem:[%s4015 + $0x110] sm:$0xff]
        %v4051 = vld [vmem:[%s4015 + $0x118] sm:$0xff]
        %v4052 = vld [vmem:[%s4015 + $0x120] sm:$0xff]
        %v4053 = vld [vmem:[%s4015 + $0x128] sm:$0xff]
        %v4054 = vld [vmem:[%s4015 + $0x130] sm:$0xff]
        %v4055 = vld [vmem:[%s4015 + $0x138] sm:$0xff]
        %v4056 = vld [vmem:[%s4015 + $0x140] sm:$0xff]
        %v4057 = vld [vmem:[%s4015 + $0x148] sm:$0xff]
        %v4058 = vld [vmem:[%s4015 + $0x150] sm:$0xff]
        %v4059 = vld [vmem:[%s4015 + $0x158] sm:$0xff]
        %v4060 = vld [vmem:[%s4015 + $0x160] sm:$0xff]
        %v4061 = vld [vmem:[%s4015 + $0x168] sm:$0xff]
        %v4062 = vld [vmem:[%s4015 + $0x170] sm:$0xff]
        %v4063 = vld [vmem:[%s4015 + $0x178] sm:$0xff]
        %v4064 = vld [vmem:[%s4015 + $0x180] sm:$0xff]
        %v4065 = vld [vmem:[%s4015 + $0x188] sm:$0xff]
        %v4066 = vmul.f32 %v2998, %v4016
        %v4067 = vmul.f32 %v2999, %v4017
        %v4068 = vmul.f32 %v3000, %v4018
        %v4069 = vmul.f32 %v3001, %v4019
        %v4070 = vmul.f32 %v3002, %v4020
        %v4071 = vmul.f32 %v3003, %v4021
        %v4072 = vmul.f32 %v3004, %v4022
        %v4073 = vmul.f32 %v3005, %v4023
        %v4074 = vmul.f32 %v3006, %v4024
        %v4075 = vmul.f32 %v3007, %v4025
        %v4076 = vmul.f32 %v3008, %v4026
        %v4077 = vmul.f32 %v3009, %v4027
        %v4078 = vmul.f32 %v3010, %v4028
        %v4079 = vmul.f32 %v3011, %v4029
        %v4080 = vmul.f32 %v3012, %v4030
        %v4081 = vmul.f32 %v3013, %v4031
        %v4082 = vmul.f32 %v3014, %v4032
        %v4083 = vmul.f32 %v3015, %v4033
        %v4084 = vmul.f32 %v3016, %v4034
        %v4085 = vmul.f32 %v3017, %v4035
        %v4086 = vmul.f32 %v3018, %v4036
        %v4087 = vmul.f32 %v3019, %v4037
        %v4088 = vmul.f32 %v3020, %v4038
        %v4089 = vmul.f32 %v3021, %v4039
        %v4090 = vmul.f32 %v3022, %v4040
        %v4091 = vmul.f32 %v3023, %v4041
        %v4092 = vmul.f32 %v3024, %v4042
        %v4093 = vmul.f32 %v3025, %v4043
        %v4094 = vmul.f32 %v3026, %v4044
        %v4095 = vmul.f32 %v3027, %v4045
        %v4096 = vmul.f32 %v3028, %v4046
        %v4097 = vmul.f32 %v3029, %v4047
        %v4098 = vmul.f32 %v3030, %v4048
        %v4099 = vmul.f32 %v3031, %v4049
        %v4100 = vmul.f32 %v3032, %v4050
        %v4101 = vmul.f32 %v3033, %v4051
        %v4102 = vmul.f32 %v3034, %v4052
        %v4103 = vmul.f32 %v3035, %v4053
        %v4104 = vmul.f32 %v3036, %v4054
        %v4105 = vmul.f32 %v3037, %v4055
        %v4106 = vmul.f32 %v3038, %v4056
        %v4107 = vmul.f32 %v3039, %v4057
        %v4108 = vmul.f32 %v3040, %v4058
        %v4109 = vmul.f32 %v3041, %v4059
        %v4110 = vmul.f32 %v3042, %v4060
        %v4111 = vmul.f32 %v3043, %v4061
        %v4112 = vmul.f32 %v3044, %v4062
        %v4113 = vmul.f32 %v3045, %v4063
        %v4114 = vmul.f32 %v3046, %v4064
        %v4115 = vmul.f32 %v3047, %v4065
        %v4116 = vadd.f32 %v4066, %v4067
        %v4117 = vadd.f32 %v4116, %v4068
        %v4118 = vadd.f32 %v4117, %v4069
        %v4119 = vadd.f32 %v4118, %v4070
        %v4120 = vadd.f32 %v4119, %v4071
        %v4121 = vadd.f32 %v4120, %v4072
        %v4122 = vadd.f32 %v4121, %v4073
        %v4123 = vadd.f32 %v4122, %v4074
        %v4124 = vadd.f32 %v4123, %v4075
        %v4125 = vadd.f32 %v4124, %v4076
        %v4126 = vadd.f32 %v4125, %v4077
        %v4127 = vadd.f32 %v4126, %v4078
        %v4128 = vadd.f32 %v4127, %v4079
        %v4129 = vadd.f32 %v4128, %v4080
        %v4130 = vadd.f32 %v4129, %v4081
        %v4131 = vadd.f32 %v4130, %v4082
        %v4132 = vadd.f32 %v4131, %v4083
        %v4133 = vadd.f32 %v4132, %v4084
        %v4134 = vadd.f32 %v4133, %v4085
        %v4135 = vadd.f32 %v4134, %v4086
        %v4136 = vadd.f32 %v4135, %v4087
        %v4137 = vadd.f32 %v4136, %v4088
        %v4138 = vadd.f32 %v4137, %v4089
        %v4139 = vadd.f32 %v4138, %v4090
        %v4140 = vadd.f32 %v4139, %v4091
        %v4141 = vadd.f32 %v4140, %v4092
        %v4142 = vadd.f32 %v4141, %v4093
        %v4143 = vadd.f32 %v4142, %v4094
        %v4144 = vadd.f32 %v4143, %v4095
        %v4145 = vadd.f32 %v4144, %v4096
        %v4146 = vadd.f32 %v4145, %v4097
        %v4147 = vadd.f32 %v4146, %v4098
        %v4148 = vadd.f32 %v4147, %v4099
        %v4149 = vadd.f32 %v4148, %v4100
        %v4150 = vadd.f32 %v4149, %v4101
        %v4151 = vadd.f32 %v4150, %v4102
        %v4152 = vadd.f32 %v4151, %v4103
        %v4153 = vadd.f32 %v4152, %v4104
        %v4154 = vadd.f32 %v4153, %v4105
        %v4155 = vadd.f32 %v4154, %v4106
        %v4156 = vadd.f32 %v4155, %v4107
        %v4157 = vadd.f32 %v4156, %v4108
        %v4158 = vadd.f32 %v4157, %v4109
        %v4159 = vadd.f32 %v4158, %v4110
        %v4160 = vadd.f32 %v4159, %v4111
        %v4161 = vadd.f32 %v4160, %v4112
        %v4162 = vadd.f32 %v4161, %v4113
        %v4163 = vadd.f32 %v4162, %v4114
        %v4164 = vadd.f32 %v4163, %v4115
        %v4165 = vrot.slane %v4164, 4
        %v4166 = vadd.f32 %v4164, %v4165
        %v4167 = vrot.slane %v4166, 2
        %v4168 = vadd.f32 %v4166, %v4167
        %v4169 = vrot.slane %v4168, 1
        %v4170 = vadd.f32 %v4168, %v4169
        %4171 = vadd.xlane.f32.xlu0 %v4170
        %v4172 = vpop.xlane.xlu0 %4171
        %vm4173 = vcmp.eq.s32.totalorder %v3049, 6
        %v4174 = vsel %vm4173, %v4172, 0.0
        %v4175 = vadd.f32 %v4014, %v4174
        %s4176 = scalar_lea.vmem %s4, 2800
        %v4177 = vld [vmem:[%s4176] sm:$0xff]
        %v4178 = vld [vmem:[%s4176 + $0x8] sm:$0xff]
        %v4179 = vld [vmem:[%s4176 + $0x10] sm:$0xff]
        %v4180 = vld [vmem:[%s4176 + $0x18] sm:$0xff]
        %v4181 = vld [vmem:[%s4176 + $0x20] sm:$0xff]
        %v4182 = vld [vmem:[%s4176 + $0x28] sm:$0xff]
        %v4183 = vld [vmem:[%s4176 + $0x30] sm:$0xff]
        %v4184 = vld [vmem:[%s4176 + $0x38] sm:$0xff]
        %v4185 = vld [vmem:[%s4176 + $0x40] sm:$0xff]
        %v4186 = vld [vmem:[%s4176 + $0x48] sm:$0xff]
        %v4187 = vld [vmem:[%s4176 + $0x50] sm:$0xff]
        %v4188 = vld [vmem:[%s4176 + $0x58] sm:$0xff]
        %v4189 = vld [vmem:[%s4176 + $0x60] sm:$0xff]
        %v4190 = vld [vmem:[%s4176 + $0x68] sm:$0xff]
        %v4191 = vld [vmem:[%s4176 + $0x70] sm:$0xff]
        %v4192 = vld [vmem:[%s4176 + $0x78] sm:$0xff]
        %v4193 = vld [vmem:[%s4176 + $0x80] sm:$0xff]
        %v4194 = vld [vmem:[%s4176 + $0x88] sm:$0xff]
        %v4195 = vld [vmem:[%s4176 + $0x90] sm:$0xff]
        %v4196 = vld [vmem:[%s4176 + $0x98] sm:$0xff]
        %v4197 = vld [vmem:[%s4176 + $0xa0] sm:$0xff]
        %v4198 = vld [vmem:[%s4176 + $0xa8] sm:$0xff]
        %v4199 = vld [vmem:[%s4176 + $0xb0] sm:$0xff]
        %v4200 = vld [vmem:[%s4176 + $0xb8] sm:$0xff]
        %v4201 = vld [vmem:[%s4176 + $0xc0] sm:$0xff]
        %v4202 = vld [vmem:[%s4176 + $0xc8] sm:$0xff]
        %v4203 = vld [vmem:[%s4176 + $0xd0] sm:$0xff]
        %v4204 = vld [vmem:[%s4176 + $0xd8] sm:$0xff]
        %v4205 = vld [vmem:[%s4176 + $0xe0] sm:$0xff]
        %v4206 = vld [vmem:[%s4176 + $0xe8] sm:$0xff]
        %v4207 = vld [vmem:[%s4176 + $0xf0] sm:$0xff]
        %v4208 = vld [vmem:[%s4176 + $0xf8] sm:$0xff]
        %v4209 = vld [vmem:[%s4176 + $0x100] sm:$0xff]
        %v4210 = vld [vmem:[%s4176 + $0x108] sm:$0xff]
        %v4211 = vld [vmem:[%s4176 + $0x110] sm:$0xff]
        %v4212 = vld [vmem:[%s4176 + $0x118] sm:$0xff]
        %v4213 = vld [vmem:[%s4176 + $0x120] sm:$0xff]
        %v4214 = vld [vmem:[%s4176 + $0x128] sm:$0xff]
        %v4215 = vld [vmem:[%s4176 + $0x130] sm:$0xff]
        %v4216 = vld [vmem:[%s4176 + $0x138] sm:$0xff]
        %v4217 = vld [vmem:[%s4176 + $0x140] sm:$0xff]
        %v4218 = vld [vmem:[%s4176 + $0x148] sm:$0xff]
        %v4219 = vld [vmem:[%s4176 + $0x150] sm:$0xff]
        %v4220 = vld [vmem:[%s4176 + $0x158] sm:$0xff]
        %v4221 = vld [vmem:[%s4176 + $0x160] sm:$0xff]
        %v4222 = vld [vmem:[%s4176 + $0x168] sm:$0xff]
        %v4223 = vld [vmem:[%s4176 + $0x170] sm:$0xff]
        %v4224 = vld [vmem:[%s4176 + $0x178] sm:$0xff]
        %v4225 = vld [vmem:[%s4176 + $0x180] sm:$0xff]
        %v4226 = vld [vmem:[%s4176 + $0x188] sm:$0xff]
        %v4227 = vmul.f32 %v2998, %v4177
        %v4228 = vmul.f32 %v2999, %v4178
        %v4229 = vmul.f32 %v3000, %v4179
        %v4230 = vmul.f32 %v3001, %v4180
        %v4231 = vmul.f32 %v3002, %v4181
        %v4232 = vmul.f32 %v3003, %v4182
        %v4233 = vmul.f32 %v3004, %v4183
        %v4234 = vmul.f32 %v3005, %v4184
        %v4235 = vmul.f32 %v3006, %v4185
        %v4236 = vmul.f32 %v3007, %v4186
        %v4237 = vmul.f32 %v3008, %v4187
        %v4238 = vmul.f32 %v3009, %v4188
        %v4239 = vmul.f32 %v3010, %v4189
        %v4240 = vmul.f32 %v3011, %v4190
        %v4241 = vmul.f32 %v3012, %v4191
        %v4242 = vmul.f32 %v3013, %v4192
        %v4243 = vmul.f32 %v3014, %v4193
        %v4244 = vmul.f32 %v3015, %v4194
        %v4245 = vmul.f32 %v3016, %v4195
        %v4246 = vmul.f32 %v3017, %v4196
        %v4247 = vmul.f32 %v3018, %v4197
        %v4248 = vmul.f32 %v3019, %v4198
        %v4249 = vmul.f32 %v3020, %v4199
        %v4250 = vmul.f32 %v3021, %v4200
        %v4251 = vmul.f32 %v3022, %v4201
        %v4252 = vmul.f32 %v3023, %v4202
        %v4253 = vmul.f32 %v3024, %v4203
        %v4254 = vmul.f32 %v3025, %v4204
        %v4255 = vmul.f32 %v3026, %v4205
        %v4256 = vmul.f32 %v3027, %v4206
        %v4257 = vmul.f32 %v3028, %v4207
        %v4258 = vmul.f32 %v3029, %v4208
        %v4259 = vmul.f32 %v3030, %v4209
        %v4260 = vmul.f32 %v3031, %v4210
        %v4261 = vmul.f32 %v3032, %v4211
        %v4262 = vmul.f32 %v3033, %v4212
        %v4263 = vmul.f32 %v3034, %v4213
        %v4264 = vmul.f32 %v3035, %v4214
        %v4265 = vmul.f32 %v3036, %v4215
        %v4266 = vmul.f32 %v3037, %v4216
        %v4267 = vmul.f32 %v3038, %v4217
        %v4268 = vmul.f32 %v3039, %v4218
        %v4269 = vmul.f32 %v3040, %v4219
        %v4270 = vmul.f32 %v3041, %v4220
        %v4271 = vmul.f32 %v3042, %v4221
        %v4272 = vmul.f32 %v3043, %v4222
        %v4273 = vmul.f32 %v3044, %v4223
        %v4274 = vmul.f32 %v3045, %v4224
        %v4275 = vmul.f32 %v3046, %v4225
        %v4276 = vmul.f32 %v3047, %v4226
        %v4277 = vadd.f32 %v4227, %v4228
        %v4278 = vadd.f32 %v4277, %v4229
        %v4279 = vadd.f32 %v4278, %v4230
        %v4280 = vadd.f32 %v4279, %v4231
        %v4281 = vadd.f32 %v4280, %v4232
        %v4282 = vadd.f32 %v4281, %v4233
        %v4283 = vadd.f32 %v4282, %v4234
        %v4284 = vadd.f32 %v4283, %v4235
        %v4285 = vadd.f32 %v4284, %v4236
        %v4286 = vadd.f32 %v4285, %v4237
        %v4287 = vadd.f32 %v4286, %v4238
        %v4288 = vadd.f32 %v4287, %v4239
        %v4289 = vadd.f32 %v4288, %v4240
        %v4290 = vadd.f32 %v4289, %v4241
        %v4291 = vadd.f32 %v4290, %v4242
        %v4292 = vadd.f32 %v4291, %v4243
        %v4293 = vadd.f32 %v4292, %v4244
        %v4294 = vadd.f32 %v4293, %v4245
        %v4295 = vadd.f32 %v4294, %v4246
        %v4296 = vadd.f32 %v4295, %v4247
        %v4297 = vadd.f32 %v4296, %v4248
        %v4298 = vadd.f32 %v4297, %v4249
        %v4299 = vadd.f32 %v4298, %v4250
        %v4300 = vadd.f32 %v4299, %v4251
        %v4301 = vadd.f32 %v4300, %v4252
        %v4302 = vadd.f32 %v4301, %v4253
        %v4303 = vadd.f32 %v4302, %v4254
        %v4304 = vadd.f32 %v4303, %v4255
        %v4305 = vadd.f32 %v4304, %v4256
        %v4306 = vadd.f32 %v4305, %v4257
        %v4307 = vadd.f32 %v4306, %v4258
        %v4308 = vadd.f32 %v4307, %v4259
        %v4309 = vadd.f32 %v4308, %v4260
        %v4310 = vadd.f32 %v4309, %v4261
        %v4311 = vadd.f32 %v4310, %v4262
        %v4312 = vadd.f32 %v4311, %v4263
        %v4313 = vadd.f32 %v4312, %v4264
        %v4314 = vadd.f32 %v4313, %v4265
        %v4315 = vadd.f32 %v4314, %v4266
        %v4316 = vadd.f32 %v4315, %v4267
        %v4317 = vadd.f32 %v4316, %v4268
        %v4318 = vadd.f32 %v4317, %v4269
        %v4319 = vadd.f32 %v4318, %v4270
        %v4320 = vadd.f32 %v4319, %v4271
        %v4321 = vadd.f32 %v4320, %v4272
        %v4322 = vadd.f32 %v4321, %v4273
        %v4323 = vadd.f32 %v4322, %v4274
        %v4324 = vadd.f32 %v4323, %v4275
        %v4325 = vadd.f32 %v4324, %v4276
        %v4326 = vrot.slane %v4325, 4
        %v4327 = vadd.f32 %v4325, %v4326
        %v4328 = vrot.slane %v4327, 2
        %v4329 = vadd.f32 %v4327, %v4328
        %v4330 = vrot.slane %v4329, 1
        %v4331 = vadd.f32 %v4329, %v4330
        %4332 = vadd.xlane.f32.xlu0 %v4331
        %v4333 = vpop.xlane.xlu0 %4332
        %vm4334 = vcmp.eq.s32.totalorder %v3049, 7
        %v4335 = vsel %vm4334, %v4333, 0.0
        %v4336 = vadd.f32 %v4175, %v4335
        %s4337 = scalar_lea.vmem %s4, 3200
        %v4338 = vld [vmem:[%s4337] sm:$0xff]
        %v4339 = vld [vmem:[%s4337 + $0x8] sm:$0xff]
        %v4340 = vld [vmem:[%s4337 + $0x10] sm:$0xff]
        %v4341 = vld [vmem:[%s4337 + $0x18] sm:$0xff]
        %v4342 = vld [vmem:[%s4337 + $0x20] sm:$0xff]
        %v4343 = vld [vmem:[%s4337 + $0x28] sm:$0xff]
        %v4344 = vld [vmem:[%s4337 + $0x30] sm:$0xff]
        %v4345 = vld [vmem:[%s4337 + $0x38] sm:$0xff]
        %v4346 = vld [vmem:[%s4337 + $0x40] sm:$0xff]
        %v4347 = vld [vmem:[%s4337 + $0x48] sm:$0xff]
        %v4348 = vld [vmem:[%s4337 + $0x50] sm:$0xff]
        %v4349 = vld [vmem:[%s4337 + $0x58] sm:$0xff]
        %v4350 = vld [vmem:[%s4337 + $0x60] sm:$0xff]
        %v4351 = vld [vmem:[%s4337 + $0x68] sm:$0xff]
        %v4352 = vld [vmem:[%s4337 + $0x70] sm:$0xff]
        %v4353 = vld [vmem:[%s4337 + $0x78] sm:$0xff]
        %v4354 = vld [vmem:[%s4337 + $0x80] sm:$0xff]
        %v4355 = vld [vmem:[%s4337 + $0x88] sm:$0xff]
        %v4356 = vld [vmem:[%s4337 + $0x90] sm:$0xff]
        %v4357 = vld [vmem:[%s4337 + $0x98] sm:$0xff]
        %v4358 = vld [vmem:[%s4337 + $0xa0] sm:$0xff]
        %v4359 = vld [vmem:[%s4337 + $0xa8] sm:$0xff]
        %v4360 = vld [vmem:[%s4337 + $0xb0] sm:$0xff]
        %v4361 = vld [vmem:[%s4337 + $0xb8] sm:$0xff]
        %v4362 = vld [vmem:[%s4337 + $0xc0] sm:$0xff]
        %v4363 = vld [vmem:[%s4337 + $0xc8] sm:$0xff]
        %v4364 = vld [vmem:[%s4337 + $0xd0] sm:$0xff]
        %v4365 = vld [vmem:[%s4337 + $0xd8] sm:$0xff]
        %v4366 = vld [vmem:[%s4337 + $0xe0] sm:$0xff]
        %v4367 = vld [vmem:[%s4337 + $0xe8] sm:$0xff]
        %v4368 = vld [vmem:[%s4337 + $0xf0] sm:$0xff]
        %v4369 = vld [vmem:[%s4337 + $0xf8] sm:$0xff]
        %v4370 = vld [vmem:[%s4337 + $0x100] sm:$0xff]
        %v4371 = vld [vmem:[%s4337 + $0x108] sm:$0xff]
        %v4372 = vld [vmem:[%s4337 + $0x110] sm:$0xff]
        %v4373 = vld [vmem:[%s4337 + $0x118] sm:$0xff]
        %v4374 = vld [vmem:[%s4337 + $0x120] sm:$0xff]
        %v4375 = vld [vmem:[%s4337 + $0x128] sm:$0xff]
        %v4376 = vld [vmem:[%s4337 + $0x130] sm:$0xff]
        %v4377 = vld [vmem:[%s4337 + $0x138] sm:$0xff]
        %v4378 = vld [vmem:[%s4337 + $0x140] sm:$0xff]
        %v4379 = vld [vmem:[%s4337 + $0x148] sm:$0xff]
        %v4380 = vld [vmem:[%s4337 + $0x150] sm:$0xff]
        %v4381 = vld [vmem:[%s4337 + $0x158] sm:$0xff]
        %v4382 = vld [vmem:[%s4337 + $0x160] sm:$0xff]
        %v4383 = vld [vmem:[%s4337 + $0x168] sm:$0xff]
        %v4384 = vld [vmem:[%s4337 + $0x170] sm:$0xff]
        %v4385 = vld [vmem:[%s4337 + $0x178] sm:$0xff]
        %v4386 = vld [vmem:[%s4337 + $0x180] sm:$0xff]
        %v4387 = vld [vmem:[%s4337 + $0x188] sm:$0xff]
        %v4388 = vmul.f32 %v2998, %v4338
        %v4389 = vmul.f32 %v2999, %v4339
        %v4390 = vmul.f32 %v3000, %v4340
        %v4391 = vmul.f32 %v3001, %v4341
        %v4392 = vmul.f32 %v3002, %v4342
        %v4393 = vmul.f32 %v3003, %v4343
        %v4394 = vmul.f32 %v3004, %v4344
        %v4395 = vmul.f32 %v3005, %v4345
        %v4396 = vmul.f32 %v3006, %v4346
        %v4397 = vmul.f32 %v3007, %v4347
        %v4398 = vmul.f32 %v3008, %v4348
        %v4399 = vmul.f32 %v3009, %v4349
        %v4400 = vmul.f32 %v3010, %v4350
        %v4401 = vmul.f32 %v3011, %v4351
        %v4402 = vmul.f32 %v3012, %v4352
        %v4403 = vmul.f32 %v3013, %v4353
        %v4404 = vmul.f32 %v3014, %v4354
        %v4405 = vmul.f32 %v3015, %v4355
        %v4406 = vmul.f32 %v3016, %v4356
        %v4407 = vmul.f32 %v3017, %v4357
        %v4408 = vmul.f32 %v3018, %v4358
        %v4409 = vmul.f32 %v3019, %v4359
        %v4410 = vmul.f32 %v3020, %v4360
        %v4411 = vmul.f32 %v3021, %v4361
        %v4412 = vmul.f32 %v3022, %v4362
        %v4413 = vmul.f32 %v3023, %v4363
        %v4414 = vmul.f32 %v3024, %v4364
        %v4415 = vmul.f32 %v3025, %v4365
        %v4416 = vmul.f32 %v3026, %v4366
        %v4417 = vmul.f32 %v3027, %v4367
        %v4418 = vmul.f32 %v3028, %v4368
        %v4419 = vmul.f32 %v3029, %v4369
        %v4420 = vmul.f32 %v3030, %v4370
        %v4421 = vmul.f32 %v3031, %v4371
        %v4422 = vmul.f32 %v3032, %v4372
        %v4423 = vmul.f32 %v3033, %v4373
        %v4424 = vmul.f32 %v3034, %v4374
        %v4425 = vmul.f32 %v3035, %v4375
        %v4426 = vmul.f32 %v3036, %v4376
        %v4427 = vmul.f32 %v3037, %v4377
        %v4428 = vmul.f32 %v3038, %v4378
        %v4429 = vmul.f32 %v3039, %v4379
        %v4430 = vmul.f32 %v3040, %v4380
        %v4431 = vmul.f32 %v3041, %v4381
        %v4432 = vmul.f32 %v3042, %v4382
        %v4433 = vmul.f32 %v3043, %v4383
        %v4434 = vmul.f32 %v3044, %v4384
        %v4435 = vmul.f32 %v3045, %v4385
        %v4436 = vmul.f32 %v3046, %v4386
        %v4437 = vmul.f32 %v3047, %v4387
        %v4438 = vadd.f32 %v4388, %v4389
        %v4439 = vadd.f32 %v4438, %v4390
        %v4440 = vadd.f32 %v4439, %v4391
        %v4441 = vadd.f32 %v4440, %v4392
        %v4442 = vadd.f32 %v4441, %v4393
        %v4443 = vadd.f32 %v4442, %v4394
        %v4444 = vadd.f32 %v4443, %v4395
        %v4445 = vadd.f32 %v4444, %v4396
        %v4446 = vadd.f32 %v4445, %v4397
        %v4447 = vadd.f32 %v4446, %v4398
        %v4448 = vadd.f32 %v4447, %v4399
        %v4449 = vadd.f32 %v4448, %v4400
        %v4450 = vadd.f32 %v4449, %v4401
        %v4451 = vadd.f32 %v4450, %v4402
        %v4452 = vadd.f32 %v4451, %v4403
        %v4453 = vadd.f32 %v4452, %v4404
        %v4454 = vadd.f32 %v4453, %v4405
        %v4455 = vadd.f32 %v4454, %v4406
        %v4456 = vadd.f32 %v4455, %v4407
        %v4457 = vadd.f32 %v4456, %v4408
        %v4458 = vadd.f32 %v4457, %v4409
        %v4459 = vadd.f32 %v4458, %v4410
        %v4460 = vadd.f32 %v4459, %v4411
        %v4461 = vadd.f32 %v4460, %v4412
        %v4462 = vadd.f32 %v4461, %v4413
        %v4463 = vadd.f32 %v4462, %v4414
        %v4464 = vadd.f32 %v4463, %v4415
        %v4465 = vadd.f32 %v4464, %v4416
        %v4466 = vadd.f32 %v4465, %v4417
        %v4467 = vadd.f32 %v4466, %v4418
        %v4468 = vadd.f32 %v4467, %v4419
        %v4469 = vadd.f32 %v4468, %v4420
        %v4470 = vadd.f32 %v4469, %v4421
        %v4471 = vadd.f32 %v4470, %v4422
        %v4472 = vadd.f32 %v4471, %v4423
        %v4473 = vadd.f32 %v4472, %v4424
        %v4474 = vadd.f32 %v4473, %v4425
        %v4475 = vadd.f32 %v4474, %v4426
        %v4476 = vadd.f32 %v4475, %v4427
        %v4477 = vadd.f32 %v4476, %v4428
        %v4478 = vadd.f32 %v4477, %v4429
        %v4479 = vadd.f32 %v4478, %v4430
        %v4480 = vadd.f32 %v4479, %v4431
        %v4481 = vadd.f32 %v4480, %v4432
        %v4482 = vadd.f32 %v4481, %v4433
        %v4483 = vadd.f32 %v4482, %v4434
        %v4484 = vadd.f32 %v4483, %v4435
        %v4485 = vadd.f32 %v4484, %v4436
        %v4486 = vadd.f32 %v4485, %v4437
        %v4487 = vrot.slane %v4486, 4
        %v4488 = vadd.f32 %v4486, %v4487
        %v4489 = vrot.slane %v4488, 2
        %v4490 = vadd.f32 %v4488, %v4489
        %v4491 = vrot.slane %v4490, 1
        %v4492 = vadd.f32 %v4490, %v4491
        %4493 = vadd.xlane.f32.xlu0 %v4492
        %v4494 = vpop.xlane.xlu0 %4493
        %vm4495 = vcmp.eq.s32.totalorder %v3049, 8
        %v4496 = vsel %vm4495, %v4494, 0.0
        %v4497 = vadd.f32 %v4336, %v4496
        %s4498 = scalar_lea.vmem %s4, 3600
        %v4499 = vld [vmem:[%s4498] sm:$0xff]
        %v4500 = vld [vmem:[%s4498 + $0x8] sm:$0xff]
        %v4501 = vld [vmem:[%s4498 + $0x10] sm:$0xff]
        %v4502 = vld [vmem:[%s4498 + $0x18] sm:$0xff]
        %v4503 = vld [vmem:[%s4498 + $0x20] sm:$0xff]
        %v4504 = vld [vmem:[%s4498 + $0x28] sm:$0xff]
        %v4505 = vld [vmem:[%s4498 + $0x30] sm:$0xff]
        %v4506 = vld [vmem:[%s4498 + $0x38] sm:$0xff]
        %v4507 = vld [vmem:[%s4498 + $0x40] sm:$0xff]
        %v4508 = vld [vmem:[%s4498 + $0x48] sm:$0xff]
        %v4509 = vld [vmem:[%s4498 + $0x50] sm:$0xff]
        %v4510 = vld [vmem:[%s4498 + $0x58] sm:$0xff]
        %v4511 = vld [vmem:[%s4498 + $0x60] sm:$0xff]
        %v4512 = vld [vmem:[%s4498 + $0x68] sm:$0xff]
        %v4513 = vld [vmem:[%s4498 + $0x70] sm:$0xff]
        %v4514 = vld [vmem:[%s4498 + $0x78] sm:$0xff]
        %v4515 = vld [vmem:[%s4498 + $0x80] sm:$0xff]
        %v4516 = vld [vmem:[%s4498 + $0x88] sm:$0xff]
        %v4517 = vld [vmem:[%s4498 + $0x90] sm:$0xff]
        %v4518 = vld [vmem:[%s4498 + $0x98] sm:$0xff]
        %v4519 = vld [vmem:[%s4498 + $0xa0] sm:$0xff]
        %v4520 = vld [vmem:[%s4498 + $0xa8] sm:$0xff]
        %v4521 = vld [vmem:[%s4498 + $0xb0] sm:$0xff]
        %v4522 = vld [vmem:[%s4498 + $0xb8] sm:$0xff]
        %v4523 = vld [vmem:[%s4498 + $0xc0] sm:$0xff]
        %v4524 = vld [vmem:[%s4498 + $0xc8] sm:$0xff]
        %v4525 = vld [vmem:[%s4498 + $0xd0] sm:$0xff]
        %v4526 = vld [vmem:[%s4498 + $0xd8] sm:$0xff]
        %v4527 = vld [vmem:[%s4498 + $0xe0] sm:$0xff]
        %v4528 = vld [vmem:[%s4498 + $0xe8] sm:$0xff]
        %v4529 = vld [vmem:[%s4498 + $0xf0] sm:$0xff]
        %v4530 = vld [vmem:[%s4498 + $0xf8] sm:$0xff]
        %v4531 = vld [vmem:[%s4498 + $0x100] sm:$0xff]
        %v4532 = vld [vmem:[%s4498 + $0x108] sm:$0xff]
        %v4533 = vld [vmem:[%s4498 + $0x110] sm:$0xff]
        %v4534 = vld [vmem:[%s4498 + $0x118] sm:$0xff]
        %v4535 = vld [vmem:[%s4498 + $0x120] sm:$0xff]
        %v4536 = vld [vmem:[%s4498 + $0x128] sm:$0xff]
        %v4537 = vld [vmem:[%s4498 + $0x130] sm:$0xff]
        %v4538 = vld [vmem:[%s4498 + $0x138] sm:$0xff]
        %v4539 = vld [vmem:[%s4498 + $0x140] sm:$0xff]
        %v4540 = vld [vmem:[%s4498 + $0x148] sm:$0xff]
        %v4541 = vld [vmem:[%s4498 + $0x150] sm:$0xff]
        %v4542 = vld [vmem:[%s4498 + $0x158] sm:$0xff]
        %v4543 = vld [vmem:[%s4498 + $0x160] sm:$0xff]
        %v4544 = vld [vmem:[%s4498 + $0x168] sm:$0xff]
        %v4545 = vld [vmem:[%s4498 + $0x170] sm:$0xff]
        %v4546 = vld [vmem:[%s4498 + $0x178] sm:$0xff]
        %v4547 = vld [vmem:[%s4498 + $0x180] sm:$0xff]
        %v4548 = vld [vmem:[%s4498 + $0x188] sm:$0xff]
        %v4549 = vmul.f32 %v2998, %v4499
        %v4550 = vmul.f32 %v2999, %v4500
        %v4551 = vmul.f32 %v3000, %v4501
        %v4552 = vmul.f32 %v3001, %v4502
        %v4553 = vmul.f32 %v3002, %v4503
        %v4554 = vmul.f32 %v3003, %v4504
        %v4555 = vmul.f32 %v3004, %v4505
        %v4556 = vmul.f32 %v3005, %v4506
        %v4557 = vmul.f32 %v3006, %v4507
        %v4558 = vmul.f32 %v3007, %v4508
        %v4559 = vmul.f32 %v3008, %v4509
        %v4560 = vmul.f32 %v3009, %v4510
        %v4561 = vmul.f32 %v3010, %v4511
        %v4562 = vmul.f32 %v3011, %v4512
        %v4563 = vmul.f32 %v3012, %v4513
        %v4564 = vmul.f32 %v3013, %v4514
        %v4565 = vmul.f32 %v3014, %v4515
        %v4566 = vmul.f32 %v3015, %v4516
        %v4567 = vmul.f32 %v3016, %v4517
        %v4568 = vmul.f32 %v3017, %v4518
        %v4569 = vmul.f32 %v3018, %v4519
        %v4570 = vmul.f32 %v3019, %v4520
        %v4571 = vmul.f32 %v3020, %v4521
        %v4572 = vmul.f32 %v3021, %v4522
        %v4573 = vmul.f32 %v3022, %v4523
        %v4574 = vmul.f32 %v3023, %v4524
        %v4575 = vmul.f32 %v3024, %v4525
        %v4576 = vmul.f32 %v3025, %v4526
        %v4577 = vmul.f32 %v3026, %v4527
        %v4578 = vmul.f32 %v3027, %v4528
        %v4579 = vmul.f32 %v3028, %v4529
        %v4580 = vmul.f32 %v3029, %v4530
        %v4581 = vmul.f32 %v3030, %v4531
        %v4582 = vmul.f32 %v3031, %v4532
        %v4583 = vmul.f32 %v3032, %v4533
        %v4584 = vmul.f32 %v3033, %v4534
        %v4585 = vmul.f32 %v3034, %v4535
        %v4586 = vmul.f32 %v3035, %v4536
        %v4587 = vmul.f32 %v3036, %v4537
        %v4588 = vmul.f32 %v3037, %v4538
        %v4589 = vmul.f32 %v3038, %v4539
        %v4590 = vmul.f32 %v3039, %v4540
        %v4591 = vmul.f32 %v3040, %v4541
        %v4592 = vmul.f32 %v3041, %v4542
        %v4593 = vmul.f32 %v3042, %v4543
        %v4594 = vmul.f32 %v3043, %v4544
        %v4595 = vmul.f32 %v3044, %v4545
        %v4596 = vmul.f32 %v3045, %v4546
        %v4597 = vmul.f32 %v3046, %v4547
        %v4598 = vmul.f32 %v3047, %v4548
        %v4599 = vadd.f32 %v4549, %v4550
        %v4600 = vadd.f32 %v4599, %v4551
        %v4601 = vadd.f32 %v4600, %v4552
        %v4602 = vadd.f32 %v4601, %v4553
        %v4603 = vadd.f32 %v4602, %v4554
        %v4604 = vadd.f32 %v4603, %v4555
        %v4605 = vadd.f32 %v4604, %v4556
        %v4606 = vadd.f32 %v4605, %v4557
        %v4607 = vadd.f32 %v4606, %v4558
        %v4608 = vadd.f32 %v4607, %v4559
        %v4609 = vadd.f32 %v4608, %v4560
        %v4610 = vadd.f32 %v4609, %v4561
        %v4611 = vadd.f32 %v4610, %v4562
        %v4612 = vadd.f32 %v4611, %v4563
        %v4613 = vadd.f32 %v4612, %v4564
        %v4614 = vadd.f32 %v4613, %v4565
        %v4615 = vadd.f32 %v4614, %v4566
        %v4616 = vadd.f32 %v4615, %v4567
        %v4617 = vadd.f32 %v4616, %v4568
        %v4618 = vadd.f32 %v4617, %v4569
        %v4619 = vadd.f32 %v4618, %v4570
        %v4620 = vadd.f32 %v4619, %v4571
        %v4621 = vadd.f32 %v4620, %v4572
        %v4622 = vadd.f32 %v4621, %v4573
        %v4623 = vadd.f32 %v4622, %v4574
        %v4624 = vadd.f32 %v4623, %v4575
        %v4625 = vadd.f32 %v4624, %v4576
        %v4626 = vadd.f32 %v4625, %v4577
        %v4627 = vadd.f32 %v4626, %v4578
        %v4628 = vadd.f32 %v4627, %v4579
        %v4629 = vadd.f32 %v4628, %v4580
        %v4630 = vadd.f32 %v4629, %v4581
        %v4631 = vadd.f32 %v4630, %v4582
        %v4632 = vadd.f32 %v4631, %v4583
        %v4633 = vadd.f32 %v4632, %v4584
        %v4634 = vadd.f32 %v4633, %v4585
        %v4635 = vadd.f32 %v4634, %v4586
        %v4636 = vadd.f32 %v4635, %v4587
        %v4637 = vadd.f32 %v4636, %v4588
        %v4638 = vadd.f32 %v4637, %v4589
        %v4639 = vadd.f32 %v4638, %v4590
        %v4640 = vadd.f32 %v4639, %v4591
        %v4641 = vadd.f32 %v4640, %v4592
        %v4642 = vadd.f32 %v4641, %v4593
        %v4643 = vadd.f32 %v4642, %v4594
        %v4644 = vadd.f32 %v4643, %v4595
        %v4645 = vadd.f32 %v4644, %v4596
        %v4646 = vadd.f32 %v4645, %v4597
        %v4647 = vadd.f32 %v4646, %v4598
        %v4648 = vrot.slane %v4647, 4
        %v4649 = vadd.f32 %v4647, %v4648
        %v4650 = vrot.slane %v4649, 2
        %v4651 = vadd.f32 %v4649, %v4650
        %v4652 = vrot.slane %v4651, 1
        %v4653 = vadd.f32 %v4651, %v4652
        %4654 = vadd.xlane.f32.xlu0 %v4653
        %v4655 = vpop.xlane.xlu0 %4654
        %vm4656 = vcmp.eq.s32.totalorder %v3049, 9
        %v4657 = vsel %vm4656, %v4655, 0.0
        %v4658 = vadd.f32 %v4497, %v4657
        %vm4659 = vcmask 80896
        %v4660 = vsel %vm4659, %v4658, -inf
        %4661 = vmax.xlane.f32.xlu0 %v4660
        %v4662 = vpop.xlane.xlu0 %4661
        %v4663 = vsub.f32 %v4658, %v4662
        %v4664 = vmul.f32 %v4663, 1.442695
        %v4665 = vpow.pop %v4664
        %v4666 = vsel %vm4659, %v4665, 0.0
        %4667 = vadd.xlane.f32.xlu0 %v4666
        %v4668 = vpop.xlane.xlu0 %4667
        %v4669 = vlog2.pop %v4668
        %v4670 = vmul.f32 %v4669, 0.6931472
        %v4671 = vsub.f32 %v4663, %v4670
        %vm4672 = vcmask 73728
        %4673 = vst.msk [vmem:[%s231] sm:$0x1] %vm4672, %v4671
        %s4674 = sand.u32 %s138, 1
        %s4675 = scalar_lea.sflag [#allocation4], %s4674
        %s4676 = sand.u32 %s138, 1
        %s4677 = scalar_lea.vmem [#allocation5], %s4676
        // Predicated region
        $region45: #{forward.1} parent=39 // pred_check
          %p4678 = pneg %p148
        $region46: #{forward.1} parent=39 // pred_check_branch
          %4680 = sbr.rel (%p4678) target = $region48
        $region47: #{forward.1} parent=39 // pred_region
          %s4682 = ssub.s32 16, 16
          %4683 = vsyncadd %s4675, %s4682
          %s4684 = smul.addr %s20, 16
          %s4685 = scalar_lea.hbm %s5, %s4684
          %s4687 = sshll.u32 %s4677, 4
          %s4688 = int_to_ptr.vmem [resolvable:$true] %s4687
          %4690 = dma.vmem_to_hbm [thread:$0]  %s4688, 16, %s4685, %s4675
        $region48: #{forward.1} parent=39 // pred_fallthru
          _
      $region40: #{forward.1} parent=5 // pred_fallthru
        _
      %p4691 = scmp.le.s32.totalorder 2, %s15
      // Predicated region
      $region49: #{forward.1} parent=5 // pred_check
        %p4692 = pneg %p4691
      $region50: #{forward.1} parent=5 // pred_check_branch
        %4694 = sbr.rel (%p4692) target = $region52
      $region51: #{forward.1} parent=5 // pred_region
        %s4695 = ssub.s32 %s15, 2
        // Predicated region
        $region53: #{forward.1} parent=51 // pred_check
          %p4696 = pneg %p154
        $region54: #{forward.1} parent=51 // pred_check_branch
          %4698 = sbr.rel (%p4696) target = $region56
        $region55: #{forward.1} parent=51 // pred_region
          %s4699 = sand.u32 %s139, 1
          %s4700 = scalar_lea.sflag [#allocation4], %s4699
          %s4701 = sand.u32 %s139, 1
          %s4702 = scalar_lea.vmem [#allocation5], %s4701
          %4703 = dma.done %s4700, 16
        $region56: #{forward.1} parent=51 // pred_fallthru
          _
      $region52: #{forward.1} parent=5 // pred_fallthru
        _
    $region6: #{forward.1} parent=1 // loop_footer
      %s19 = sadd.s32 1, %s15
    $region7: #{forward.1} parent=1 // loop_footer_branch
      %14 = sbr.rel target = $region3
    $region8: #{forward.1} parent=1 // loop_exit
      _
    %4704 = vsyncpa [#allocation3], 1
    %s4705 = scalar_lea.sflag [#allocation3], 1
    %4706 = vsyncpa %s4705, 1
    %4707 = vsyncpa [#allocation4], 1
    %s4708 = scalar_lea.sflag [#allocation4], 1
    %4709 = vsyncpa %s4708, 1

</llo_original>
